<compile_context>
chip_gen: v5e
topology: v5e:2x2
jax: 0.10.0
libtpu: 0.0.40
codegen_flags: <defaults>
</compile_context>

<pallas_src>
import math

import jax
import jax.numpy as jnp
from jax import lax
from jax.experimental import pallas as pl
from jax.experimental.pallas import tpu as pltpu

# ----------------------------- configuration -----------------------------
NUM_CLASSES = 16
IMG_SIZE = 16
TOKEN_DIM = 128                       # D
NUM_LAYERS = 2
NUM_HEADS = 8
HEAD_DIM = TOKEN_DIM // NUM_HEADS     # 16
FFN_DIM = 4 * TOKEN_DIM               # 512
BATCH = 2
BN_EPS = 1e-5
LN_EPS = 1e-5

CONV1_C_REAL = 64
CONV1_C = 128                          # conv1 out channels padded 64 -> 128 (lane dense)
FEAT_HW = IMG_SIZE // 8                # 2  (conv2 output spatial)
NUM_TOKENS = FEAT_HW * FEAT_HW + 1     # 5  (cls + 4 feature tokens)
SEQ_PAD = 8                            # token count padded to sublane multiple
CLS_PAD = 128                          # padded logits width (lane dense)

H1 = IMG_SIZE // 2                     # conv1 output spatial  (8)
MP = H1 // 2                           # maxpool output spatial (4)
K1_REAL = 7 * 7 * 3                    # conv1 im2col depth (147)
K1_PAD = 256                           # conv1 im2col depth padded to lane multiple
K2 = 3 * 3 * CONV1_C                   # conv2 im2col depth (1152)


# ------------------------------ fused kernel ------------------------------
def _fused_forward_kernel(
    p1_ref,       # (1, 64, 256)     bf16 conv1 im2col patches (this batch elem)
    w1_ref,       # (256, 128)       bf16 conv1 weight, row = (kh*7+kw)*3 + cin (zero pad)
    bn1_ref,      # (2, 128)         f32  rows: scale, shift (BN1 folded, conv bias incl.)
    w2_ref,       # (1152, 128)      bf16 conv2 weight, row = (kh*3+kw)*128 + cin
    bn2_ref,      # (2, 128)         f32
    pos_ref,      # (8, 128)         f32  pos embedding (cls token folded into row 0; rows 5..7 = 0)
    wqkv_ref,     # (L, 128, 384)    bf16 (1/sqrt(hd) pre-folded into Q columns)
    bqkv_ref,     # (L, 1, 384)      f32  (1/sqrt(hd) pre-folded into Q part)
    wo_ref,       # (L, 128, 128)    bf16 merged output projection
    bo_ref,       # (L, 1, 128)      f32
    w1f_ref,      # (L, 128, 512)    bf16
    b1f_ref,      # (L, 1, 512)      f32
    w2f_ref,      # (L, 512, 128)    bf16
    b2f_ref,      # (L, 1, 128)      f32
    ln_ref,       # (L, 4, 128)      f32  rows: g1, b1, g2, b2
    wc_ref,       # (128, 128)       bf16 classifier weight (classes zero-padded to 128)
    bc_ref,       # (1, 128)         f32
    o_ref,        # (1, 8, 128)      f32  row 0 = padded logits (other rows unused)
):
    f32 = jnp.float32
    bf16 = jnp.bfloat16

    # ---------------- conv1 (7x7, s2, p3) + BN + ReLU as ONE MXU matmul -------
    # (64, 256) bf16 patches @ (256, 128) bf16 weight, f32 accumulation.
    y1 = jnp.dot(p1_ref[0], w1_ref[...], preferred_element_type=f32)        # (64, 128)
    y1 = jnp.maximum(y1 * bn1_ref[0:1, :] + bn1_ref[1:2, :], 0.0)
    # y1 row layout: row = i*8 + j over the 8x8 conv1 output grid (lane dense).

    # ---------------- maxpool 3x3, s2, p1 on the (8,8) grid --------------------
    # Pass 1: column pooling with contiguous-sublane slices of the (64,128) value.
    colmax = {}
    for i in range(H1):
        for c in range(MP):
            j0, j1 = max(2 * c - 1, 0), min(2 * c + 2, H1)
            colmax[(i, c)] = jnp.max(y1[i * H1 + j0:i * H1 + j1, :],
                                     axis=0, keepdims=True)                 # (1, 128)
    # Pass 2: row pooling as pairwise full-lane VPU maximums.
    mp = {}
    for r in range(MP):
        i0, i1 = max(2 * r - 1, 0), min(2 * r + 2, H1)
        for c in range(MP):
            m = colmax[(i0, c)]
            for i in range(i0 + 1, i1):
                m = jnp.maximum(m, colmax[(i, c)])
            mp[(r, c)] = m                                                   # (1, 128)

    # ---------------- conv2 (3x3, s2, p1) + BN + ReLU as ONE matmul ------------
    # Build the (8, 1152) im2col LHS in vregs: row 0 = cls slot (zeros),
    # rows 1..4 = the 4 output positions, rows 5..7 = zero padding.
    zero_row = jnp.zeros((1, CONV1_C), f32)
    lhs_rows = [jnp.zeros((1, K2), f32)]                                     # cls slot
    for (oi, oj) in ((0, 0), (0, 1), (1, 0), (1, 1)):
        segs = []
        for kh in range(3):
            for kw in range(3):
                r, c = 2 * oi + kh - 1, 2 * oj + kw - 1
                segs.append(mp[(r, c)] if (0 <= r < MP and 0 <= c < MP) else zero_row)
        lhs_rows.append(jnp.concatenate(segs, axis=1))                       # (1, 1152)
    lhs = jnp.concatenate(
        lhs_rows + [jnp.zeros((SEQ_PAD - NUM_TOKENS, K2), f32)], axis=0)     # (8, 1152)
    feat8 = jnp.dot(lhs.astype(bf16), w2_ref[...], preferred_element_type=f32)  # (8, 128)
    feat8 = jnp.maximum(feat8 * bn2_ref[0:1, :] + bn2_ref[1:2, :], 0.0)

    # ---------------- token assembly (+cls, +pos), kept in vregs ---------------
    row_ids = lax.broadcasted_iota(jnp.int32, (SEQ_PAD, TOKEN_DIM), 0)
    tok_mask = (row_ids >= 1) & (row_ids < NUM_TOKENS)
    x = pos_ref[...] + jnp.where(tok_mask, feat8, 0.0)                       # (8, 128) f32

    # ---------------- transformer encoder (both layers, post-norm, ReLU) -------
    # TODO(synk): dropout inside the encoder layers is a no-op (eval semantics).
    col = lax.broadcasted_iota(jnp.int32, (1, 1, SEQ_PAD), 2)
    kmask = jnp.where(col >= NUM_TOKENS, -1e9, 0.0).astype(f32)              # (1, 1, 8)

    def layer_norm(v, g, b):
        mu = jnp.mean(v, axis=-1, keepdims=True)
        d = v - mu
        var = jnp.mean(d * d, axis=-1, keepdims=True)
        return d * lax.rsqrt(var + LN_EPS) * g + b

    for l in range(NUM_LAYERS):
        xb = x.astype(bf16)
        qkv = jnp.dot(xb, wqkv_ref[l], preferred_element_type=f32) + bqkv_ref[l]  # (8, 384)
        q = qkv[:, 0:TOKEN_DIM]                       # 1/sqrt(hd) already folded in
        k = qkv[:, TOKEN_DIM:2 * TOKEN_DIM]
        v = qkv[:, 2 * TOKEN_DIM:3 * TOKEN_DIM]

        # TODO(synk): head split kept as lane-slices + stack for lowering
        # robustness; tensors are tiny (8x128) so the relayout cost is small.
        q3 = jnp.stack([q[:, h * HEAD_DIM:(h + 1) * HEAD_DIM]
                        for h in range(NUM_HEADS)], axis=0).astype(bf16)     # (H, S, hd)
        k3 = jnp.stack([k[:, h * HEAD_DIM:(h + 1) * HEAD_DIM]
                        for h in range(NUM_HEADS)], axis=0).astype(bf16)
        v3 = jnp.stack([v[:, h * HEAD_DIM:(h + 1) * HEAD_DIM]
                        for h in range(NUM_HEADS)], axis=0).astype(bf16)

        scores = lax.dot_general(q3, k3, (((2,), (2,)), ((0,), (0,))),
                                 preferred_element_type=f32)                 # (H, S, S)
        scores = scores + kmask                                              # mask padded keys
        scores = scores - jnp.max(scores, axis=-1, keepdims=True)
        p = jnp.exp(scores)
        p = p * pl.reciprocal(jnp.sum(p, axis=-1, keepdims=True), approx=True)

        out3 = lax.dot_general(p.astype(bf16), v3, (((2,), (1,)), ((0,), (0,))),
                               preferred_element_type=f32)                   # (H, S, hd)
        # Fold heads back to (S, 128) and do ONE full-lane output projection.
        out_sd = jnp.concatenate([out3[h] for h in range(NUM_HEADS)], axis=1)  # (S, 128)
        attn = jnp.dot(out_sd.astype(bf16), wo_ref[l],
                       preferred_element_type=f32) + bo_ref[l]               # (S, 128)

        x = layer_norm(x + attn, ln_ref[l, 0:1, :], ln_ref[l, 1:2, :])

        h1 = jnp.maximum(
            jnp.dot(x.astype(bf16), w1f_ref[l], preferred_element_type=f32)
            + b1f_ref[l], 0.0)                                               # (S, 512)
        ff = jnp.dot(h1.astype(bf16), w2f_ref[l], preferred_element_type=f32) + b2f_ref[l]

        x = layer_norm(x + ff, ln_ref[l, 2:3, :], ln_ref[l, 3:4, :])

    # ---------------- classifier (all rows, single full-block store) ----------
    # Only row 0 (cls token) is meaningful; wrapper slices it out.
    logits = jnp.dot(x.astype(bf16), wc_ref[...], preferred_element_type=f32) + bc_ref[...]
    o_ref[0, :, :] = logits


# ------------------------------ wrapper ------------------------------------
def _wspec(shape):
    zeros = (0,) * len(shape)
    # NOTE: weights have constant index maps; single-buffering them is possible
    # hygiene (pipeline_mode=pl.Buffered(1)) but unnecessary at ~1.3 MiB total.
    return pl.BlockSpec(shape, lambda b: zeros)


@jax.jit
def forward(x_nchw, prep):
    B = x_nchw.shape[0]
    # NCHW -> NHWC, pad by 3, conv1 im2col: (B, 64, 147) -> zero-pad K to 256, bf16.
    x = jnp.transpose(x_nchw, (0, 2, 3, 1)).astype(jnp.float32)
    xp = jnp.pad(x, ((0, 0), (3, 3), (3, 3), (0, 0)))                        # (B, 22, 22, 3)
    taps = []
    for kh in range(7):
        for kw in range(7):
            taps.append(xp[:, kh:kh + 2 * H1:2, kw:kw + 2 * H1:2, :])        # (B, 8, 8, 3)
    patches = jnp.stack(taps, axis=3).reshape(B, H1 * H1, K1_REAL)           # (B, 64, 147)
    patches = jnp.pad(patches, ((0, 0), (0, 0), (0, K1_PAD - K1_REAL)))
    patches = patches.astype(jnp.bfloat16)                                   # (B, 64, 256)

    weights = [
        prep["w1"], prep["bn1"], prep["w2"], prep["bn2"], prep["pos"],
        prep["wqkv"], prep["bqkv"], prep["wo"], prep["bo"],
        prep["w1f"], prep["b1f"], prep["w2f"], prep["b2f"], prep["ln"],
        prep["wc"], prep["bc"],
    ]
    in_specs = [pl.BlockSpec((1, H1 * H1, K1_PAD), lambda b: (b, 0, 0))]
    in_specs += [_wspec(w.shape) for w in weights]

    out = pl.pallas_call(
        _fused_forward_kernel,
        out_shape=jax.ShapeDtypeStruct((B, SEQ_PAD, CLS_PAD), jnp.float32),
        grid=(B,),
        in_specs=in_specs,
        out_specs=pl.BlockSpec((1, SEQ_PAD, CLS_PAD), lambda b: (b, 0, 0)),
        compiler_params=pltpu.CompilerParams(
            dimension_semantics=("parallel",)),
    )(patches, *weights)

    return out[:, 0, :NUM_CLASSES]


# ------------------------------ parameters ---------------------------------
def init_params(key):
    D = TOKEN_DIM
    keys = iter(jax.random.split(key, 64))

    def nrm(shape, std=0.02):
        return (std * jax.random.normal(next(keys), shape)).astype(jnp.float32)

    def conv_block(k, cin, cout):
        return dict(
            w=nrm((k, k, cin, cout)),
            b=nrm((cout,)),
            gamma=jnp.ones((cout,), jnp.float32) + nrm((cout,), 0.01),
            beta=nrm((cout,), 0.01),
            mean=nrm((cout,), 0.01),
            var=jnp.ones((cout,), jnp.float32) + jnp.abs(nrm((cout,), 0.01)),
        )

    params = dict(
        conv1=conv_block(7, 3, CONV1_C_REAL),
        conv2=conv_block(3, CONV1_C_REAL, D),
        cls_token=nrm((1, 1, D)),
        pos_embedding=nrm((1, NUM_TOKENS, D)),
        layers=[],
        cls_w=nrm((D, NUM_CLASSES)),
        cls_b=nrm((NUM_CLASSES,)),
    )
    for _ in range(NUM_LAYERS):
        params["layers"].append(dict(
            wqkv=nrm((D, 3 * D)), bqkv=nrm((3 * D,)),
            wo=nrm((D, D)), bo=nrm((D,)),
            ln1_g=jnp.ones((D,), jnp.float32), ln1_b=jnp.zeros((D,), jnp.float32),
            w1=nrm((D, FFN_DIM)), b1=nrm((FFN_DIM,)),
            w2=nrm((FFN_DIM, D)), b2=nrm((D,)),
            ln2_g=jnp.ones((D,), jnp.float32), ln2_b=jnp.zeros((D,), jnp.float32),
        ))
    return params


def prepare_params(p):
    """One-time weight prep: BN folding, im2col reshapes, lane-dense padding,
    bf16 casts, attention-scale folding, per-layer stacking.

    NOTE: all weights here use the x @ W (in, out) convention; loading a real
    PyTorch checkpoint would require transposing the nn.Linear weights.
    """
    D = TOKEN_DIM
    f32, bf16 = jnp.float32, jnp.bfloat16
    pad_c = CONV1_C - CONV1_C_REAL

    # conv1: pad Cout 64 -> 128 (zero cols; scale=1 / shift=0 keep pads at 0),
    # im2col rows padded 147 -> 256 with zeros, bf16.
    c1 = p["conv1"]
    w1 = jnp.pad(c1["w"], ((0, 0), (0, 0), (0, 0), (0, pad_c))).reshape(K1_REAL, CONV1_C)
    w1 = jnp.pad(w1, ((0, K1_PAD - K1_REAL), (0, 0))).astype(bf16)
    s1 = c1["gamma"] / jnp.sqrt(c1["var"] + BN_EPS)
    t1 = (c1["b"] - c1["mean"]) * s1 + c1["beta"]
    s1 = jnp.pad(s1, (0, pad_c), constant_values=1.0)
    t1 = jnp.pad(t1, (0, pad_c))
    bn1 = jnp.stack([s1, t1], axis=0)

    # conv2: pad Cin 64 -> 128 with zero rows, im2col reshape, bf16.
    c2 = p["conv2"]
    w2 = jnp.pad(c2["w"], ((0, 0), (0, 0), (0, pad_c), (0, 0)))
    w2 = w2.reshape(K2, D).astype(bf16)
    s2 = c2["gamma"] / jnp.sqrt(c2["var"] + BN_EPS)
    t2 = (c2["b"] - c2["mean"]) * s2 + c2["beta"]
    bn2 = jnp.stack([s2, t2], axis=0)

    # positional embedding padded to SEQ_PAD rows; cls token folded into row 0.
    pos = jnp.zeros((SEQ_PAD, D), f32)
    pos = pos.at[:NUM_TOKENS].set(p["pos_embedding"][0])
    pos = pos.at[0].add(p["cls_token"][0, 0])

    def stack(name):
        return jnp.stack([lp[name] for lp in p["layers"]], axis=0)

    # Fold 1/sqrt(head_dim) into the Q columns of the QKV projection.
    scale = 1.0 / math.sqrt(HEAD_DIM)
    wqkv = stack("wqkv").at[:, :, :D].multiply(scale).astype(bf16)           # (L,128,384)
    bqkv = stack("bqkv").at[:, :D].multiply(scale)[:, None, :]               # (L,1,384)
    wo = stack("wo").astype(bf16)                                            # (L,128,128)
    bo = stack("bo")[:, None, :]
    w1f = stack("w1").astype(bf16)
    b1f = stack("b1")[:, None, :]
    w2f = stack("w2").astype(bf16)
    b2f = stack("b2")[:, None, :]
    ln = jnp.stack(
        [jnp.stack([lp["ln1_g"], lp["ln1_b"], lp["ln2_g"], lp["ln2_b"]], axis=0)
         for lp in p["layers"]], axis=0)                                     # (L,4,128)

    wc = jnp.zeros((D, CLS_PAD), f32).at[:, :NUM_CLASSES].set(p["cls_w"]).astype(bf16)
    bc = jnp.zeros((1, CLS_PAD), f32).at[0, :NUM_CLASSES].set(p["cls_b"])

    return dict(w1=w1, bn1=bn1, w2=w2, bn2=bn2, pos=pos,
                wqkv=wqkv, bqkv=bqkv, wo=wo, bo=bo,
                w1f=w1f, b1f=b1f, w2f=w2f, b2f=b2f, ln=ln,
                wc=wc, bc=bc)


# ------------------------------ main ----------------------------------------
if __name__ == "__main__":
    key = jax.random.PRNGKey(0)
    x_key, p_key = jax.random.split(key)
    x = jax.random.normal(x_key, (BATCH, 3, IMG_SIZE, IMG_SIZE), dtype=jnp.float32)
    params = init_params(p_key)
    prep = prepare_params(params)

    logits = forward(x, prep)
    jax.block_until_ready(logits)
    assert logits.shape == (BATCH, NUM_CLASSES), logits.shape
    assert bool(jnp.all(jnp.isfinite(logits)))
    print("KERNEL_OK")
</pallas_src>

<mosaic_0001>
module attributes {stable_mosaic.version = 11 : i64} {
  func.func @_fused_forward_kernel(%arg0: i32, %arg1: memref<1x64x256xbf16, #tpu.memory_space<vmem>>, %arg2: memref<256x128xbf16, #tpu.memory_space<vmem>>, %arg3: memref<2x128xf32, #tpu.memory_space<vmem>>, %arg4: memref<1152x128xbf16, #tpu.memory_space<vmem>>, %arg5: memref<2x128xf32, #tpu.memory_space<vmem>>, %arg6: memref<8x128xf32, #tpu.memory_space<vmem>>, %arg7: memref<2x128x384xbf16, #tpu.memory_space<vmem>>, %arg8: memref<2x1x384xf32, #tpu.memory_space<vmem>>, %arg9: memref<2x128x128xbf16, #tpu.memory_space<vmem>>, %arg10: memref<2x1x128xf32, #tpu.memory_space<vmem>>, %arg11: memref<2x128x512xbf16, #tpu.memory_space<vmem>>, %arg12: memref<2x1x512xf32, #tpu.memory_space<vmem>>, %arg13: memref<2x512x128xbf16, #tpu.memory_space<vmem>>, %arg14: memref<2x1x128xf32, #tpu.memory_space<vmem>>, %arg15: memref<2x4x128xf32, #tpu.memory_space<vmem>>, %arg16: memref<128x128xbf16, #tpu.memory_space<vmem>>, %arg17: memref<1x128xf32, #tpu.memory_space<vmem>>, %arg18: memref<1x8x128xf32, #tpu.memory_space<vmem>>) attributes {dimension_semantics = [#tpu.dimension_semantics<parallel>], iteration_bounds = array<i64: 2>, scalar_prefetch = 0 : i64, scratch_operands = 0 : i64, tpu.core_type = #tpu.core_type<tc>, window_params = [{transform_indices = @transform_0, window_bounds = array<i64: 1, 64, 256>}, {pipeline_mode = #tpu.pipeline_mode<synchronous>, transform_indices = @transform_1, window_bounds = array<i64: 256, 128>}, {pipeline_mode = #tpu.pipeline_mode<synchronous>, transform_indices = @transform_2, window_bounds = array<i64: 2, 128>}, {pipeline_mode = #tpu.pipeline_mode<synchronous>, transform_indices = @transform_3, window_bounds = array<i64: 1152, 128>}, {pipeline_mode = #tpu.pipeline_mode<synchronous>, transform_indices = @transform_4, window_bounds = array<i64: 2, 128>}, {pipeline_mode = #tpu.pipeline_mode<synchronous>, transform_indices = @transform_5, window_bounds = array<i64: 8, 128>}, {pipeline_mode = #tpu.pipeline_mode<synchronous>, transform_indices = @transform_6, window_bounds = array<i64: 2, 128, 384>}, {pipeline_mode = #tpu.pipeline_mode<synchronous>, transform_indices = @transform_7, window_bounds = array<i64: 2, 1, 384>}, {pipeline_mode = #tpu.pipeline_mode<synchronous>, transform_indices = @transform_8, window_bounds = array<i64: 2, 128, 128>}, {pipeline_mode = #tpu.pipeline_mode<synchronous>, transform_indices = @transform_9, window_bounds = array<i64: 2, 1, 128>}, {pipeline_mode = #tpu.pipeline_mode<synchronous>, transform_indices = @transform_10, window_bounds = array<i64: 2, 128, 512>}, {pipeline_mode = #tpu.pipeline_mode<synchronous>, transform_indices = @transform_11, window_bounds = array<i64: 2, 1, 512>}, {pipeline_mode = #tpu.pipeline_mode<synchronous>, transform_indices = @transform_12, window_bounds = array<i64: 2, 512, 128>}, {pipeline_mode = #tpu.pipeline_mode<synchronous>, transform_indices = @transform_13, window_bounds = array<i64: 2, 1, 128>}, {pipeline_mode = #tpu.pipeline_mode<synchronous>, transform_indices = @transform_14, window_bounds = array<i64: 2, 4, 128>}, {pipeline_mode = #tpu.pipeline_mode<synchronous>, transform_indices = @transform_15, window_bounds = array<i64: 128, 128>}, {pipeline_mode = #tpu.pipeline_mode<synchronous>, transform_indices = @transform_16, window_bounds = array<i64: 1, 128>}, {transform_indices = @transform_17, window_bounds = array<i64: 1, 8, 128>}]} {
    %c0 = arith.constant 0 : index
    %c0_0 = arith.constant 0 : index
    %c0_1 = arith.constant 0 : index
    %0 = vector.load %arg1[%c0, %c0_0, %c0_1] : memref<1x64x256xbf16, #tpu.memory_space<vmem>>, vector<1x64x256xbf16>
    %1 = vector.shape_cast %0 : vector<1x64x256xbf16> to vector<64x256xbf16>
    %c0_2 = arith.constant 0 : index
    %c0_3 = arith.constant 0 : index
    %2 = vector.load %arg2[%c0_2, %c0_3] : memref<256x128xbf16, #tpu.memory_space<vmem>>, vector<256x128xbf16>
    %cst = arith.constant dense<0.000000e+00> : vector<64x128xf32>
    %3 = tpu.matmul %1, %2, %cst {dimension_numbers = #tpu.dot_dimension_numbers<[1], [0], [0], [1], [0, 0, 1, 1], [], []>} : vector<64x256xbf16>, vector<256x128xbf16>, vector<64x128xf32> -> vector<64x128xf32>
    %c0_4 = arith.constant 0 : index
    %c0_5 = arith.constant 0 : index
    %4 = vector.load %arg3[%c0_4, %c0_5] : memref<2x128xf32, #tpu.memory_space<vmem>>, vector<1x128xf32>
    %5 = vector.broadcast %4 : vector<1x128xf32> to vector<64x128xf32>
    %6 = arith.mulf %3, %5 : vector<64x128xf32>
    %c1 = arith.constant 1 : index
    %c0_6 = arith.constant 0 : index
    %7 = vector.load %arg3[%c1, %c0_6] : memref<2x128xf32, #tpu.memory_space<vmem>>, vector<1x128xf32>
    %8 = vector.broadcast %7 : vector<1x128xf32> to vector<64x128xf32>
    %9 = arith.addf %6, %8 : vector<64x128xf32>
    %cst_7 = arith.constant 0.000000e+00 : f32
    %10 = vector.broadcast %cst_7 : f32 to vector<64x128xf32>
    %11 = arith.maximumf %9, %10 : vector<64x128xf32>
    %12 = vector.extract_strided_slice %11 {offsets = [0, 0], sizes = [2, 128], strides = [1, 1]} : vector<64x128xf32> to vector<2x128xf32>
    %cst_8 = arith.constant dense<0xFF800000> : vector<128xf32>
    %13 = vector.multi_reduction <maximumf>, %12, %cst_8 [0] : vector<2x128xf32> to vector<128xf32>
    %14 = vector.shape_cast %13 : vector<128xf32> to vector<1x128xf32>
    %15 = vector.extract_strided_slice %11 {offsets = [1, 0], sizes = [3, 128], strides = [1, 1]} : vector<64x128xf32> to vector<3x128xf32>
    %cst_9 = arith.constant dense<0xFF800000> : vector<128xf32>
    %16 = vector.multi_reduction <maximumf>, %15, %cst_9 [0] : vector<3x128xf32> to vector<128xf32>
    %17 = vector.shape_cast %16 : vector<128xf32> to vector<1x128xf32>
    %18 = vector.extract_strided_slice %11 {offsets = [3, 0], sizes = [3, 128], strides = [1, 1]} : vector<64x128xf32> to vector<3x128xf32>
    %cst_10 = arith.constant dense<0xFF800000> : vector<128xf32>
    %19 = vector.multi_reduction <maximumf>, %18, %cst_10 [0] : vector<3x128xf32> to vector<128xf32>
    %20 = vector.shape_cast %19 : vector<128xf32> to vector<1x128xf32>
    %21 = vector.extract_strided_slice %11 {offsets = [5, 0], sizes = [3, 128], strides = [1, 1]} : vector<64x128xf32> to vector<3x128xf32>
    %cst_11 = arith.constant dense<0xFF800000> : vector<128xf32>
    %22 = vector.multi_reduction <maximumf>, %21, %cst_11 [0] : vector<3x128xf32> to vector<128xf32>
    %23 = vector.shape_cast %22 : vector<128xf32> to vector<1x128xf32>
    %24 = vector.extract_strided_slice %11 {offsets = [8, 0], sizes = [2, 128], strides = [1, 1]} : vector<64x128xf32> to vector<2x128xf32>
    %cst_12 = arith.constant dense<0xFF800000> : vector<128xf32>
    %25 = vector.multi_reduction <maximumf>, %24, %cst_12 [0] : vector<2x128xf32> to vector<128xf32>
    %26 = vector.shape_cast %25 : vector<128xf32> to vector<1x128xf32>
    %27 = vector.extract_strided_slice %11 {offsets = [9, 0], sizes = [3, 128], strides = [1, 1]} : vector<64x128xf32> to vector<3x128xf32>
    %cst_13 = arith.constant dense<0xFF800000> : vector<128xf32>
    %28 = vector.multi_reduction <maximumf>, %27, %cst_13 [0] : vector<3x128xf32> to vector<128xf32>
    %29 = vector.shape_cast %28 : vector<128xf32> to vector<1x128xf32>
    %30 = vector.extract_strided_slice %11 {offsets = [11, 0], sizes = [3, 128], strides = [1, 1]} : vector<64x128xf32> to vector<3x128xf32>
    %cst_14 = arith.constant dense<0xFF800000> : vector<128xf32>
    %31 = vector.multi_reduction <maximumf>, %30, %cst_14 [0] : vector<3x128xf32> to vector<128xf32>
    %32 = vector.shape_cast %31 : vector<128xf32> to vector<1x128xf32>
    %33 = vector.extract_strided_slice %11 {offsets = [13, 0], sizes = [3, 128], strides = [1, 1]} : vector<64x128xf32> to vector<3x128xf32>
    %cst_15 = arith.constant dense<0xFF800000> : vector<128xf32>
    %34 = vector.multi_reduction <maximumf>, %33, %cst_15 [0] : vector<3x128xf32> to vector<128xf32>
    %35 = vector.shape_cast %34 : vector<128xf32> to vector<1x128xf32>
    %36 = vector.extract_strided_slice %11 {offsets = [16, 0], sizes = [2, 128], strides = [1, 1]} : vector<64x128xf32> to vector<2x128xf32>
    %cst_16 = arith.constant dense<0xFF800000> : vector<128xf32>
    %37 = vector.multi_reduction <maximumf>, %36, %cst_16 [0] : vector<2x128xf32> to vector<128xf32>
    %38 = vector.shape_cast %37 : vector<128xf32> to vector<1x128xf32>
    %39 = vector.extract_strided_slice %11 {offsets = [17, 0], sizes = [3, 128], strides = [1, 1]} : vector<64x128xf32> to vector<3x128xf32>
    %cst_17 = arith.constant dense<0xFF800000> : vector<128xf32>
    %40 = vector.multi_reduction <maximumf>, %39, %cst_17 [0] : vector<3x128xf32> to vector<128xf32>
    %41 = vector.shape_cast %40 : vector<128xf32> to vector<1x128xf32>
    %42 = vector.extract_strided_slice %11 {offsets = [19, 0], sizes = [3, 128], strides = [1, 1]} : vector<64x128xf32> to vector<3x128xf32>
    %cst_18 = arith.constant dense<0xFF800000> : vector<128xf32>
    %43 = vector.multi_reduction <maximumf>, %42, %cst_18 [0] : vector<3x128xf32> to vector<128xf32>
    %44 = vector.shape_cast %43 : vector<128xf32> to vector<1x128xf32>
    %45 = vector.extract_strided_slice %11 {offsets = [21, 0], sizes = [3, 128], strides = [1, 1]} : vector<64x128xf32> to vector<3x128xf32>
    %cst_19 = arith.constant dense<0xFF800000> : vector<128xf32>
    %46 = vector.multi_reduction <maximumf>, %45, %cst_19 [0] : vector<3x128xf32> to vector<128xf32>
    %47 = vector.shape_cast %46 : vector<128xf32> to vector<1x128xf32>
    %48 = vector.extract_strided_slice %11 {offsets = [24, 0], sizes = [2, 128], strides = [1, 1]} : vector<64x128xf32> to vector<2x128xf32>
    %cst_20 = arith.constant dense<0xFF800000> : vector<128xf32>
    %49 = vector.multi_reduction <maximumf>, %48, %cst_20 [0] : vector<2x128xf32> to vector<128xf32>
    %50 = vector.shape_cast %49 : vector<128xf32> to vector<1x128xf32>
    %51 = vector.extract_strided_slice %11 {offsets = [25, 0], sizes = [3, 128], strides = [1, 1]} : vector<64x128xf32> to vector<3x128xf32>
    %cst_21 = arith.constant dense<0xFF800000> : vector<128xf32>
    %52 = vector.multi_reduction <maximumf>, %51, %cst_21 [0] : vector<3x128xf32> to vector<128xf32>
    %53 = vector.shape_cast %52 : vector<128xf32> to vector<1x128xf32>
    %54 = vector.extract_strided_slice %11 {offsets = [27, 0], sizes = [3, 128], strides = [1, 1]} : vector<64x128xf32> to vector<3x128xf32>
    %cst_22 = arith.constant dense<0xFF800000> : vector<128xf32>
    %55 = vector.multi_reduction <maximumf>, %54, %cst_22 [0] : vector<3x128xf32> to vector<128xf32>
    %56 = vector.shape_cast %55 : vector<128xf32> to vector<1x128xf32>
    %57 = vector.extract_strided_slice %11 {offsets = [29, 0], sizes = [3, 128], strides = [1, 1]} : vector<64x128xf32> to vector<3x128xf32>
    %cst_23 = arith.constant dense<0xFF800000> : vector<128xf32>
    %58 = vector.multi_reduction <maximumf>, %57, %cst_23 [0] : vector<3x128xf32> to vector<128xf32>
    %59 = vector.shape_cast %58 : vector<128xf32> to vector<1x128xf32>
    %60 = vector.extract_strided_slice %11 {offsets = [32, 0], sizes = [2, 128], strides = [1, 1]} : vector<64x128xf32> to vector<2x128xf32>
    %cst_24 = arith.constant dense<0xFF800000> : vector<128xf32>
    %61 = vector.multi_reduction <maximumf>, %60, %cst_24 [0] : vector<2x128xf32> to vector<128xf32>
    %62 = vector.shape_cast %61 : vector<128xf32> to vector<1x128xf32>
    %63 = vector.extract_strided_slice %11 {offsets = [33, 0], sizes = [3, 128], strides = [1, 1]} : vector<64x128xf32> to vector<3x128xf32>
    %cst_25 = arith.constant dense<0xFF800000> : vector<128xf32>
    %64 = vector.multi_reduction <maximumf>, %63, %cst_25 [0] : vector<3x128xf32> to vector<128xf32>
    %65 = vector.shape_cast %64 : vector<128xf32> to vector<1x128xf32>
    %66 = vector.extract_strided_slice %11 {offsets = [35, 0], sizes = [3, 128], strides = [1, 1]} : vector<64x128xf32> to vector<3x128xf32>
    %cst_26 = arith.constant dense<0xFF800000> : vector<128xf32>
    %67 = vector.multi_reduction <maximumf>, %66, %cst_26 [0] : vector<3x128xf32> to vector<128xf32>
    %68 = vector.shape_cast %67 : vector<128xf32> to vector<1x128xf32>
    %69 = vector.extract_strided_slice %11 {offsets = [37, 0], sizes = [3, 128], strides = [1, 1]} : vector<64x128xf32> to vector<3x128xf32>
    %cst_27 = arith.constant dense<0xFF800000> : vector<128xf32>
    %70 = vector.multi_reduction <maximumf>, %69, %cst_27 [0] : vector<3x128xf32> to vector<128xf32>
    %71 = vector.shape_cast %70 : vector<128xf32> to vector<1x128xf32>
    %72 = vector.extract_strided_slice %11 {offsets = [40, 0], sizes = [2, 128], strides = [1, 1]} : vector<64x128xf32> to vector<2x128xf32>
    %cst_28 = arith.constant dense<0xFF800000> : vector<128xf32>
    %73 = vector.multi_reduction <maximumf>, %72, %cst_28 [0] : vector<2x128xf32> to vector<128xf32>
    %74 = vector.shape_cast %73 : vector<128xf32> to vector<1x128xf32>
    %75 = vector.extract_strided_slice %11 {offsets = [41, 0], sizes = [3, 128], strides = [1, 1]} : vector<64x128xf32> to vector<3x128xf32>
    %cst_29 = arith.constant dense<0xFF800000> : vector<128xf32>
    %76 = vector.multi_reduction <maximumf>, %75, %cst_29 [0] : vector<3x128xf32> to vector<128xf32>
    %77 = vector.shape_cast %76 : vector<128xf32> to vector<1x128xf32>
    %78 = vector.extract_strided_slice %11 {offsets = [43, 0], sizes = [3, 128], strides = [1, 1]} : vector<64x128xf32> to vector<3x128xf32>
    %cst_30 = arith.constant dense<0xFF800000> : vector<128xf32>
    %79 = vector.multi_reduction <maximumf>, %78, %cst_30 [0] : vector<3x128xf32> to vector<128xf32>
    %80 = vector.shape_cast %79 : vector<128xf32> to vector<1x128xf32>
    %81 = vector.extract_strided_slice %11 {offsets = [45, 0], sizes = [3, 128], strides = [1, 1]} : vector<64x128xf32> to vector<3x128xf32>
    %cst_31 = arith.constant dense<0xFF800000> : vector<128xf32>
    %82 = vector.multi_reduction <maximumf>, %81, %cst_31 [0] : vector<3x128xf32> to vector<128xf32>
    %83 = vector.shape_cast %82 : vector<128xf32> to vector<1x128xf32>
    %84 = vector.extract_strided_slice %11 {offsets = [48, 0], sizes = [2, 128], strides = [1, 1]} : vector<64x128xf32> to vector<2x128xf32>
    %cst_32 = arith.constant dense<0xFF800000> : vector<128xf32>
    %85 = vector.multi_reduction <maximumf>, %84, %cst_32 [0] : vector<2x128xf32> to vector<128xf32>
    %86 = vector.shape_cast %85 : vector<128xf32> to vector<1x128xf32>
    %87 = vector.extract_strided_slice %11 {offsets = [49, 0], sizes = [3, 128], strides = [1, 1]} : vector<64x128xf32> to vector<3x128xf32>
    %cst_33 = arith.constant dense<0xFF800000> : vector<128xf32>
    %88 = vector.multi_reduction <maximumf>, %87, %cst_33 [0] : vector<3x128xf32> to vector<128xf32>
    %89 = vector.shape_cast %88 : vector<128xf32> to vector<1x128xf32>
    %90 = vector.extract_strided_slice %11 {offsets = [51, 0], sizes = [3, 128], strides = [1, 1]} : vector<64x128xf32> to vector<3x128xf32>
    %cst_34 = arith.constant dense<0xFF800000> : vector<128xf32>
    %91 = vector.multi_reduction <maximumf>, %90, %cst_34 [0] : vector<3x128xf32> to vector<128xf32>
    %92 = vector.shape_cast %91 : vector<128xf32> to vector<1x128xf32>
    %93 = vector.extract_strided_slice %11 {offsets = [53, 0], sizes = [3, 128], strides = [1, 1]} : vector<64x128xf32> to vector<3x128xf32>
    %cst_35 = arith.constant dense<0xFF800000> : vector<128xf32>
    %94 = vector.multi_reduction <maximumf>, %93, %cst_35 [0] : vector<3x128xf32> to vector<128xf32>
    %95 = vector.shape_cast %94 : vector<128xf32> to vector<1x128xf32>
    %96 = vector.extract_strided_slice %11 {offsets = [56, 0], sizes = [2, 128], strides = [1, 1]} : vector<64x128xf32> to vector<2x128xf32>
    %cst_36 = arith.constant dense<0xFF800000> : vector<128xf32>
    %97 = vector.multi_reduction <maximumf>, %96, %cst_36 [0] : vector<2x128xf32> to vector<128xf32>
    %98 = vector.shape_cast %97 : vector<128xf32> to vector<1x128xf32>
    %99 = vector.extract_strided_slice %11 {offsets = [57, 0], sizes = [3, 128], strides = [1, 1]} : vector<64x128xf32> to vector<3x128xf32>
    %cst_37 = arith.constant dense<0xFF800000> : vector<128xf32>
    %100 = vector.multi_reduction <maximumf>, %99, %cst_37 [0] : vector<3x128xf32> to vector<128xf32>
    %101 = vector.shape_cast %100 : vector<128xf32> to vector<1x128xf32>
    %102 = vector.extract_strided_slice %11 {offsets = [59, 0], sizes = [3, 128], strides = [1, 1]} : vector<64x128xf32> to vector<3x128xf32>
    %cst_38 = arith.constant dense<0xFF800000> : vector<128xf32>
    %103 = vector.multi_reduction <maximumf>, %102, %cst_38 [0] : vector<3x128xf32> to vector<128xf32>
    %104 = vector.shape_cast %103 : vector<128xf32> to vector<1x128xf32>
    %105 = vector.extract_strided_slice %11 {offsets = [61, 0], sizes = [3, 128], strides = [1, 1]} : vector<64x128xf32> to vector<3x128xf32>
    %cst_39 = arith.constant dense<0xFF800000> : vector<128xf32>
    %106 = vector.multi_reduction <maximumf>, %105, %cst_39 [0] : vector<3x128xf32> to vector<128xf32>
    %107 = vector.shape_cast %106 : vector<128xf32> to vector<1x128xf32>
    %108 = arith.maximumf %14, %26 : vector<1x128xf32>
    %109 = arith.maximumf %17, %29 : vector<1x128xf32>
    %110 = arith.maximumf %20, %32 : vector<1x128xf32>
    %111 = arith.maximumf %23, %35 : vector<1x128xf32>
    %112 = arith.maximumf %26, %38 : vector<1x128xf32>
    %113 = arith.maximumf %112, %50 : vector<1x128xf32>
    %114 = arith.maximumf %29, %41 : vector<1x128xf32>
    %115 = arith.maximumf %114, %53 : vector<1x128xf32>
    %116 = arith.maximumf %32, %44 : vector<1x128xf32>
    %117 = arith.maximumf %116, %56 : vector<1x128xf32>
    %118 = arith.maximumf %35, %47 : vector<1x128xf32>
    %119 = arith.maximumf %118, %59 : vector<1x128xf32>
    %120 = arith.maximumf %50, %62 : vector<1x128xf32>
    %121 = arith.maximumf %120, %74 : vector<1x128xf32>
    %122 = arith.maximumf %53, %65 : vector<1x128xf32>
    %123 = arith.maximumf %122, %77 : vector<1x128xf32>
    %124 = arith.maximumf %56, %68 : vector<1x128xf32>
    %125 = arith.maximumf %124, %80 : vector<1x128xf32>
    %126 = arith.maximumf %59, %71 : vector<1x128xf32>
    %127 = arith.maximumf %126, %83 : vector<1x128xf32>
    %128 = arith.maximumf %74, %86 : vector<1x128xf32>
    %129 = arith.maximumf %128, %98 : vector<1x128xf32>
    %130 = arith.maximumf %77, %89 : vector<1x128xf32>
    %131 = arith.maximumf %130, %101 : vector<1x128xf32>
    %132 = arith.maximumf %80, %92 : vector<1x128xf32>
    %133 = arith.maximumf %132, %104 : vector<1x128xf32>
    %134 = arith.maximumf %83, %95 : vector<1x128xf32>
    %135 = arith.maximumf %134, %107 : vector<1x128xf32>
    %cst_40 = arith.constant 0.000000e+00 : f32
    %136 = vector.broadcast %cst_40 : f32 to vector<1x128xf32>
    %cst_41 = arith.constant 0.000000e+00 : f32
    %137 = vector.broadcast %cst_41 : f32 to vector<1x1152xf32>
    %138 = tpu.concatenate %136, %136, %136, %136, %108, %109, %136, %113, %115 in 1 : vector<1x128xf32>, vector<1x128xf32>, vector<1x128xf32>, vector<1x128xf32>, vector<1x128xf32>, vector<1x128xf32>, vector<1x128xf32>, vector<1x128xf32>, vector<1x128xf32> -> vector<1x1152xf32>
    %139 = tpu.concatenate %136, %136, %136, %109, %110, %111, %115, %117, %119 in 1 : vector<1x128xf32>, vector<1x128xf32>, vector<1x128xf32>, vector<1x128xf32>, vector<1x128xf32>, vector<1x128xf32>, vector<1x128xf32>, vector<1x128xf32>, vector<1x128xf32> -> vector<1x1152xf32>
    %140 = tpu.concatenate %136, %113, %115, %136, %121, %123, %136, %129, %131 in 1 : vector<1x128xf32>, vector<1x128xf32>, vector<1x128xf32>, vector<1x128xf32>, vector<1x128xf32>, vector<1x128xf32>, vector<1x128xf32>, vector<1x128xf32>, vector<1x128xf32> -> vector<1x1152xf32>
    %141 = tpu.concatenate %115, %117, %119, %123, %125, %127, %131, %133, %135 in 1 : vector<1x128xf32>, vector<1x128xf32>, vector<1x128xf32>, vector<1x128xf32>, vector<1x128xf32>, vector<1x128xf32>, vector<1x128xf32>, vector<1x128xf32>, vector<1x128xf32> -> vector<1x1152xf32>
    %cst_42 = arith.constant 0.000000e+00 : f32
    %142 = vector.broadcast %cst_42 : f32 to vector<3x1152xf32>
    %143 = tpu.concatenate %137, %138, %139, %140, %141, %142 in 0 : vector<1x1152xf32>, vector<1x1152xf32>, vector<1x1152xf32>, vector<1x1152xf32>, vector<1x1152xf32>, vector<3x1152xf32> -> vector<8x1152xf32>
    %144 = arith.truncf %143 : vector<8x1152xf32> to vector<8x1152xbf16>
    %c0_43 = arith.constant 0 : index
    %c0_44 = arith.constant 0 : index
    %145 = vector.load %arg4[%c0_43, %c0_44] : memref<1152x128xbf16, #tpu.memory_space<vmem>>, vector<1152x128xbf16>
    %cst_45 = arith.constant dense<0.000000e+00> : vector<8x128xf32>
    %146 = tpu.matmul %144, %145, %cst_45 {dimension_numbers = #tpu.dot_dimension_numbers<[1], [0], [0], [1], [0, 0, 1, 1], [], []>} : vector<8x1152xbf16>, vector<1152x128xbf16>, vector<8x128xf32> -> vector<8x128xf32>
    %c0_46 = arith.constant 0 : index
    %c0_47 = arith.constant 0 : index
    %147 = vector.load %arg5[%c0_46, %c0_47] : memref<2x128xf32, #tpu.memory_space<vmem>>, vector<1x128xf32>
    %148 = vector.broadcast %147 : vector<1x128xf32> to vector<8x128xf32>
    %149 = arith.mulf %146, %148 : vector<8x128xf32>
    %c1_48 = arith.constant 1 : index
    %c0_49 = arith.constant 0 : index
    %150 = vector.load %arg5[%c1_48, %c0_49] : memref<2x128xf32, #tpu.memory_space<vmem>>, vector<1x128xf32>
    %151 = vector.broadcast %150 : vector<1x128xf32> to vector<8x128xf32>
    %152 = arith.addf %149, %151 : vector<8x128xf32>
    %cst_50 = arith.constant 0.000000e+00 : f32
    %153 = vector.broadcast %cst_50 : f32 to vector<8x128xf32>
    %154 = arith.maximumf %152, %153 : vector<8x128xf32>
    %155 = tpu.iota {dimensions = array<i32: 0>} : vector<8x128xi32>
    %c1_i32 = arith.constant 1 : i32
    %156 = vector.broadcast %c1_i32 : i32 to vector<8x128xi32>
    %157 = arith.cmpi sge, %155, %156 : vector<8x128xi32>
    %c5_i32 = arith.constant 5 : i32
    %158 = vector.broadcast %c5_i32 : i32 to vector<8x128xi32>
    %159 = arith.cmpi slt, %155, %158 : vector<8x128xi32>
    %160 = arith.andi %157, %159 : vector<8x128xi1>
    %c0_51 = arith.constant 0 : index
    %c0_52 = arith.constant 0 : index
    %161 = vector.load %arg6[%c0_51, %c0_52] : memref<8x128xf32, #tpu.memory_space<vmem>>, vector<8x128xf32>
    %cst_53 = arith.constant 0.000000e+00 : f32
    %162 = vector.broadcast %cst_53 : f32 to vector<8x128xf32>
    %163 = arith.select %160, %154, %162 : vector<8x128xi1>, vector<8x128xf32>
    %164 = arith.addf %161, %163 : vector<8x128xf32>
    %165 = tpu.iota {dimensions = array<i32: 2>} : vector<1x1x8xi32>
    %c5_i32_54 = arith.constant 5 : i32
    %166 = vector.broadcast %c5_i32_54 : i32 to vector<1x1x8xi32>
    %167 = arith.cmpi sge, %165, %166 : vector<1x1x8xi32>
    %cst_55 = arith.constant -1.000000e+09 : f32
    %cst_56 = arith.constant 0.000000e+00 : f32
    %168 = vector.broadcast %cst_55 : f32 to vector<1x1x8xf32>
    %169 = vector.broadcast %cst_56 : f32 to vector<1x1x8xf32>
    %170 = arith.select %167, %168, %169 : vector<1x1x8xi1>, vector<1x1x8xf32>
    %171 = arith.truncf %164 : vector<8x128xf32> to vector<8x128xbf16>
    %c0_57 = arith.constant 0 : index
    %c0_58 = arith.constant 0 : index
    %c0_59 = arith.constant 0 : index
    %172 = vector.load %arg7[%c0_57, %c0_58, %c0_59] : memref<2x128x384xbf16, #tpu.memory_space<vmem>>, vector<1x128x384xbf16>
    %173 = vector.shape_cast %172 : vector<1x128x384xbf16> to vector<128x384xbf16>
    %cst_60 = arith.constant dense<0.000000e+00> : vector<8x384xf32>
    %174 = tpu.matmul %171, %173, %cst_60 {dimension_numbers = #tpu.dot_dimension_numbers<[1], [0], [0], [1], [0, 0, 1, 1], [], []>} : vector<8x128xbf16>, vector<128x384xbf16>, vector<8x384xf32> -> vector<8x384xf32>
    %c0_61 = arith.constant 0 : index
    %c0_62 = arith.constant 0 : index
    %c0_63 = arith.constant 0 : index
    %175 = vector.load %arg8[%c0_61, %c0_62, %c0_63] : memref<2x1x384xf32, #tpu.memory_space<vmem>>, vector<1x1x384xf32>
    %176 = vector.shape_cast %175 : vector<1x1x384xf32> to vector<1x384xf32>
    %177 = vector.broadcast %176 : vector<1x384xf32> to vector<8x384xf32>
    %178 = arith.addf %174, %177 : vector<8x384xf32>
    %179 = vector.extract_strided_slice %178 {offsets = [0, 0], sizes = [8, 128], strides = [1, 1]} : vector<8x384xf32> to vector<8x128xf32>
    %180 = vector.extract_strided_slice %178 {offsets = [0, 128], sizes = [8, 128], strides = [1, 1]} : vector<8x384xf32> to vector<8x128xf32>
    %181 = vector.extract_strided_slice %178 {offsets = [0, 256], sizes = [8, 128], strides = [1, 1]} : vector<8x384xf32> to vector<8x128xf32>
    %182 = vector.extract_strided_slice %179 {offsets = [0, 0], sizes = [8, 16], strides = [1, 1]} : vector<8x128xf32> to vector<8x16xf32>
    %183 = vector.extract_strided_slice %179 {offsets = [0, 16], sizes = [8, 16], strides = [1, 1]} : vector<8x128xf32> to vector<8x16xf32>
    %184 = vector.extract_strided_slice %179 {offsets = [0, 32], sizes = [8, 16], strides = [1, 1]} : vector<8x128xf32> to vector<8x16xf32>
    %185 = vector.extract_strided_slice %179 {offsets = [0, 48], sizes = [8, 16], strides = [1, 1]} : vector<8x128xf32> to vector<8x16xf32>
    %186 = vector.extract_strided_slice %179 {offsets = [0, 64], sizes = [8, 16], strides = [1, 1]} : vector<8x128xf32> to vector<8x16xf32>
    %187 = vector.extract_strided_slice %179 {offsets = [0, 80], sizes = [8, 16], strides = [1, 1]} : vector<8x128xf32> to vector<8x16xf32>
    %188 = vector.extract_strided_slice %179 {offsets = [0, 96], sizes = [8, 16], strides = [1, 1]} : vector<8x128xf32> to vector<8x16xf32>
    %189 = vector.extract_strided_slice %179 {offsets = [0, 112], sizes = [8, 16], strides = [1, 1]} : vector<8x128xf32> to vector<8x16xf32>
    %190 = vector.shape_cast %182 : vector<8x16xf32> to vector<1x8x16xf32>
    %191 = vector.shape_cast %183 : vector<8x16xf32> to vector<1x8x16xf32>
    %192 = vector.shape_cast %184 : vector<8x16xf32> to vector<1x8x16xf32>
    %193 = vector.shape_cast %185 : vector<8x16xf32> to vector<1x8x16xf32>
    %194 = vector.shape_cast %186 : vector<8x16xf32> to vector<1x8x16xf32>
    %195 = vector.shape_cast %187 : vector<8x16xf32> to vector<1x8x16xf32>
    %196 = vector.shape_cast %188 : vector<8x16xf32> to vector<1x8x16xf32>
    %197 = vector.shape_cast %189 : vector<8x16xf32> to vector<1x8x16xf32>
    %198 = tpu.concatenate %190, %191, %192, %193, %194, %195, %196, %197 in 0 : vector<1x8x16xf32>, vector<1x8x16xf32>, vector<1x8x16xf32>, vector<1x8x16xf32>, vector<1x8x16xf32>, vector<1x8x16xf32>, vector<1x8x16xf32>, vector<1x8x16xf32> -> vector<8x8x16xf32>
    %199 = arith.truncf %198 : vector<8x8x16xf32> to vector<8x8x16xbf16>
    %200 = vector.extract_strided_slice %180 {offsets = [0, 0], sizes = [8, 16], strides = [1, 1]} : vector<8x128xf32> to vector<8x16xf32>
    %201 = vector.extract_strided_slice %180 {offsets = [0, 16], sizes = [8, 16], strides = [1, 1]} : vector<8x128xf32> to vector<8x16xf32>
    %202 = vector.extract_strided_slice %180 {offsets = [0, 32], sizes = [8, 16], strides = [1, 1]} : vector<8x128xf32> to vector<8x16xf32>
    %203 = vector.extract_strided_slice %180 {offsets = [0, 48], sizes = [8, 16], strides = [1, 1]} : vector<8x128xf32> to vector<8x16xf32>
    %204 = vector.extract_strided_slice %180 {offsets = [0, 64], sizes = [8, 16], strides = [1, 1]} : vector<8x128xf32> to vector<8x16xf32>
    %205 = vector.extract_strided_slice %180 {offsets = [0, 80], sizes = [8, 16], strides = [1, 1]} : vector<8x128xf32> to vector<8x16xf32>
    %206 = vector.extract_strided_slice %180 {offsets = [0, 96], sizes = [8, 16], strides = [1, 1]} : vector<8x128xf32> to vector<8x16xf32>
    %207 = vector.extract_strided_slice %180 {offsets = [0, 112], sizes = [8, 16], strides = [1, 1]} : vector<8x128xf32> to vector<8x16xf32>
    %208 = vector.shape_cast %200 : vector<8x16xf32> to vector<1x8x16xf32>
    %209 = vector.shape_cast %201 : vector<8x16xf32> to vector<1x8x16xf32>
    %210 = vector.shape_cast %202 : vector<8x16xf32> to vector<1x8x16xf32>
    %211 = vector.shape_cast %203 : vector<8x16xf32> to vector<1x8x16xf32>
    %212 = vector.shape_cast %204 : vector<8x16xf32> to vector<1x8x16xf32>
    %213 = vector.shape_cast %205 : vector<8x16xf32> to vector<1x8x16xf32>
    %214 = vector.shape_cast %206 : vector<8x16xf32> to vector<1x8x16xf32>
    %215 = vector.shape_cast %207 : vector<8x16xf32> to vector<1x8x16xf32>
    %216 = tpu.concatenate %208, %209, %210, %211, %212, %213, %214, %215 in 0 : vector<1x8x16xf32>, vector<1x8x16xf32>, vector<1x8x16xf32>, vector<1x8x16xf32>, vector<1x8x16xf32>, vector<1x8x16xf32>, vector<1x8x16xf32>, vector<1x8x16xf32> -> vector<8x8x16xf32>
    %217 = arith.truncf %216 : vector<8x8x16xf32> to vector<8x8x16xbf16>
    %218 = vector.extract_strided_slice %181 {offsets = [0, 0], sizes = [8, 16], strides = [1, 1]} : vector<8x128xf32> to vector<8x16xf32>
    %219 = vector.extract_strided_slice %181 {offsets = [0, 16], sizes = [8, 16], strides = [1, 1]} : vector<8x128xf32> to vector<8x16xf32>
    %220 = vector.extract_strided_slice %181 {offsets = [0, 32], sizes = [8, 16], strides = [1, 1]} : vector<8x128xf32> to vector<8x16xf32>
    %221 = vector.extract_strided_slice %181 {offsets = [0, 48], sizes = [8, 16], strides = [1, 1]} : vector<8x128xf32> to vector<8x16xf32>
    %222 = vector.extract_strided_slice %181 {offsets = [0, 64], sizes = [8, 16], strides = [1, 1]} : vector<8x128xf32> to vector<8x16xf32>
    %223 = vector.extract_strided_slice %181 {offsets = [0, 80], sizes = [8, 16], strides = [1, 1]} : vector<8x128xf32> to vector<8x16xf32>
    %224 = vector.extract_strided_slice %181 {offsets = [0, 96], sizes = [8, 16], strides = [1, 1]} : vector<8x128xf32> to vector<8x16xf32>
    %225 = vector.extract_strided_slice %181 {offsets = [0, 112], sizes = [8, 16], strides = [1, 1]} : vector<8x128xf32> to vector<8x16xf32>
    %226 = vector.shape_cast %218 : vector<8x16xf32> to vector<1x8x16xf32>
    %227 = vector.shape_cast %219 : vector<8x16xf32> to vector<1x8x16xf32>
    %228 = vector.shape_cast %220 : vector<8x16xf32> to vector<1x8x16xf32>
    %229 = vector.shape_cast %221 : vector<8x16xf32> to vector<1x8x16xf32>
    %230 = vector.shape_cast %222 : vector<8x16xf32> to vector<1x8x16xf32>
    %231 = vector.shape_cast %223 : vector<8x16xf32> to vector<1x8x16xf32>
    %232 = vector.shape_cast %224 : vector<8x16xf32> to vector<1x8x16xf32>
    %233 = vector.shape_cast %225 : vector<8x16xf32> to vector<1x8x16xf32>
    %234 = tpu.concatenate %226, %227, %228, %229, %230, %231, %232, %233 in 0 : vector<1x8x16xf32>, vector<1x8x16xf32>, vector<1x8x16xf32>, vector<1x8x16xf32>, vector<1x8x16xf32>, vector<1x8x16xf32>, vector<1x8x16xf32>, vector<1x8x16xf32> -> vector<8x8x16xf32>
    %235 = arith.truncf %234 : vector<8x8x16xf32> to vector<8x8x16xbf16>
    %cst_64 = arith.constant dense<0.000000e+00> : vector<8x8x8xf32>
    %236 = tpu.matmul %199, %217, %cst_64 {dimension_numbers = #tpu.dot_dimension_numbers<[2], [2], [1], [1], [0, 0, 0, 1, 1, 1], [0], [0]>} : vector<8x8x16xbf16>, vector<8x8x16xbf16>, vector<8x8x8xf32> -> vector<8x8x8xf32>
    %237 = vector.broadcast %170 : vector<1x1x8xf32> to vector<8x8x8xf32>
    %238 = arith.addf %236, %237 : vector<8x8x8xf32>
    %cst_65 = arith.constant dense<0xFF800000> : vector<8x8xf32>
    %239 = vector.multi_reduction <maximumf>, %238, %cst_65 [2] : vector<8x8x8xf32> to vector<8x8xf32>
    %240 = vector.shape_cast %239 : vector<8x8xf32> to vector<8x8x1xf32>
    %241 = vector.broadcast %240 : vector<8x8x1xf32> to vector<8x8x8xf32>
    %242 = arith.subf %238, %241 : vector<8x8x8xf32>
    %243 = math.exp %242 : vector<8x8x8xf32>
    %cst_66 = arith.constant dense<0.000000e+00> : vector<8x8xf32>
    %244 = vector.multi_reduction <add>, %243, %cst_66 [2] : vector<8x8x8xf32> to vector<8x8xf32>
    %245 = vector.shape_cast %244 : vector<8x8xf32> to vector<8x8x1xf32>
    %246 = tpu.reciprocal %245 {approx = true} : vector<8x8x1xf32> -> vector<8x8x1xf32>
    %247 = vector.broadcast %246 : vector<8x8x1xf32> to vector<8x8x8xf32>
    %248 = arith.mulf %243, %247 : vector<8x8x8xf32>
    %249 = arith.truncf %248 : vector<8x8x8xf32> to vector<8x8x8xbf16>
    %cst_67 = arith.constant dense<0.000000e+00> : vector<8x8x16xf32>
    %250 = tpu.matmul %249, %235, %cst_67 {dimension_numbers = #tpu.dot_dimension_numbers<[2], [1], [1], [2], [0, 0, 0, 1, 1, 2], [0], [0]>} : vector<8x8x8xbf16>, vector<8x8x16xbf16>, vector<8x8x16xf32> -> vector<8x8x16xf32>
    %251 = vector.extract_strided_slice %250 {offsets = [0, 0, 0], sizes = [1, 8, 16], strides = [1, 1, 1]} : vector<8x8x16xf32> to vector<1x8x16xf32>
    %252 = vector.shape_cast %251 : vector<1x8x16xf32> to vector<8x16xf32>
    %253 = vector.extract_strided_slice %250 {offsets = [1, 0, 0], sizes = [1, 8, 16], strides = [1, 1, 1]} : vector<8x8x16xf32> to vector<1x8x16xf32>
    %254 = vector.shape_cast %253 : vector<1x8x16xf32> to vector<8x16xf32>
    %255 = vector.extract_strided_slice %250 {offsets = [2, 0, 0], sizes = [1, 8, 16], strides = [1, 1, 1]} : vector<8x8x16xf32> to vector<1x8x16xf32>
    %256 = vector.shape_cast %255 : vector<1x8x16xf32> to vector<8x16xf32>
    %257 = vector.extract_strided_slice %250 {offsets = [3, 0, 0], sizes = [1, 8, 16], strides = [1, 1, 1]} : vector<8x8x16xf32> to vector<1x8x16xf32>
    %258 = vector.shape_cast %257 : vector<1x8x16xf32> to vector<8x16xf32>
    %259 = vector.extract_strided_slice %250 {offsets = [4, 0, 0], sizes = [1, 8, 16], strides = [1, 1, 1]} : vector<8x8x16xf32> to vector<1x8x16xf32>
    %260 = vector.shape_cast %259 : vector<1x8x16xf32> to vector<8x16xf32>
    %261 = vector.extract_strided_slice %250 {offsets = [5, 0, 0], sizes = [1, 8, 16], strides = [1, 1, 1]} : vector<8x8x16xf32> to vector<1x8x16xf32>
    %262 = vector.shape_cast %261 : vector<1x8x16xf32> to vector<8x16xf32>
    %263 = vector.extract_strided_slice %250 {offsets = [6, 0, 0], sizes = [1, 8, 16], strides = [1, 1, 1]} : vector<8x8x16xf32> to vector<1x8x16xf32>
    %264 = vector.shape_cast %263 : vector<1x8x16xf32> to vector<8x16xf32>
    %265 = vector.extract_strided_slice %250 {offsets = [7, 0, 0], sizes = [1, 8, 16], strides = [1, 1, 1]} : vector<8x8x16xf32> to vector<1x8x16xf32>
    %266 = vector.shape_cast %265 : vector<1x8x16xf32> to vector<8x16xf32>
    %267 = tpu.concatenate %252, %254, %256, %258, %260, %262, %264, %266 in 1 : vector<8x16xf32>, vector<8x16xf32>, vector<8x16xf32>, vector<8x16xf32>, vector<8x16xf32>, vector<8x16xf32>, vector<8x16xf32>, vector<8x16xf32> -> vector<8x128xf32>
    %268 = arith.truncf %267 : vector<8x128xf32> to vector<8x128xbf16>
    %c0_68 = arith.constant 0 : index
    %c0_69 = arith.constant 0 : index
    %c0_70 = arith.constant 0 : index
    %269 = vector.load %arg9[%c0_68, %c0_69, %c0_70] : memref<2x128x128xbf16, #tpu.memory_space<vmem>>, vector<1x128x128xbf16>
    %270 = vector.shape_cast %269 : vector<1x128x128xbf16> to vector<128x128xbf16>
    %cst_71 = arith.constant dense<0.000000e+00> : vector<8x128xf32>
    %271 = tpu.matmul %268, %270, %cst_71 {dimension_numbers = #tpu.dot_dimension_numbers<[1], [0], [0], [1], [0, 0, 1, 1], [], []>} : vector<8x128xbf16>, vector<128x128xbf16>, vector<8x128xf32> -> vector<8x128xf32>
    %c0_72 = arith.constant 0 : index
    %c0_73 = arith.constant 0 : index
    %c0_74 = arith.constant 0 : index
    %272 = vector.load %arg10[%c0_72, %c0_73, %c0_74] : memref<2x1x128xf32, #tpu.memory_space<vmem>>, vector<1x1x128xf32>
    %273 = vector.shape_cast %272 : vector<1x1x128xf32> to vector<1x128xf32>
    %274 = vector.broadcast %273 : vector<1x128xf32> to vector<8x128xf32>
    %275 = arith.addf %271, %274 : vector<8x128xf32>
    %276 = arith.addf %164, %275 : vector<8x128xf32>
    %c0_75 = arith.constant 0 : index
    %c0_76 = arith.constant 0 : index
    %c0_77 = arith.constant 0 : index
    %277 = vector.load %arg15[%c0_75, %c0_76, %c0_77] : memref<2x4x128xf32, #tpu.memory_space<vmem>>, vector<1x1x128xf32>
    %278 = vector.shape_cast %277 : vector<1x1x128xf32> to vector<1x128xf32>
    %c0_78 = arith.constant 0 : index
    %c1_79 = arith.constant 1 : index
    %c0_80 = arith.constant 0 : index
    %279 = vector.load %arg15[%c0_78, %c1_79, %c0_80] : memref<2x4x128xf32, #tpu.memory_space<vmem>>, vector<1x1x128xf32>
    %280 = vector.shape_cast %279 : vector<1x1x128xf32> to vector<1x128xf32>
    %cst_81 = arith.constant dense<0.000000e+00> : vector<8xf32>
    %281 = vector.multi_reduction <add>, %276, %cst_81 [1] : vector<8x128xf32> to vector<8xf32>
    %282 = vector.shape_cast %281 : vector<8xf32> to vector<8x1xf32>
    %cst_82 = arith.constant 1.280000e+02 : f32
    %283 = vector.broadcast %cst_82 : f32 to vector<8x1xf32>
    %284 = arith.divf %282, %283 : vector<8x1xf32>
    %285 = vector.broadcast %284 : vector<8x1xf32> to vector<8x128xf32>
    %286 = arith.subf %276, %285 : vector<8x128xf32>
    %287 = arith.mulf %286, %286 : vector<8x128xf32>
    %cst_83 = arith.constant dense<0.000000e+00> : vector<8xf32>
    %288 = vector.multi_reduction <add>, %287, %cst_83 [1] : vector<8x128xf32> to vector<8xf32>
    %289 = vector.shape_cast %288 : vector<8xf32> to vector<8x1xf32>
    %cst_84 = arith.constant 1.280000e+02 : f32
    %290 = vector.broadcast %cst_84 : f32 to vector<8x1xf32>
    %291 = arith.divf %289, %290 : vector<8x1xf32>
    %cst_85 = arith.constant 9.99999974E-6 : f32
    %292 = vector.broadcast %cst_85 : f32 to vector<8x1xf32>
    %293 = arith.addf %291, %292 : vector<8x1xf32>
    %294 = math.rsqrt %293 : vector<8x1xf32>
    %295 = vector.broadcast %294 : vector<8x1xf32> to vector<8x128xf32>
    %296 = arith.mulf %286, %295 : vector<8x128xf32>
    %297 = vector.broadcast %278 : vector<1x128xf32> to vector<8x128xf32>
    %298 = arith.mulf %296, %297 : vector<8x128xf32>
    %299 = vector.broadcast %280 : vector<1x128xf32> to vector<8x128xf32>
    %300 = arith.addf %298, %299 : vector<8x128xf32>
    %301 = arith.truncf %300 : vector<8x128xf32> to vector<8x128xbf16>
    %c0_86 = arith.constant 0 : index
    %c0_87 = arith.constant 0 : index
    %c0_88 = arith.constant 0 : index
    %302 = vector.load %arg11[%c0_86, %c0_87, %c0_88] : memref<2x128x512xbf16, #tpu.memory_space<vmem>>, vector<1x128x512xbf16>
    %303 = vector.shape_cast %302 : vector<1x128x512xbf16> to vector<128x512xbf16>
    %cst_89 = arith.constant dense<0.000000e+00> : vector<8x512xf32>
    %304 = tpu.matmul %301, %303, %cst_89 {dimension_numbers = #tpu.dot_dimension_numbers<[1], [0], [0], [1], [0, 0, 1, 1], [], []>} : vector<8x128xbf16>, vector<128x512xbf16>, vector<8x512xf32> -> vector<8x512xf32>
    %c0_90 = arith.constant 0 : index
    %c0_91 = arith.constant 0 : index
    %c0_92 = arith.constant 0 : index
    %305 = vector.load %arg12[%c0_90, %c0_91, %c0_92] : memref<2x1x512xf32, #tpu.memory_space<vmem>>, vector<1x1x512xf32>
    %306 = vector.shape_cast %305 : vector<1x1x512xf32> to vector<1x512xf32>
    %307 = vector.broadcast %306 : vector<1x512xf32> to vector<8x512xf32>
    %308 = arith.addf %304, %307 : vector<8x512xf32>
    %cst_93 = arith.constant 0.000000e+00 : f32
    %309 = vector.broadcast %cst_93 : f32 to vector<8x512xf32>
    %310 = arith.maximumf %308, %309 : vector<8x512xf32>
    %311 = arith.truncf %310 : vector<8x512xf32> to vector<8x512xbf16>
    %c0_94 = arith.constant 0 : index
    %c0_95 = arith.constant 0 : index
    %c0_96 = arith.constant 0 : index
    %312 = vector.load %arg13[%c0_94, %c0_95, %c0_96] : memref<2x512x128xbf16, #tpu.memory_space<vmem>>, vector<1x512x128xbf16>
    %313 = vector.shape_cast %312 : vector<1x512x128xbf16> to vector<512x128xbf16>
    %cst_97 = arith.constant dense<0.000000e+00> : vector<8x128xf32>
    %314 = tpu.matmul %311, %313, %cst_97 {dimension_numbers = #tpu.dot_dimension_numbers<[1], [0], [0], [1], [0, 0, 1, 1], [], []>} : vector<8x512xbf16>, vector<512x128xbf16>, vector<8x128xf32> -> vector<8x128xf32>
    %c0_98 = arith.constant 0 : index
    %c0_99 = arith.constant 0 : index
    %c0_100 = arith.constant 0 : index
    %315 = vector.load %arg14[%c0_98, %c0_99, %c0_100] : memref<2x1x128xf32, #tpu.memory_space<vmem>>, vector<1x1x128xf32>
    %316 = vector.shape_cast %315 : vector<1x1x128xf32> to vector<1x128xf32>
    %317 = vector.broadcast %316 : vector<1x128xf32> to vector<8x128xf32>
    %318 = arith.addf %314, %317 : vector<8x128xf32>
    %319 = arith.addf %300, %318 : vector<8x128xf32>
    %c0_101 = arith.constant 0 : index
    %c2 = arith.constant 2 : index
    %c0_102 = arith.constant 0 : index
    %320 = vector.load %arg15[%c0_101, %c2, %c0_102] : memref<2x4x128xf32, #tpu.memory_space<vmem>>, vector<1x1x128xf32>
    %321 = vector.shape_cast %320 : vector<1x1x128xf32> to vector<1x128xf32>
    %c0_103 = arith.constant 0 : index
    %c3 = arith.constant 3 : index
    %c0_104 = arith.constant 0 : index
    %322 = vector.load %arg15[%c0_103, %c3, %c0_104] : memref<2x4x128xf32, #tpu.memory_space<vmem>>, vector<1x1x128xf32>
    %323 = vector.shape_cast %322 : vector<1x1x128xf32> to vector<1x128xf32>
    %cst_105 = arith.constant dense<0.000000e+00> : vector<8xf32>
    %324 = vector.multi_reduction <add>, %319, %cst_105 [1] : vector<8x128xf32> to vector<8xf32>
    %325 = vector.shape_cast %324 : vector<8xf32> to vector<8x1xf32>
    %cst_106 = arith.constant 1.280000e+02 : f32
    %326 = vector.broadcast %cst_106 : f32 to vector<8x1xf32>
    %327 = arith.divf %325, %326 : vector<8x1xf32>
    %328 = vector.broadcast %327 : vector<8x1xf32> to vector<8x128xf32>
    %329 = arith.subf %319, %328 : vector<8x128xf32>
    %330 = arith.mulf %329, %329 : vector<8x128xf32>
    %cst_107 = arith.constant dense<0.000000e+00> : vector<8xf32>
    %331 = vector.multi_reduction <add>, %330, %cst_107 [1] : vector<8x128xf32> to vector<8xf32>
    %332 = vector.shape_cast %331 : vector<8xf32> to vector<8x1xf32>
    %cst_108 = arith.constant 1.280000e+02 : f32
    %333 = vector.broadcast %cst_108 : f32 to vector<8x1xf32>
    %334 = arith.divf %332, %333 : vector<8x1xf32>
    %cst_109 = arith.constant 9.99999974E-6 : f32
    %335 = vector.broadcast %cst_109 : f32 to vector<8x1xf32>
    %336 = arith.addf %334, %335 : vector<8x1xf32>
    %337 = math.rsqrt %336 : vector<8x1xf32>
    %338 = vector.broadcast %337 : vector<8x1xf32> to vector<8x128xf32>
    %339 = arith.mulf %329, %338 : vector<8x128xf32>
    %340 = vector.broadcast %321 : vector<1x128xf32> to vector<8x128xf32>
    %341 = arith.mulf %339, %340 : vector<8x128xf32>
    %342 = vector.broadcast %323 : vector<1x128xf32> to vector<8x128xf32>
    %343 = arith.addf %341, %342 : vector<8x128xf32>
    %344 = arith.truncf %343 : vector<8x128xf32> to vector<8x128xbf16>
    %c1_110 = arith.constant 1 : index
    %c0_111 = arith.constant 0 : index
    %c0_112 = arith.constant 0 : index
    %345 = vector.load %arg7[%c1_110, %c0_111, %c0_112] : memref<2x128x384xbf16, #tpu.memory_space<vmem>>, vector<1x128x384xbf16>
    %346 = vector.shape_cast %345 : vector<1x128x384xbf16> to vector<128x384xbf16>
    %cst_113 = arith.constant dense<0.000000e+00> : vector<8x384xf32>
    %347 = tpu.matmul %344, %346, %cst_113 {dimension_numbers = #tpu.dot_dimension_numbers<[1], [0], [0], [1], [0, 0, 1, 1], [], []>} : vector<8x128xbf16>, vector<128x384xbf16>, vector<8x384xf32> -> vector<8x384xf32>
    %c1_114 = arith.constant 1 : index
    %c0_115 = arith.constant 0 : index
    %c0_116 = arith.constant 0 : index
    %348 = vector.load %arg8[%c1_114, %c0_115, %c0_116] : memref<2x1x384xf32, #tpu.memory_space<vmem>>, vector<1x1x384xf32>
    %349 = vector.shape_cast %348 : vector<1x1x384xf32> to vector<1x384xf32>
    %350 = vector.broadcast %349 : vector<1x384xf32> to vector<8x384xf32>
    %351 = arith.addf %347, %350 : vector<8x384xf32>
    %352 = vector.extract_strided_slice %351 {offsets = [0, 0], sizes = [8, 128], strides = [1, 1]} : vector<8x384xf32> to vector<8x128xf32>
    %353 = vector.extract_strided_slice %351 {offsets = [0, 128], sizes = [8, 128], strides = [1, 1]} : vector<8x384xf32> to vector<8x128xf32>
    %354 = vector.extract_strided_slice %351 {offsets = [0, 256], sizes = [8, 128], strides = [1, 1]} : vector<8x384xf32> to vector<8x128xf32>
    %355 = vector.extract_strided_slice %352 {offsets = [0, 0], sizes = [8, 16], strides = [1, 1]} : vector<8x128xf32> to vector<8x16xf32>
    %356 = vector.extract_strided_slice %352 {offsets = [0, 16], sizes = [8, 16], strides = [1, 1]} : vector<8x128xf32> to vector<8x16xf32>
    %357 = vector.extract_strided_slice %352 {offsets = [0, 32], sizes = [8, 16], strides = [1, 1]} : vector<8x128xf32> to vector<8x16xf32>
    %358 = vector.extract_strided_slice %352 {offsets = [0, 48], sizes = [8, 16], strides = [1, 1]} : vector<8x128xf32> to vector<8x16xf32>
    %359 = vector.extract_strided_slice %352 {offsets = [0, 64], sizes = [8, 16], strides = [1, 1]} : vector<8x128xf32> to vector<8x16xf32>
    %360 = vector.extract_strided_slice %352 {offsets = [0, 80], sizes = [8, 16], strides = [1, 1]} : vector<8x128xf32> to vector<8x16xf32>
    %361 = vector.extract_strided_slice %352 {offsets = [0, 96], sizes = [8, 16], strides = [1, 1]} : vector<8x128xf32> to vector<8x16xf32>
    %362 = vector.extract_strided_slice %352 {offsets = [0, 112], sizes = [8, 16], strides = [1, 1]} : vector<8x128xf32> to vector<8x16xf32>
    %363 = vector.shape_cast %355 : vector<8x16xf32> to vector<1x8x16xf32>
    %364 = vector.shape_cast %356 : vector<8x16xf32> to vector<1x8x16xf32>
    %365 = vector.shape_cast %357 : vector<8x16xf32> to vector<1x8x16xf32>
    %366 = vector.shape_cast %358 : vector<8x16xf32> to vector<1x8x16xf32>
    %367 = vector.shape_cast %359 : vector<8x16xf32> to vector<1x8x16xf32>
    %368 = vector.shape_cast %360 : vector<8x16xf32> to vector<1x8x16xf32>
    %369 = vector.shape_cast %361 : vector<8x16xf32> to vector<1x8x16xf32>
    %370 = vector.shape_cast %362 : vector<8x16xf32> to vector<1x8x16xf32>
    %371 = tpu.concatenate %363, %364, %365, %366, %367, %368, %369, %370 in 0 : vector<1x8x16xf32>, vector<1x8x16xf32>, vector<1x8x16xf32>, vector<1x8x16xf32>, vector<1x8x16xf32>, vector<1x8x16xf32>, vector<1x8x16xf32>, vector<1x8x16xf32> -> vector<8x8x16xf32>
    %372 = arith.truncf %371 : vector<8x8x16xf32> to vector<8x8x16xbf16>
    %373 = vector.extract_strided_slice %353 {offsets = [0, 0], sizes = [8, 16], strides = [1, 1]} : vector<8x128xf32> to vector<8x16xf32>
    %374 = vector.extract_strided_slice %353 {offsets = [0, 16], sizes = [8, 16], strides = [1, 1]} : vector<8x128xf32> to vector<8x16xf32>
    %375 = vector.extract_strided_slice %353 {offsets = [0, 32], sizes = [8, 16], strides = [1, 1]} : vector<8x128xf32> to vector<8x16xf32>
    %376 = vector.extract_strided_slice %353 {offsets = [0, 48], sizes = [8, 16], strides = [1, 1]} : vector<8x128xf32> to vector<8x16xf32>
    %377 = vector.extract_strided_slice %353 {offsets = [0, 64], sizes = [8, 16], strides = [1, 1]} : vector<8x128xf32> to vector<8x16xf32>
    %378 = vector.extract_strided_slice %353 {offsets = [0, 80], sizes = [8, 16], strides = [1, 1]} : vector<8x128xf32> to vector<8x16xf32>
    %379 = vector.extract_strided_slice %353 {offsets = [0, 96], sizes = [8, 16], strides = [1, 1]} : vector<8x128xf32> to vector<8x16xf32>
    %380 = vector.extract_strided_slice %353 {offsets = [0, 112], sizes = [8, 16], strides = [1, 1]} : vector<8x128xf32> to vector<8x16xf32>
    %381 = vector.shape_cast %373 : vector<8x16xf32> to vector<1x8x16xf32>
    %382 = vector.shape_cast %374 : vector<8x16xf32> to vector<1x8x16xf32>
    %383 = vector.shape_cast %375 : vector<8x16xf32> to vector<1x8x16xf32>
    %384 = vector.shape_cast %376 : vector<8x16xf32> to vector<1x8x16xf32>
    %385 = vector.shape_cast %377 : vector<8x16xf32> to vector<1x8x16xf32>
    %386 = vector.shape_cast %378 : vector<8x16xf32> to vector<1x8x16xf32>
    %387 = vector.shape_cast %379 : vector<8x16xf32> to vector<1x8x16xf32>
    %388 = vector.shape_cast %380 : vector<8x16xf32> to vector<1x8x16xf32>
    %389 = tpu.concatenate %381, %382, %383, %384, %385, %386, %387, %388 in 0 : vector<1x8x16xf32>, vector<1x8x16xf32>, vector<1x8x16xf32>, vector<1x8x16xf32>, vector<1x8x16xf32>, vector<1x8x16xf32>, vector<1x8x16xf32>, vector<1x8x16xf32> -> vector<8x8x16xf32>
    %390 = arith.truncf %389 : vector<8x8x16xf32> to vector<8x8x16xbf16>
    %391 = vector.extract_strided_slice %354 {offsets = [0, 0], sizes = [8, 16], strides = [1, 1]} : vector<8x128xf32> to vector<8x16xf32>
    %392 = vector.extract_strided_slice %354 {offsets = [0, 16], sizes = [8, 16], strides = [1, 1]} : vector<8x128xf32> to vector<8x16xf32>
    %393 = vector.extract_strided_slice %354 {offsets = [0, 32], sizes = [8, 16], strides = [1, 1]} : vector<8x128xf32> to vector<8x16xf32>
    %394 = vector.extract_strided_slice %354 {offsets = [0, 48], sizes = [8, 16], strides = [1, 1]} : vector<8x128xf32> to vector<8x16xf32>
    %395 = vector.extract_strided_slice %354 {offsets = [0, 64], sizes = [8, 16], strides = [1, 1]} : vector<8x128xf32> to vector<8x16xf32>
    %396 = vector.extract_strided_slice %354 {offsets = [0, 80], sizes = [8, 16], strides = [1, 1]} : vector<8x128xf32> to vector<8x16xf32>
    %397 = vector.extract_strided_slice %354 {offsets = [0, 96], sizes = [8, 16], strides = [1, 1]} : vector<8x128xf32> to vector<8x16xf32>
    %398 = vector.extract_strided_slice %354 {offsets = [0, 112], sizes = [8, 16], strides = [1, 1]} : vector<8x128xf32> to vector<8x16xf32>
    %399 = vector.shape_cast %391 : vector<8x16xf32> to vector<1x8x16xf32>
    %400 = vector.shape_cast %392 : vector<8x16xf32> to vector<1x8x16xf32>
    %401 = vector.shape_cast %393 : vector<8x16xf32> to vector<1x8x16xf32>
    %402 = vector.shape_cast %394 : vector<8x16xf32> to vector<1x8x16xf32>
    %403 = vector.shape_cast %395 : vector<8x16xf32> to vector<1x8x16xf32>
    %404 = vector.shape_cast %396 : vector<8x16xf32> to vector<1x8x16xf32>
    %405 = vector.shape_cast %397 : vector<8x16xf32> to vector<1x8x16xf32>
    %406 = vector.shape_cast %398 : vector<8x16xf32> to vector<1x8x16xf32>
    %407 = tpu.concatenate %399, %400, %401, %402, %403, %404, %405, %406 in 0 : vector<1x8x16xf32>, vector<1x8x16xf32>, vector<1x8x16xf32>, vector<1x8x16xf32>, vector<1x8x16xf32>, vector<1x8x16xf32>, vector<1x8x16xf32>, vector<1x8x16xf32> -> vector<8x8x16xf32>
    %408 = arith.truncf %407 : vector<8x8x16xf32> to vector<8x8x16xbf16>
    %cst_117 = arith.constant dense<0.000000e+00> : vector<8x8x8xf32>
    %409 = tpu.matmul %372, %390, %cst_117 {dimension_numbers = #tpu.dot_dimension_numbers<[2], [2], [1], [1], [0, 0, 0, 1, 1, 1], [0], [0]>} : vector<8x8x16xbf16>, vector<8x8x16xbf16>, vector<8x8x8xf32> -> vector<8x8x8xf32>
    %410 = vector.broadcast %170 : vector<1x1x8xf32> to vector<8x8x8xf32>
    %411 = arith.addf %409, %410 : vector<8x8x8xf32>
    %cst_118 = arith.constant dense<0xFF800000> : vector<8x8xf32>
    %412 = vector.multi_reduction <maximumf>, %411, %cst_118 [2] : vector<8x8x8xf32> to vector<8x8xf32>
    %413 = vector.shape_cast %412 : vector<8x8xf32> to vector<8x8x1xf32>
    %414 = vector.broadcast %413 : vector<8x8x1xf32> to vector<8x8x8xf32>
    %415 = arith.subf %411, %414 : vector<8x8x8xf32>
    %416 = math.exp %415 : vector<8x8x8xf32>
    %cst_119 = arith.constant dense<0.000000e+00> : vector<8x8xf32>
    %417 = vector.multi_reduction <add>, %416, %cst_119 [2] : vector<8x8x8xf32> to vector<8x8xf32>
    %418 = vector.shape_cast %417 : vector<8x8xf32> to vector<8x8x1xf32>
    %419 = tpu.reciprocal %418 {approx = true} : vector<8x8x1xf32> -> vector<8x8x1xf32>
    %420 = vector.broadcast %419 : vector<8x8x1xf32> to vector<8x8x8xf32>
    %421 = arith.mulf %416, %420 : vector<8x8x8xf32>
    %422 = arith.truncf %421 : vector<8x8x8xf32> to vector<8x8x8xbf16>
    %cst_120 = arith.constant dense<0.000000e+00> : vector<8x8x16xf32>
    %423 = tpu.matmul %422, %408, %cst_120 {dimension_numbers = #tpu.dot_dimension_numbers<[2], [1], [1], [2], [0, 0, 0, 1, 1, 2], [0], [0]>} : vector<8x8x8xbf16>, vector<8x8x16xbf16>, vector<8x8x16xf32> -> vector<8x8x16xf32>
    %424 = vector.extract_strided_slice %423 {offsets = [0, 0, 0], sizes = [1, 8, 16], strides = [1, 1, 1]} : vector<8x8x16xf32> to vector<1x8x16xf32>
    %425 = vector.shape_cast %424 : vector<1x8x16xf32> to vector<8x16xf32>
    %426 = vector.extract_strided_slice %423 {offsets = [1, 0, 0], sizes = [1, 8, 16], strides = [1, 1, 1]} : vector<8x8x16xf32> to vector<1x8x16xf32>
    %427 = vector.shape_cast %426 : vector<1x8x16xf32> to vector<8x16xf32>
    %428 = vector.extract_strided_slice %423 {offsets = [2, 0, 0], sizes = [1, 8, 16], strides = [1, 1, 1]} : vector<8x8x16xf32> to vector<1x8x16xf32>
    %429 = vector.shape_cast %428 : vector<1x8x16xf32> to vector<8x16xf32>
    %430 = vector.extract_strided_slice %423 {offsets = [3, 0, 0], sizes = [1, 8, 16], strides = [1, 1, 1]} : vector<8x8x16xf32> to vector<1x8x16xf32>
    %431 = vector.shape_cast %430 : vector<1x8x16xf32> to vector<8x16xf32>
    %432 = vector.extract_strided_slice %423 {offsets = [4, 0, 0], sizes = [1, 8, 16], strides = [1, 1, 1]} : vector<8x8x16xf32> to vector<1x8x16xf32>
    %433 = vector.shape_cast %432 : vector<1x8x16xf32> to vector<8x16xf32>
    %434 = vector.extract_strided_slice %423 {offsets = [5, 0, 0], sizes = [1, 8, 16], strides = [1, 1, 1]} : vector<8x8x16xf32> to vector<1x8x16xf32>
    %435 = vector.shape_cast %434 : vector<1x8x16xf32> to vector<8x16xf32>
    %436 = vector.extract_strided_slice %423 {offsets = [6, 0, 0], sizes = [1, 8, 16], strides = [1, 1, 1]} : vector<8x8x16xf32> to vector<1x8x16xf32>
    %437 = vector.shape_cast %436 : vector<1x8x16xf32> to vector<8x16xf32>
    %438 = vector.extract_strided_slice %423 {offsets = [7, 0, 0], sizes = [1, 8, 16], strides = [1, 1, 1]} : vector<8x8x16xf32> to vector<1x8x16xf32>
    %439 = vector.shape_cast %438 : vector<1x8x16xf32> to vector<8x16xf32>
    %440 = tpu.concatenate %425, %427, %429, %431, %433, %435, %437, %439 in 1 : vector<8x16xf32>, vector<8x16xf32>, vector<8x16xf32>, vector<8x16xf32>, vector<8x16xf32>, vector<8x16xf32>, vector<8x16xf32>, vector<8x16xf32> -> vector<8x128xf32>
    %441 = arith.truncf %440 : vector<8x128xf32> to vector<8x128xbf16>
    %c1_121 = arith.constant 1 : index
    %c0_122 = arith.constant 0 : index
    %c0_123 = arith.constant 0 : index
    %442 = vector.load %arg9[%c1_121, %c0_122, %c0_123] : memref<2x128x128xbf16, #tpu.memory_space<vmem>>, vector<1x128x128xbf16>
    %443 = vector.shape_cast %442 : vector<1x128x128xbf16> to vector<128x128xbf16>
    %cst_124 = arith.constant dense<0.000000e+00> : vector<8x128xf32>
    %444 = tpu.matmul %441, %443, %cst_124 {dimension_numbers = #tpu.dot_dimension_numbers<[1], [0], [0], [1], [0, 0, 1, 1], [], []>} : vector<8x128xbf16>, vector<128x128xbf16>, vector<8x128xf32> -> vector<8x128xf32>
    %c1_125 = arith.constant 1 : index
    %c0_126 = arith.constant 0 : index
    %c0_127 = arith.constant 0 : index
    %445 = vector.load %arg10[%c1_125, %c0_126, %c0_127] : memref<2x1x128xf32, #tpu.memory_space<vmem>>, vector<1x1x128xf32>
    %446 = vector.shape_cast %445 : vector<1x1x128xf32> to vector<1x128xf32>
    %447 = vector.broadcast %446 : vector<1x128xf32> to vector<8x128xf32>
    %448 = arith.addf %444, %447 : vector<8x128xf32>
    %449 = arith.addf %343, %448 : vector<8x128xf32>
    %c1_128 = arith.constant 1 : index
    %c0_129 = arith.constant 0 : index
    %c0_130 = arith.constant 0 : index
    %450 = vector.load %arg15[%c1_128, %c0_129, %c0_130] : memref<2x4x128xf32, #tpu.memory_space<vmem>>, vector<1x1x128xf32>
    %451 = vector.shape_cast %450 : vector<1x1x128xf32> to vector<1x128xf32>
    %c1_131 = arith.constant 1 : index
    %c1_132 = arith.constant 1 : index
    %c0_133 = arith.constant 0 : index
    %452 = vector.load %arg15[%c1_131, %c1_132, %c0_133] : memref<2x4x128xf32, #tpu.memory_space<vmem>>, vector<1x1x128xf32>
    %453 = vector.shape_cast %452 : vector<1x1x128xf32> to vector<1x128xf32>
    %cst_134 = arith.constant dense<0.000000e+00> : vector<8xf32>
    %454 = vector.multi_reduction <add>, %449, %cst_134 [1] : vector<8x128xf32> to vector<8xf32>
    %455 = vector.shape_cast %454 : vector<8xf32> to vector<8x1xf32>
    %cst_135 = arith.constant 1.280000e+02 : f32
    %456 = vector.broadcast %cst_135 : f32 to vector<8x1xf32>
    %457 = arith.divf %455, %456 : vector<8x1xf32>
    %458 = vector.broadcast %457 : vector<8x1xf32> to vector<8x128xf32>
    %459 = arith.subf %449, %458 : vector<8x128xf32>
    %460 = arith.mulf %459, %459 : vector<8x128xf32>
    %cst_136 = arith.constant dense<0.000000e+00> : vector<8xf32>
    %461 = vector.multi_reduction <add>, %460, %cst_136 [1] : vector<8x128xf32> to vector<8xf32>
    %462 = vector.shape_cast %461 : vector<8xf32> to vector<8x1xf32>
    %cst_137 = arith.constant 1.280000e+02 : f32
    %463 = vector.broadcast %cst_137 : f32 to vector<8x1xf32>
    %464 = arith.divf %462, %463 : vector<8x1xf32>
    %cst_138 = arith.constant 9.99999974E-6 : f32
    %465 = vector.broadcast %cst_138 : f32 to vector<8x1xf32>
    %466 = arith.addf %464, %465 : vector<8x1xf32>
    %467 = math.rsqrt %466 : vector<8x1xf32>
    %468 = vector.broadcast %467 : vector<8x1xf32> to vector<8x128xf32>
    %469 = arith.mulf %459, %468 : vector<8x128xf32>
    %470 = vector.broadcast %451 : vector<1x128xf32> to vector<8x128xf32>
    %471 = arith.mulf %469, %470 : vector<8x128xf32>
    %472 = vector.broadcast %453 : vector<1x128xf32> to vector<8x128xf32>
    %473 = arith.addf %471, %472 : vector<8x128xf32>
    %474 = arith.truncf %473 : vector<8x128xf32> to vector<8x128xbf16>
    %c1_139 = arith.constant 1 : index
    %c0_140 = arith.constant 0 : index
    %c0_141 = arith.constant 0 : index
    %475 = vector.load %arg11[%c1_139, %c0_140, %c0_141] : memref<2x128x512xbf16, #tpu.memory_space<vmem>>, vector<1x128x512xbf16>
    %476 = vector.shape_cast %475 : vector<1x128x512xbf16> to vector<128x512xbf16>
    %cst_142 = arith.constant dense<0.000000e+00> : vector<8x512xf32>
    %477 = tpu.matmul %474, %476, %cst_142 {dimension_numbers = #tpu.dot_dimension_numbers<[1], [0], [0], [1], [0, 0, 1, 1], [], []>} : vector<8x128xbf16>, vector<128x512xbf16>, vector<8x512xf32> -> vector<8x512xf32>
    %c1_143 = arith.constant 1 : index
    %c0_144 = arith.constant 0 : index
    %c0_145 = arith.constant 0 : index
    %478 = vector.load %arg12[%c1_143, %c0_144, %c0_145] : memref<2x1x512xf32, #tpu.memory_space<vmem>>, vector<1x1x512xf32>
    %479 = vector.shape_cast %478 : vector<1x1x512xf32> to vector<1x512xf32>
    %480 = vector.broadcast %479 : vector<1x512xf32> to vector<8x512xf32>
    %481 = arith.addf %477, %480 : vector<8x512xf32>
    %cst_146 = arith.constant 0.000000e+00 : f32
    %482 = vector.broadcast %cst_146 : f32 to vector<8x512xf32>
    %483 = arith.maximumf %481, %482 : vector<8x512xf32>
    %484 = arith.truncf %483 : vector<8x512xf32> to vector<8x512xbf16>
    %c1_147 = arith.constant 1 : index
    %c0_148 = arith.constant 0 : index
    %c0_149 = arith.constant 0 : index
    %485 = vector.load %arg13[%c1_147, %c0_148, %c0_149] : memref<2x512x128xbf16, #tpu.memory_space<vmem>>, vector<1x512x128xbf16>
    %486 = vector.shape_cast %485 : vector<1x512x128xbf16> to vector<512x128xbf16>
    %cst_150 = arith.constant dense<0.000000e+00> : vector<8x128xf32>
    %487 = tpu.matmul %484, %486, %cst_150 {dimension_numbers = #tpu.dot_dimension_numbers<[1], [0], [0], [1], [0, 0, 1, 1], [], []>} : vector<8x512xbf16>, vector<512x128xbf16>, vector<8x128xf32> -> vector<8x128xf32>
    %c1_151 = arith.constant 1 : index
    %c0_152 = arith.constant 0 : index
    %c0_153 = arith.constant 0 : index
    %488 = vector.load %arg14[%c1_151, %c0_152, %c0_153] : memref<2x1x128xf32, #tpu.memory_space<vmem>>, vector<1x1x128xf32>
    %489 = vector.shape_cast %488 : vector<1x1x128xf32> to vector<1x128xf32>
    %490 = vector.broadcast %489 : vector<1x128xf32> to vector<8x128xf32>
    %491 = arith.addf %487, %490 : vector<8x128xf32>
    %492 = arith.addf %473, %491 : vector<8x128xf32>
    %c1_154 = arith.constant 1 : index
    %c2_155 = arith.constant 2 : index
    %c0_156 = arith.constant 0 : index
    %493 = vector.load %arg15[%c1_154, %c2_155, %c0_156] : memref<2x4x128xf32, #tpu.memory_space<vmem>>, vector<1x1x128xf32>
    %494 = vector.shape_cast %493 : vector<1x1x128xf32> to vector<1x128xf32>
    %c1_157 = arith.constant 1 : index
    %c3_158 = arith.constant 3 : index
    %c0_159 = arith.constant 0 : index
    %495 = vector.load %arg15[%c1_157, %c3_158, %c0_159] : memref<2x4x128xf32, #tpu.memory_space<vmem>>, vector<1x1x128xf32>
    %496 = vector.shape_cast %495 : vector<1x1x128xf32> to vector<1x128xf32>
    %cst_160 = arith.constant dense<0.000000e+00> : vector<8xf32>
    %497 = vector.multi_reduction <add>, %492, %cst_160 [1] : vector<8x128xf32> to vector<8xf32>
    %498 = vector.shape_cast %497 : vector<8xf32> to vector<8x1xf32>
    %cst_161 = arith.constant 1.280000e+02 : f32
    %499 = vector.broadcast %cst_161 : f32 to vector<8x1xf32>
    %500 = arith.divf %498, %499 : vector<8x1xf32>
    %501 = vector.broadcast %500 : vector<8x1xf32> to vector<8x128xf32>
    %502 = arith.subf %492, %501 : vector<8x128xf32>
    %503 = arith.mulf %502, %502 : vector<8x128xf32>
    %cst_162 = arith.constant dense<0.000000e+00> : vector<8xf32>
    %504 = vector.multi_reduction <add>, %503, %cst_162 [1] : vector<8x128xf32> to vector<8xf32>
    %505 = vector.shape_cast %504 : vector<8xf32> to vector<8x1xf32>
    %cst_163 = arith.constant 1.280000e+02 : f32
    %506 = vector.broadcast %cst_163 : f32 to vector<8x1xf32>
    %507 = arith.divf %505, %506 : vector<8x1xf32>
    %cst_164 = arith.constant 9.99999974E-6 : f32
    %508 = vector.broadcast %cst_164 : f32 to vector<8x1xf32>
    %509 = arith.addf %507, %508 : vector<8x1xf32>
    %510 = math.rsqrt %509 : vector<8x1xf32>
    %511 = vector.broadcast %510 : vector<8x1xf32> to vector<8x128xf32>
    %512 = arith.mulf %502, %511 : vector<8x128xf32>
    %513 = vector.broadcast %494 : vector<1x128xf32> to vector<8x128xf32>
    %514 = arith.mulf %512, %513 : vector<8x128xf32>
    %515 = vector.broadcast %496 : vector<1x128xf32> to vector<8x128xf32>
    %516 = arith.addf %514, %515 : vector<8x128xf32>
    %517 = arith.truncf %516 : vector<8x128xf32> to vector<8x128xbf16>
    %c0_165 = arith.constant 0 : index
    %c0_166 = arith.constant 0 : index
    %518 = vector.load %arg16[%c0_165, %c0_166] : memref<128x128xbf16, #tpu.memory_space<vmem>>, vector<128x128xbf16>
    %cst_167 = arith.constant dense<0.000000e+00> : vector<8x128xf32>
    %519 = tpu.matmul %517, %518, %cst_167 {dimension_numbers = #tpu.dot_dimension_numbers<[1], [0], [0], [1], [0, 0, 1, 1], [], []>} : vector<8x128xbf16>, vector<128x128xbf16>, vector<8x128xf32> -> vector<8x128xf32>
    %c0_168 = arith.constant 0 : index
    %c0_169 = arith.constant 0 : index
    %520 = vector.load %arg17[%c0_168, %c0_169] : memref<1x128xf32, #tpu.memory_space<vmem>>, vector<1x128xf32>
    %521 = vector.broadcast %520 : vector<1x128xf32> to vector<8x128xf32>
    %522 = arith.addf %519, %521 : vector<8x128xf32>
    %c0_170 = arith.constant 0 : index
    %c0_171 = arith.constant 0 : index
    %c0_172 = arith.constant 0 : index
    %523 = vector.load %arg18[%c0_170, %c0_171, %c0_172] : memref<1x8x128xf32, #tpu.memory_space<vmem>>, vector<1x8x128xf32>
    %524 = vector.shape_cast %523 : vector<1x8x128xf32> to vector<8x128xf32>
    %525 = vector.shape_cast %522 : vector<8x128xf32> to vector<1x8x128xf32>
    tpu.vector_store %arg18[%c0_170, %c0_171, %c0_172], %525 {strides = array<i32>} : memref<1x8x128xf32, #tpu.memory_space<vmem>>, vector<1x8x128xf32>,
    return
  }
  func.func @transform_0(%arg0: i32) -> (i32, i32, i32) {
    %c0_i32 = arith.constant 0 : i32
    %c0_i32_0 = arith.constant 0 : i32
    %c0_i32_1 = arith.constant 0 : i32
    return %arg0, %c0_i32, %c0_i32_0 : i32, i32, i32
  }
  func.func @transform_1(%arg0: i32) -> (i32, i32) {
    %c0_i32 = arith.constant 0 : i32
    %c0_i32_0 = arith.constant 0 : i32
    %c0_i32_1 = arith.constant 0 : i32
    return %c0_i32, %c0_i32_0 : i32, i32
  }
  func.func @transform_2(%arg0: i32) -> (i32, i32) {
    %c0_i32 = arith.constant 0 : i32
    %c0_i32_0 = arith.constant 0 : i32
    %c0_i32_1 = arith.constant 0 : i32
    return %c0_i32, %c0_i32_0 : i32, i32
  }
  func.func @transform_3(%arg0: i32) -> (i32, i32) {
    %c0_i32 = arith.constant 0 : i32
    %c0_i32_0 = arith.constant 0 : i32
    %c0_i32_1 = arith.constant 0 : i32
    return %c0_i32, %c0_i32_0 : i32, i32
  }
  func.func @transform_4(%arg0: i32) -> (i32, i32) {
    %c0_i32 = arith.constant 0 : i32
    %c0_i32_0 = arith.constant 0 : i32
    %c0_i32_1 = arith.constant 0 : i32
    return %c0_i32, %c0_i32_0 : i32, i32
  }
  func.func @transform_5(%arg0: i32) -> (i32, i32) {
    %c0_i32 = arith.constant 0 : i32
    %c0_i32_0 = arith.constant 0 : i32
    %c0_i32_1 = arith.constant 0 : i32
    return %c0_i32, %c0_i32_0 : i32, i32
  }
  func.func @transform_6(%arg0: i32) -> (i32, i32, i32) {
    %c0_i32 = arith.constant 0 : i32
    %c0_i32_0 = arith.constant 0 : i32
    %c0_i32_1 = arith.constant 0 : i32
    %c0_i32_2 = arith.constant 0 : i32
    return %c0_i32, %c0_i32_0, %c0_i32_1 : i32, i32, i32
  }
  func.func @transform_7(%arg0: i32) -> (i32, i32, i32) {
    %c0_i32 = arith.constant 0 : i32
    %c0_i32_0 = arith.constant 0 : i32
    %c0_i32_1 = arith.constant 0 : i32
    %c0_i32_2 = arith.constant 0 : i32
    return %c0_i32, %c0_i32_0, %c0_i32_1 : i32, i32, i32
  }
  func.func @transform_8(%arg0: i32) -> (i32, i32, i32) {
    %c0_i32 = arith.constant 0 : i32
    %c0_i32_0 = arith.constant 0 : i32
    %c0_i32_1 = arith.constant 0 : i32
    %c0_i32_2 = arith.constant 0 : i32
    return %c0_i32, %c0_i32_0, %c0_i32_1 : i32, i32, i32
  }
  func.func @transform_9(%arg0: i32) -> (i32, i32, i32) {
    %c0_i32 = arith.constant 0 : i32
    %c0_i32_0 = arith.constant 0 : i32
    %c0_i32_1 = arith.constant 0 : i32
    %c0_i32_2 = arith.constant 0 : i32
    return %c0_i32, %c0_i32_0, %c0_i32_1 : i32, i32, i32
  }
  func.func @transform_10(%arg0: i32) -> (i32, i32, i32) {
    %c0_i32 = arith.constant 0 : i32
    %c0_i32_0 = arith.constant 0 : i32
    %c0_i32_1 = arith.constant 0 : i32
    %c0_i32_2 = arith.constant 0 : i32
    return %c0_i32, %c0_i32_0, %c0_i32_1 : i32, i32, i32
  }
  func.func @transform_11(%arg0: i32) -> (i32, i32, i32) {
    %c0_i32 = arith.constant 0 : i32
    %c0_i32_0 = arith.constant 0 : i32
    %c0_i32_1 = arith.constant 0 : i32
    %c0_i32_2 = arith.constant 0 : i32
    return %c0_i32, %c0_i32_0, %c0_i32_1 : i32, i32, i32
  }
  func.func @transform_12(%arg0: i32) -> (i32, i32, i32) {
    %c0_i32 = arith.constant 0 : i32
    %c0_i32_0 = arith.constant 0 : i32
    %c0_i32_1 = arith.constant 0 : i32
    %c0_i32_2 = arith.constant 0 : i32
    return %c0_i32, %c0_i32_0, %c0_i32_1 : i32, i32, i32
  }
  func.func @transform_13(%arg0: i32) -> (i32, i32, i32) {
    %c0_i32 = arith.constant 0 : i32
    %c0_i32_0 = arith.constant 0 : i32
    %c0_i32_1 = arith.constant 0 : i32
    %c0_i32_2 = arith.constant 0 : i32
    return %c0_i32, %c0_i32_0, %c0_i32_1 : i32, i32, i32
  }
  func.func @transform_14(%arg0: i32) -> (i32, i32, i32) {
    %c0_i32 = arith.constant 0 : i32
    %c0_i32_0 = arith.constant 0 : i32
    %c0_i32_1 = arith.constant 0 : i32
    %c0_i32_2 = arith.constant 0 : i32
    return %c0_i32, %c0_i32_0, %c0_i32_1 : i32, i32, i32
  }
  func.func @transform_15(%arg0: i32) -> (i32, i32) {
    %c0_i32 = arith.constant 0 : i32
    %c0_i32_0 = arith.constant 0 : i32
    %c0_i32_1 = arith.constant 0 : i32
    return %c0_i32, %c0_i32_0 : i32, i32
  }
  func.func @transform_16(%arg0: i32) -> (i32, i32) {
    %c0_i32 = arith.constant 0 : i32
    %c0_i32_0 = arith.constant 0 : i32
    %c0_i32_1 = arith.constant 0 : i32
    return %c0_i32, %c0_i32_0 : i32, i32
  }
  func.func @transform_17(%arg0: i32) -> (i32, i32, i32) {
    %c0_i32 = arith.constant 0 : i32
    %c0_i32_0 = arith.constant 0 : i32
    %c0_i32_1 = arith.constant 0 : i32
    return %arg0, %c0_i32, %c0_i32_0 : i32, i32, i32
  }
}

</mosaic_0001>

<llo_original>
// kernel: forward.1
$region0: #{forward.1}
  #allocation0 [shape = 'u32[]', space=smem, size = 0x4, offset = 0x4, fixed_abs, tag = 'smem constant byte address 0x4 - core index']
  #allocation1 [shape = 'u32[72,128]{1,0:T(1,128)}', space=vmem, size = 0x9000, scoped, tag = 'internal scratch']
  %s0 = inlined_call_operand.vmem [shape: bf16[2,64,256], index: 0, kind: input, shape index: {}]
  %s1 = inlined_call_operand.vmem [shape: bf16[256,128], index: 1, kind: input, shape index: {}]
  %s2 = inlined_call_operand.vmem [shape: f32[2,128], index: 2, kind: input, shape index: {}]
  %s3 = inlined_call_operand.vmem [shape: bf16[1152,128], index: 3, kind: input, shape index: {}]
  %s4 = inlined_call_operand.vmem [shape: f32[2,128], index: 4, kind: input, shape index: {}]
  %s5 = inlined_call_operand.vmem [shape: f32[8,128], index: 5, kind: input, shape index: {}]
  %s6 = inlined_call_operand.vmem [shape: bf16[2,128,384], index: 6, kind: input, shape index: {}]
  %s7 = inlined_call_operand.vmem [shape: f32[2,1,384], index: 7, kind: input, shape index: {}]
  %s8 = inlined_call_operand.vmem [shape: bf16[2,128,128], index: 8, kind: input, shape index: {}]
  %s9 = inlined_call_operand.vmem [shape: f32[2,1,128], index: 9, kind: input, shape index: {}]
  %s10 = inlined_call_operand.vmem [shape: bf16[2,128,512], index: 10, kind: input, shape index: {}]
  %s11 = inlined_call_operand.vmem [shape: f32[2,1,512], index: 11, kind: input, shape index: {}]
  %s12 = inlined_call_operand.vmem [shape: bf16[2,512,128], index: 12, kind: input, shape index: {}]
  %s13 = inlined_call_operand.vmem [shape: f32[2,1,128], index: 13, kind: input, shape index: {}]
  %s14 = inlined_call_operand.vmem [shape: f32[2,4,128], index: 14, kind: input, shape index: {}]
  %s15 = inlined_call_operand.vmem [shape: bf16[128,128], index: 15, kind: input, shape index: {}]
  %s16 = inlined_call_operand.vmem [shape: f32[1,128], index: 16, kind: input, shape index: {}]
  %s17 = inlined_call_operand.vmem [shape: f32[2,8,128], index: 17, kind: output, shape index: {}]
  %s18 = sld [smem:[#allocation0]]
  $region101: #{forward.1} parent=0
    _
  %s20 = ssub.s32 1, %s18
  %s21 = scalar_select 0, %s20, %s18
  loop: start=0, step=1, limit=4
  $region2: #{forward.1} parent=0 // loop_pre_header
    _
  $region3: #{forward.1} parent=0 // loop_header
    %s23 = sphi 0, %s27
    %p24 = scmp.ge.s32.totalorder %s23, 4
    %s33 = sphi 0, %s35
    %s36 = sphi 0, %s33
    %s37 = sphi 0, %s36
    %s53 = sphi 0, %s37
    %s57 = sphi 0, %s57
    %s59 = sphi 0, %s57
    %s60 = sphi 0, %s59
    %s74 = sphi 0, %s60
    %s78 = sphi 0, %s78
    %s80 = sphi 0, %s78
    %s81 = sphi 0, %s80
    %s95 = sphi 0, %s81
    %s99 = sphi 0, %s99
    %s101 = sphi 0, %s99
    %s102 = sphi 0, %s101
    %s116 = sphi 0, %s102
    %s120 = sphi 0, %s120
    %s122 = sphi 0, %s120
    %s123 = sphi 0, %s122
    %s137 = sphi 0, %s123
    %s141 = sphi 0, %s141
    %s143 = sphi 0, %s141
    %s144 = sphi 0, %s143
    %s158 = sphi 0, %s144
    %s162 = sphi 0, %s162
    %s164 = sphi 0, %s162
    %s165 = sphi 0, %s164
    %s179 = sphi 0, %s165
    %s183 = sphi 0, %s183
    %s185 = sphi 0, %s183
    %s186 = sphi 0, %s185
    %s200 = sphi 0, %s186
    %s204 = sphi 0, %s204
    %s206 = sphi 0, %s204
    %s207 = sphi 0, %s206
    %s221 = sphi 0, %s207
    %s225 = sphi 0, %s225
    %s227 = sphi 0, %s225
    %s228 = sphi 0, %s227
    %s242 = sphi 0, %s228
    %s246 = sphi 0, %s246
    %s248 = sphi 0, %s246
    %s249 = sphi 0, %s248
    %s263 = sphi 0, %s249
    %s267 = sphi 0, %s267
    %s269 = sphi 0, %s267
    %s270 = sphi 0, %s269
    %s284 = sphi 0, %s270
    %s288 = sphi 0, %s288
    %s290 = sphi 0, %s288
    %s291 = sphi 0, %s290
    %s305 = sphi 0, %s291
    %s309 = sphi 0, %s309
    %s311 = sphi 0, %s309
    %s312 = sphi 0, %s311
    %s326 = sphi 0, %s312
    %s330 = sphi 0, %s330
    %s332 = sphi 0, %s330
    %s333 = sphi 0, %s332
    %s347 = sphi 0, %s333
    %s351 = sphi 0, %s351
    %s353 = sphi 0, %s351
    %s354 = sphi 0, %s353
    %s368 = sphi 0, %s354
    %s372 = sphi 0, %s372
    %s374 = sphi 0, %s372
    %s375 = sphi 0, %s374
    %s389 = sphi 0, %s375
    %s395 = sphi 0, %s397
    %s398 = sphi 0, %s395
    %s399 = sphi 0, %s398
    %s415 = sphi 0, %s399
  $region4: #{forward.1} parent=0 // loop_header_branch
    %26 = sbr.rel (%p24) target = $region8
  $region5: #{forward.1} parent=0 // loop_body
    %s28 = ssub.s32 %s23, 1
    %s29 = ssub.s32 %s23, 2
    %s30 = sadd.s32 %s23, 1
    %s31 = ssub.s32 %s23, %s30
    %p32 = scmp.eq.s32.totalorder %s31, 0
    %s34 = sadd.s32 %s33, 1
    %s35 = scalar_select %p32, %s33, %s34
    %p38 = pneg %p32
    %p39 = scmp.eq.s32.totalorder %s23, 1
    %p40 = por %p38, %p39
    %p41 = scmp.ne.s32.totalorder %s33, %s36
    %p42 = scmp.eq.s32.totalorder %s23, 0
    %p43 = por %p41, %p42
    %p44 = scmp.ne.s32.totalorder %s33, %s36
    %p45 = scmp.eq.s32.totalorder %s28, 1
    %p46 = por %p44, %p45
    %p47 = scmp.ne.s32.totalorder %s36, %s37
    %p48 = scmp.eq.s32.totalorder %s28, 0
    %p49 = por %p47, %p48
    %p50 = scmp.ne.s32.totalorder %s36, %s37
    %p51 = scmp.eq.s32.totalorder %s29, 1
    %p52 = por %p50, %p51
    %p54 = scmp.ne.s32.totalorder %s37, %s53
    %p55 = scmp.eq.s32.totalorder %s29, 0
    %p56 = por %p54, %p55
    %s58 = sadd.s32 %s57, 1
    %p61 = scmp.eq.s32.totalorder %s23, 1
    %p62 = scmp.ne.s32.totalorder %s57, %s59
    %p63 = scmp.eq.s32.totalorder %s23, 0
    %p64 = por %p62, %p63
    %p65 = scmp.ne.s32.totalorder %s57, %s59
    %p66 = scmp.eq.s32.totalorder %s28, 1
    %p67 = por %p65, %p66
    %p68 = scmp.ne.s32.totalorder %s59, %s60
    %p69 = scmp.eq.s32.totalorder %s28, 0
    %p70 = por %p68, %p69
    %p71 = scmp.ne.s32.totalorder %s59, %s60
    %p72 = scmp.eq.s32.totalorder %s29, 1
    %p73 = por %p71, %p72
    %p75 = scmp.ne.s32.totalorder %s60, %s74
    %p76 = scmp.eq.s32.totalorder %s29, 0
    %p77 = por %p75, %p76
    %s79 = sadd.s32 %s78, 1
    %p82 = scmp.eq.s32.totalorder %s23, 1
    %p83 = scmp.ne.s32.totalorder %s78, %s80
    %p84 = scmp.eq.s32.totalorder %s23, 0
    %p85 = por %p83, %p84
    %p86 = scmp.ne.s32.totalorder %s78, %s80
    %p87 = scmp.eq.s32.totalorder %s28, 1
    %p88 = por %p86, %p87
    %p89 = scmp.ne.s32.totalorder %s80, %s81
    %p90 = scmp.eq.s32.totalorder %s28, 0
    %p91 = por %p89, %p90
    %p92 = scmp.ne.s32.totalorder %s80, %s81
    %p93 = scmp.eq.s32.totalorder %s29, 1
    %p94 = por %p92, %p93
    %p96 = scmp.ne.s32.totalorder %s81, %s95
    %p97 = scmp.eq.s32.totalorder %s29, 0
    %p98 = por %p96, %p97
    %s100 = sadd.s32 %s99, 1
    %p103 = scmp.eq.s32.totalorder %s23, 1
    %p104 = scmp.ne.s32.totalorder %s99, %s101
    %p105 = scmp.eq.s32.totalorder %s23, 0
    %p106 = por %p104, %p105
    %p107 = scmp.ne.s32.totalorder %s99, %s101
    %p108 = scmp.eq.s32.totalorder %s28, 1
    %p109 = por %p107, %p108
    %p110 = scmp.ne.s32.totalorder %s101, %s102
    %p111 = scmp.eq.s32.totalorder %s28, 0
    %p112 = por %p110, %p111
    %p113 = scmp.ne.s32.totalorder %s101, %s102
    %p114 = scmp.eq.s32.totalorder %s29, 1
    %p115 = por %p113, %p114
    %p117 = scmp.ne.s32.totalorder %s102, %s116
    %p118 = scmp.eq.s32.totalorder %s29, 0
    %p119 = por %p117, %p118
    %s121 = sadd.s32 %s120, 1
    %p124 = scmp.eq.s32.totalorder %s23, 1
    %p125 = scmp.ne.s32.totalorder %s120, %s122
    %p126 = scmp.eq.s32.totalorder %s23, 0
    %p127 = por %p125, %p126
    %p128 = scmp.ne.s32.totalorder %s120, %s122
    %p129 = scmp.eq.s32.totalorder %s28, 1
    %p130 = por %p128, %p129
    %p131 = scmp.ne.s32.totalorder %s122, %s123
    %p132 = scmp.eq.s32.totalorder %s28, 0
    %p133 = por %p131, %p132
    %p134 = scmp.ne.s32.totalorder %s122, %s123
    %p135 = scmp.eq.s32.totalorder %s29, 1
    %p136 = por %p134, %p135
    %p138 = scmp.ne.s32.totalorder %s123, %s137
    %p139 = scmp.eq.s32.totalorder %s29, 0
    %p140 = por %p138, %p139
    %s142 = sadd.s32 %s141, 1
    %p145 = scmp.eq.s32.totalorder %s23, 1
    %p146 = scmp.ne.s32.totalorder %s141, %s143
    %p147 = scmp.eq.s32.totalorder %s23, 0
    %p148 = por %p146, %p147
    %p149 = scmp.ne.s32.totalorder %s141, %s143
    %p150 = scmp.eq.s32.totalorder %s28, 1
    %p151 = por %p149, %p150
    %p152 = scmp.ne.s32.totalorder %s143, %s144
    %p153 = scmp.eq.s32.totalorder %s28, 0
    %p154 = por %p152, %p153
    %p155 = scmp.ne.s32.totalorder %s143, %s144
    %p156 = scmp.eq.s32.totalorder %s29, 1
    %p157 = por %p155, %p156
    %p159 = scmp.ne.s32.totalorder %s144, %s158
    %p160 = scmp.eq.s32.totalorder %s29, 0
    %p161 = por %p159, %p160
    %s163 = sadd.s32 %s162, 1
    %p166 = scmp.eq.s32.totalorder %s23, 1
    %p167 = scmp.ne.s32.totalorder %s162, %s164
    %p168 = scmp.eq.s32.totalorder %s23, 0
    %p169 = por %p167, %p168
    %p170 = scmp.ne.s32.totalorder %s162, %s164
    %p171 = scmp.eq.s32.totalorder %s28, 1
    %p172 = por %p170, %p171
    %p173 = scmp.ne.s32.totalorder %s164, %s165
    %p174 = scmp.eq.s32.totalorder %s28, 0
    %p175 = por %p173, %p174
    %p176 = scmp.ne.s32.totalorder %s164, %s165
    %p177 = scmp.eq.s32.totalorder %s29, 1
    %p178 = por %p176, %p177
    %p180 = scmp.ne.s32.totalorder %s165, %s179
    %p181 = scmp.eq.s32.totalorder %s29, 0
    %p182 = por %p180, %p181
    %s184 = sadd.s32 %s183, 1
    %p187 = scmp.eq.s32.totalorder %s23, 1
    %p188 = scmp.ne.s32.totalorder %s183, %s185
    %p189 = scmp.eq.s32.totalorder %s23, 0
    %p190 = por %p188, %p189
    %p191 = scmp.ne.s32.totalorder %s183, %s185
    %p192 = scmp.eq.s32.totalorder %s28, 1
    %p193 = por %p191, %p192
    %p194 = scmp.ne.s32.totalorder %s185, %s186
    %p195 = scmp.eq.s32.totalorder %s28, 0
    %p196 = por %p194, %p195
    %p197 = scmp.ne.s32.totalorder %s185, %s186
    %p198 = scmp.eq.s32.totalorder %s29, 1
    %p199 = por %p197, %p198
    %p201 = scmp.ne.s32.totalorder %s186, %s200
    %p202 = scmp.eq.s32.totalorder %s29, 0
    %p203 = por %p201, %p202
    %s205 = sadd.s32 %s204, 1
    %p208 = scmp.eq.s32.totalorder %s23, 1
    %p209 = scmp.ne.s32.totalorder %s204, %s206
    %p210 = scmp.eq.s32.totalorder %s23, 0
    %p211 = por %p209, %p210
    %p212 = scmp.ne.s32.totalorder %s204, %s206
    %p213 = scmp.eq.s32.totalorder %s28, 1
    %p214 = por %p212, %p213
    %p215 = scmp.ne.s32.totalorder %s206, %s207
    %p216 = scmp.eq.s32.totalorder %s28, 0
    %p217 = por %p215, %p216
    %p218 = scmp.ne.s32.totalorder %s206, %s207
    %p219 = scmp.eq.s32.totalorder %s29, 1
    %p220 = por %p218, %p219
    %p222 = scmp.ne.s32.totalorder %s207, %s221
    %p223 = scmp.eq.s32.totalorder %s29, 0
    %p224 = por %p222, %p223
    %s226 = sadd.s32 %s225, 1
    %p229 = scmp.eq.s32.totalorder %s23, 1
    %p230 = scmp.ne.s32.totalorder %s225, %s227
    %p231 = scmp.eq.s32.totalorder %s23, 0
    %p232 = por %p230, %p231
    %p233 = scmp.ne.s32.totalorder %s225, %s227
    %p234 = scmp.eq.s32.totalorder %s28, 1
    %p235 = por %p233, %p234
    %p236 = scmp.ne.s32.totalorder %s227, %s228
    %p237 = scmp.eq.s32.totalorder %s28, 0
    %p238 = por %p236, %p237
    %p239 = scmp.ne.s32.totalorder %s227, %s228
    %p240 = scmp.eq.s32.totalorder %s29, 1
    %p241 = por %p239, %p240
    %p243 = scmp.ne.s32.totalorder %s228, %s242
    %p244 = scmp.eq.s32.totalorder %s29, 0
    %p245 = por %p243, %p244
    %s247 = sadd.s32 %s246, 1
    %p250 = scmp.eq.s32.totalorder %s23, 1
    %p251 = scmp.ne.s32.totalorder %s246, %s248
    %p252 = scmp.eq.s32.totalorder %s23, 0
    %p253 = por %p251, %p252
    %p254 = scmp.ne.s32.totalorder %s246, %s248
    %p255 = scmp.eq.s32.totalorder %s28, 1
    %p256 = por %p254, %p255
    %p257 = scmp.ne.s32.totalorder %s248, %s249
    %p258 = scmp.eq.s32.totalorder %s28, 0
    %p259 = por %p257, %p258
    %p260 = scmp.ne.s32.totalorder %s248, %s249
    %p261 = scmp.eq.s32.totalorder %s29, 1
    %p262 = por %p260, %p261
    %p264 = scmp.ne.s32.totalorder %s249, %s263
    %p265 = scmp.eq.s32.totalorder %s29, 0
    %p266 = por %p264, %p265
    %s268 = sadd.s32 %s267, 1
    %p271 = scmp.eq.s32.totalorder %s23, 1
    %p272 = scmp.ne.s32.totalorder %s267, %s269
    %p273 = scmp.eq.s32.totalorder %s23, 0
    %p274 = por %p272, %p273
    %p275 = scmp.ne.s32.totalorder %s267, %s269
    %p276 = scmp.eq.s32.totalorder %s28, 1
    %p277 = por %p275, %p276
    %p278 = scmp.ne.s32.totalorder %s269, %s270
    %p279 = scmp.eq.s32.totalorder %s28, 0
    %p280 = por %p278, %p279
    %p281 = scmp.ne.s32.totalorder %s269, %s270
    %p282 = scmp.eq.s32.totalorder %s29, 1
    %p283 = por %p281, %p282
    %p285 = scmp.ne.s32.totalorder %s270, %s284
    %p286 = scmp.eq.s32.totalorder %s29, 0
    %p287 = por %p285, %p286
    %s289 = sadd.s32 %s288, 1
    %p292 = scmp.eq.s32.totalorder %s23, 1
    %p293 = scmp.ne.s32.totalorder %s288, %s290
    %p294 = scmp.eq.s32.totalorder %s23, 0
    %p295 = por %p293, %p294
    %p296 = scmp.ne.s32.totalorder %s288, %s290
    %p297 = scmp.eq.s32.totalorder %s28, 1
    %p298 = por %p296, %p297
    %p299 = scmp.ne.s32.totalorder %s290, %s291
    %p300 = scmp.eq.s32.totalorder %s28, 0
    %p301 = por %p299, %p300
    %p302 = scmp.ne.s32.totalorder %s290, %s291
    %p303 = scmp.eq.s32.totalorder %s29, 1
    %p304 = por %p302, %p303
    %p306 = scmp.ne.s32.totalorder %s291, %s305
    %p307 = scmp.eq.s32.totalorder %s29, 0
    %p308 = por %p306, %p307
    %s310 = sadd.s32 %s309, 1
    %p313 = scmp.eq.s32.totalorder %s23, 1
    %p314 = scmp.ne.s32.totalorder %s309, %s311
    %p315 = scmp.eq.s32.totalorder %s23, 0
    %p316 = por %p314, %p315
    %p317 = scmp.ne.s32.totalorder %s309, %s311
    %p318 = scmp.eq.s32.totalorder %s28, 1
    %p319 = por %p317, %p318
    %p320 = scmp.ne.s32.totalorder %s311, %s312
    %p321 = scmp.eq.s32.totalorder %s28, 0
    %p322 = por %p320, %p321
    %p323 = scmp.ne.s32.totalorder %s311, %s312
    %p324 = scmp.eq.s32.totalorder %s29, 1
    %p325 = por %p323, %p324
    %p327 = scmp.ne.s32.totalorder %s312, %s326
    %p328 = scmp.eq.s32.totalorder %s29, 0
    %p329 = por %p327, %p328
    %s331 = sadd.s32 %s330, 1
    %p334 = scmp.eq.s32.totalorder %s23, 1
    %p335 = scmp.ne.s32.totalorder %s330, %s332
    %p336 = scmp.eq.s32.totalorder %s23, 0
    %p337 = por %p335, %p336
    %p338 = scmp.ne.s32.totalorder %s330, %s332
    %p339 = scmp.eq.s32.totalorder %s28, 1
    %p340 = por %p338, %p339
    %p341 = scmp.ne.s32.totalorder %s332, %s333
    %p342 = scmp.eq.s32.totalorder %s28, 0
    %p343 = por %p341, %p342
    %p344 = scmp.ne.s32.totalorder %s332, %s333
    %p345 = scmp.eq.s32.totalorder %s29, 1
    %p346 = por %p344, %p345
    %p348 = scmp.ne.s32.totalorder %s333, %s347
    %p349 = scmp.eq.s32.totalorder %s29, 0
    %p350 = por %p348, %p349
    %s352 = sadd.s32 %s351, 1
    %p355 = scmp.eq.s32.totalorder %s23, 1
    %p356 = scmp.ne.s32.totalorder %s351, %s353
    %p357 = scmp.eq.s32.totalorder %s23, 0
    %p358 = por %p356, %p357
    %p359 = scmp.ne.s32.totalorder %s351, %s353
    %p360 = scmp.eq.s32.totalorder %s28, 1
    %p361 = por %p359, %p360
    %p362 = scmp.ne.s32.totalorder %s353, %s354
    %p363 = scmp.eq.s32.totalorder %s28, 0
    %p364 = por %p362, %p363
    %p365 = scmp.ne.s32.totalorder %s353, %s354
    %p366 = scmp.eq.s32.totalorder %s29, 1
    %p367 = por %p365, %p366
    %p369 = scmp.ne.s32.totalorder %s354, %s368
    %p370 = scmp.eq.s32.totalorder %s29, 0
    %p371 = por %p369, %p370
    %s373 = sadd.s32 %s372, 1
    %p376 = scmp.eq.s32.totalorder %s23, 1
    %p377 = scmp.ne.s32.totalorder %s372, %s374
    %p378 = scmp.eq.s32.totalorder %s23, 0
    %p379 = por %p377, %p378
    %p380 = scmp.ne.s32.totalorder %s372, %s374
    %p381 = scmp.eq.s32.totalorder %s28, 1
    %p382 = por %p380, %p381
    %p383 = scmp.ne.s32.totalorder %s374, %s375
    %p384 = scmp.eq.s32.totalorder %s28, 0
    %p385 = por %p383, %p384
    %p386 = scmp.ne.s32.totalorder %s374, %s375
    %p387 = scmp.eq.s32.totalorder %s29, 1
    %p388 = por %p386, %p387
    %p390 = scmp.ne.s32.totalorder %s375, %s389
    %p391 = scmp.eq.s32.totalorder %s29, 0
    %p392 = por %p390, %p391
    %s393 = ssub.s32 %s23, %s30
    %p394 = scmp.eq.s32.totalorder %s393, 0
    %s396 = sadd.s32 %s395, 1
    %s397 = scalar_select %p394, %s395, %s396
    %p400 = pneg %p394
    %p401 = scmp.eq.s32.totalorder %s23, 1
    %p402 = por %p400, %p401
    %p403 = scmp.ne.s32.totalorder %s395, %s398
    %p404 = scmp.eq.s32.totalorder %s23, 0
    %p405 = por %p403, %p404
    %p406 = scmp.ne.s32.totalorder %s395, %s398
    %p407 = scmp.eq.s32.totalorder %s28, 1
    %p408 = por %p406, %p407
    %p409 = scmp.ne.s32.totalorder %s398, %s399
    %p410 = scmp.eq.s32.totalorder %s28, 0
    %p411 = por %p409, %p410
    %p412 = scmp.ne.s32.totalorder %s398, %s399
    %p413 = scmp.eq.s32.totalorder %s29, 1
    %p414 = por %p412, %p413
    %p416 = scmp.ne.s32.totalorder %s399, %s415
    %p417 = scmp.eq.s32.totalorder %s29, 0
    %p418 = por %p416, %p417
    %p419 = scmp.le.s32.totalorder 1, %s23
    %p420 = scmp.lt.s32.totalorder %s23, 3
    %p421 = pnand %p419, %p420
    %p422 = pneg %p421
    // Predicated region
    $region9: #{forward.1} parent=5 // pred_check
      _
    $region10: #{forward.1} parent=5 // pred_check_branch
      %424 = sbr.rel (%p421) target = $region12
    $region11: #{forward.1} parent=5 // pred_region
      %s425 = ssub.s32 %s23, 1
      // Predicated region
      $region13: #{forward.1} parent=11 // pred_check
        %p426 = pneg %p70
      $region14: #{forward.1} parent=11 // pred_check_branch
        %428 = sbr.rel (%p426) target = $region16
      $region15: #{forward.1} parent=11 // pred_region
        _
      $region16: #{forward.1} parent=11 // pred_fallthru
        _
      // Predicated region
      $region17: #{forward.1} parent=11 // pred_check
        %p429 = pneg %p91
      $region18: #{forward.1} parent=11 // pred_check_branch
        %431 = sbr.rel (%p429) target = $region20
      $region19: #{forward.1} parent=11 // pred_region
        _
      $region20: #{forward.1} parent=11 // pred_fallthru
        _
      // Predicated region
      $region21: #{forward.1} parent=11 // pred_check
        %p432 = pneg %p112
      $region22: #{forward.1} parent=11 // pred_check_branch
        %434 = sbr.rel (%p432) target = $region24
      $region23: #{forward.1} parent=11 // pred_region
        _
      $region24: #{forward.1} parent=11 // pred_fallthru
        _
      // Predicated region
      $region25: #{forward.1} parent=11 // pred_check
        %p435 = pneg %p133
      $region26: #{forward.1} parent=11 // pred_check_branch
        %437 = sbr.rel (%p435) target = $region28
      $region27: #{forward.1} parent=11 // pred_region
        _
      $region28: #{forward.1} parent=11 // pred_fallthru
        _
      // Predicated region
      $region29: #{forward.1} parent=11 // pred_check
        %p438 = pneg %p154
      $region30: #{forward.1} parent=11 // pred_check_branch
        %440 = sbr.rel (%p438) target = $region32
      $region31: #{forward.1} parent=11 // pred_region
        _
      $region32: #{forward.1} parent=11 // pred_fallthru
        _
      // Predicated region
      $region33: #{forward.1} parent=11 // pred_check
        %p441 = pneg %p175
      $region34: #{forward.1} parent=11 // pred_check_branch
        %443 = sbr.rel (%p441) target = $region36
      $region35: #{forward.1} parent=11 // pred_region
        _
      $region36: #{forward.1} parent=11 // pred_fallthru
        _
      // Predicated region
      $region37: #{forward.1} parent=11 // pred_check
        %p444 = pneg %p196
      $region38: #{forward.1} parent=11 // pred_check_branch
        %446 = sbr.rel (%p444) target = $region40
      $region39: #{forward.1} parent=11 // pred_region
        _
      $region40: #{forward.1} parent=11 // pred_fallthru
        _
      // Predicated region
      $region41: #{forward.1} parent=11 // pred_check
        %p447 = pneg %p217
      $region42: #{forward.1} parent=11 // pred_check_branch
        %449 = sbr.rel (%p447) target = $region44
      $region43: #{forward.1} parent=11 // pred_region
        _
      $region44: #{forward.1} parent=11 // pred_fallthru
        _
      // Predicated region
      $region45: #{forward.1} parent=11 // pred_check
        %p450 = pneg %p238
      $region46: #{forward.1} parent=11 // pred_check_branch
        %452 = sbr.rel (%p450) target = $region48
      $region47: #{forward.1} parent=11 // pred_region
        _
      $region48: #{forward.1} parent=11 // pred_fallthru
        _
      // Predicated region
      $region49: #{forward.1} parent=11 // pred_check
        %p453 = pneg %p259
      $region50: #{forward.1} parent=11 // pred_check_branch
        %455 = sbr.rel (%p453) target = $region52
      $region51: #{forward.1} parent=11 // pred_region
        _
      $region52: #{forward.1} parent=11 // pred_fallthru
        _
      // Predicated region
      $region53: #{forward.1} parent=11 // pred_check
        %p456 = pneg %p280
      $region54: #{forward.1} parent=11 // pred_check_branch
        %458 = sbr.rel (%p456) target = $region56
      $region55: #{forward.1} parent=11 // pred_region
        _
      $region56: #{forward.1} parent=11 // pred_fallthru
        _
      // Predicated region
      $region57: #{forward.1} parent=11 // pred_check
        %p459 = pneg %p301
      $region58: #{forward.1} parent=11 // pred_check_branch
        %461 = sbr.rel (%p459) target = $region60
      $region59: #{forward.1} parent=11 // pred_region
        _
      $region60: #{forward.1} parent=11 // pred_fallthru
        _
      // Predicated region
      $region61: #{forward.1} parent=11 // pred_check
        %p462 = pneg %p322
      $region62: #{forward.1} parent=11 // pred_check_branch
        %464 = sbr.rel (%p462) target = $region64
      $region63: #{forward.1} parent=11 // pred_region
        _
      $region64: #{forward.1} parent=11 // pred_fallthru
        _
      // Predicated region
      $region65: #{forward.1} parent=11 // pred_check
        %p465 = pneg %p343
      $region66: #{forward.1} parent=11 // pred_check_branch
        %467 = sbr.rel (%p465) target = $region68
      $region67: #{forward.1} parent=11 // pred_region
        _
      $region68: #{forward.1} parent=11 // pred_fallthru
        _
      // Predicated region
      $region69: #{forward.1} parent=11 // pred_check
        %p468 = pneg %p364
      $region70: #{forward.1} parent=11 // pred_check_branch
        %470 = sbr.rel (%p468) target = $region72
      $region71: #{forward.1} parent=11 // pred_region
        _
      $region72: #{forward.1} parent=11 // pred_fallthru
        _
      // Predicated region
      $region73: #{forward.1} parent=11 // pred_check
        %p471 = pneg %p385
      $region74: #{forward.1} parent=11 // pred_check_branch
        %473 = sbr.rel (%p471) target = $region76
      $region75: #{forward.1} parent=11 // pred_region
        _
      $region76: #{forward.1} parent=11 // pred_fallthru
        _
    $region12: #{forward.1} parent=5 // pred_fallthru
      _
    %p474 = scmp.lt.s32.totalorder %s23, 2
    // Predicated region
    $region77: #{forward.1} parent=5 // pred_check
      %p475 = pneg %p474
    $region78: #{forward.1} parent=5 // pred_check_branch
      %477 = sbr.rel (%p475) target = $region80
    $region79: #{forward.1} parent=5 // pred_region
      // Predicated region
      $region81: #{forward.1} parent=79 // pred_check
        %p478 = pneg %p43
      $region82: #{forward.1} parent=79 // pred_check_branch
        %480 = sbr.rel (%p478) target = $region84
      $region83: #{forward.1} parent=79 // pred_region
        %p481 = scmp.lt.s32.totalorder %s23, 1
        %s482 = scalar_select %p481, %s23, 1
        %s483 = smul.addr %s482, 16
        %s484 = smul.addr %s483, 4
        %s485 = scalar_lea.vmem %s0, %s484
      $region84: #{forward.1} parent=79 // pred_fallthru
        _
    $region80: #{forward.1} parent=5 // pred_fallthru
      _
    %p486 = scmp.le.s32.totalorder 1, %s23
    %p487 = scmp.lt.s32.totalorder %s23, 3
    %p488 = pnand %p486, %p487
    %p489 = pneg %p488
    // Predicated region
    $region85: #{forward.1} parent=5 // pred_check
      _
    $region86: #{forward.1} parent=5 // pred_check_branch
      %491 = sbr.rel (%p488) target = $region88
    $region87: #{forward.1} parent=5 // pred_region
      %s492 = ssub.s32 %s23, 1
      %p493 = scmp.lt.s32.totalorder %s28, 1
      %s494 = scalar_select %p493, %s28, 1
      %s495 = smul.addr %s494, 16
      %s496 = smul.addr %s495, 4
      %s497 = scalar_lea.vmem %s0, %s496
      %p498 = pneg %p49
      %p499 = pneg %p46
      %p500 = pneg %p70
      %p501 = pneg %p67
      %p502 = pneg %p91
      %p503 = pneg %p88
      %p504 = pneg %p112
      %p505 = pneg %p109
      %p506 = pneg %p133
      %p507 = pneg %p130
      %p508 = pneg %p154
      %p509 = pneg %p151
      %p510 = pneg %p175
      %p511 = pneg %p172
      %p512 = pneg %p196
      %p513 = pneg %p193
      %p514 = pneg %p217
      %p515 = pneg %p214
      %p516 = pneg %p238
      %p517 = pneg %p235
      %p518 = pneg %p259
      %p519 = pneg %p256
      %p520 = pneg %p280
      %p521 = pneg %p277
      %p522 = pneg %p301
      %p523 = pneg %p298
      %p524 = pneg %p322
      %p525 = pneg %p319
      %p526 = pneg %p343
      %p527 = pneg %p340
      %p528 = pneg %p364
      %p529 = pneg %p361
      %p530 = pneg %p385
      %p531 = pneg %p382
      %p532 = pneg %p411
      %p533 = pneg %p408
      %p534 = scmp.lt.s32.totalorder %s28, 1
      %s535 = scalar_select %p534, %s28, 1
      %s536 = smul.addr %s535, 8
      %s537 = scalar_lea.vmem %s17, %s536
      %p538 = scmp.lt.s32.totalorder %s28, 1
      %s539 = scalar_select %p538, %s28, 1
      %s540 = smul.addr %s539, 16
      %s541 = smul.addr %s540, 4
      %s542 = scalar_lea.vmem %s0, %s541
      %p543 = scmp.lt.s32.totalorder %s28, 1
      %s544 = scalar_select %p543, %s28, 1
      %s545 = smul.addr %s544, 8
      %s546 = scalar_lea.vmem %s17, %s545
      %v548 = vld [vmem:[%s542] sm:$0xff]
      %v549 = vld [vmem:[%s542 + $0x8] sm:$0xff]
      %v550 = vld [vmem:[%s542 + $0x10] sm:$0xff]
      %v551 = vld [vmem:[%s542 + $0x18] sm:$0xff]
      %v552 = vld [vmem:[%s542 + $0x20] sm:$0xff]
      %v553 = vld [vmem:[%s542 + $0x28] sm:$0xff]
      %v554 = vld [vmem:[%s542 + $0x30] sm:$0xff]
      %v555 = vld [vmem:[%s542 + $0x38] sm:$0xff]
      %v556 = vld [vmem:[%s1] sm:$0xf]
      %v557 = vld [vmem:[%s1 + $0x4] sm:$0xf]
      %v558 = vld [vmem:[%s1 + $0x8] sm:$0xf]
      %v559 = vld [vmem:[%s1 + $0xc] sm:$0xf]
      %v560 = vld [vmem:[%s1 + $0x10] sm:$0xf]
      %v561 = vld [vmem:[%s1 + $0x14] sm:$0xf]
      %v562 = vld [vmem:[%s1 + $0x18] sm:$0xf]
      %v563 = vld [vmem:[%s1 + $0x1c] sm:$0xf]
      %v564 = vld [vmem:[%s1 + $0x20] sm:$0xf]
      %v565 = vld [vmem:[%s1 + $0x24] sm:$0xf]
      %v566 = vld [vmem:[%s1 + $0x28] sm:$0xf]
      %v567 = vld [vmem:[%s1 + $0x2c] sm:$0xf]
      %v568 = vld [vmem:[%s1 + $0x30] sm:$0xf]
      %v569 = vld [vmem:[%s1 + $0x34] sm:$0xf]
      %v570 = vld [vmem:[%s1 + $0x38] sm:$0xf]
      %v571 = vld [vmem:[%s1 + $0x3c] sm:$0xf]
      %v572 = vld [vmem:[%s1 + $0x40] sm:$0xf]
      %v573 = vld [vmem:[%s1 + $0x44] sm:$0xf]
      %v574 = vld [vmem:[%s1 + $0x48] sm:$0xf]
      %v575 = vld [vmem:[%s1 + $0x4c] sm:$0xf]
      %v576 = vld [vmem:[%s1 + $0x50] sm:$0xf]
      %v577 = vld [vmem:[%s1 + $0x54] sm:$0xf]
      %v578 = vld [vmem:[%s1 + $0x58] sm:$0xf]
      %v579 = vld [vmem:[%s1 + $0x5c] sm:$0xf]
      %v580 = vld [vmem:[%s1 + $0x60] sm:$0xf]
      %v581 = vld [vmem:[%s1 + $0x64] sm:$0xf]
      %v582 = vld [vmem:[%s1 + $0x68] sm:$0xf]
      %v583 = vld [vmem:[%s1 + $0x6c] sm:$0xf]
      %v584 = vld [vmem:[%s1 + $0x70] sm:$0xf]
      %v585 = vld [vmem:[%s1 + $0x74] sm:$0xf]
      %v586 = vld [vmem:[%s1 + $0x78] sm:$0xf]
      %v587 = vld [vmem:[%s1 + $0x7c] sm:$0xf]
      %v596 = vunpack.c.l.b16 %v548
      %v597 = vunpack.c.h.b16 %v548
      %v598 = vunpack.c.l.b16 %v549
      %v599 = vunpack.c.h.b16 %v549
      %v600 = vunpack.c.l.b16 %v550
      %v601 = vunpack.c.h.b16 %v550
      %v602 = vunpack.c.l.b16 %v551
      %v603 = vunpack.c.h.b16 %v551
      %v604 = vunpack.c.l.b16 %v552
      %v605 = vunpack.c.h.b16 %v552
      %v606 = vunpack.c.l.b16 %v553
      %v607 = vunpack.c.h.b16 %v553
      %v608 = vunpack.c.l.b16 %v554
      %v609 = vunpack.c.h.b16 %v554
      %v610 = vunpack.c.l.b16 %v555
      %v611 = vunpack.c.h.b16 %v555
      %v612 = vpack.c.b16 %v598, %v596
      %v613 = vpack.c.b16 %v599, %v597
      %v614 = vpack.c.b16 %v602, %v600
      %v615 = vpack.c.b16 %v603, %v601
      %v616 = vpack.c.b16 %v606, %v604
      %v617 = vpack.c.b16 %v607, %v605
      %v618 = vpack.c.b16 %v610, %v608
      %v619 = vpack.c.b16 %v611, %v609
      %v660 = vunpack.c.l.b16 %v556
      %v661 = vunpack.c.l.b16 %v557
      %v662 = vunpack.c.l.b16 %v558
      %v663 = vunpack.c.l.b16 %v559
      %v664 = vunpack.c.l.b16 %v560
      %v665 = vunpack.c.l.b16 %v561
      %v666 = vunpack.c.l.b16 %v562
      %v667 = vunpack.c.l.b16 %v563
      %v668 = vunpack.c.l.b16 %v564
      %v669 = vunpack.c.l.b16 %v565
      %v670 = vunpack.c.l.b16 %v566
      %v671 = vunpack.c.l.b16 %v567
      %v672 = vunpack.c.l.b16 %v568
      %v673 = vunpack.c.l.b16 %v569
      %v674 = vunpack.c.l.b16 %v570
      %v675 = vunpack.c.l.b16 %v571
      %v676 = vunpack.c.l.b16 %v572
      %v677 = vunpack.c.l.b16 %v573
      %v678 = vunpack.c.l.b16 %v574
      %v679 = vunpack.c.l.b16 %v575
      %v680 = vunpack.c.l.b16 %v576
      %v681 = vunpack.c.l.b16 %v577
      %v682 = vunpack.c.l.b16 %v578
      %v683 = vunpack.c.l.b16 %v579
      %v684 = vunpack.c.l.b16 %v580
      %v685 = vunpack.c.l.b16 %v581
      %v686 = vunpack.c.l.b16 %v582
      %v687 = vunpack.c.l.b16 %v583
      %v688 = vunpack.c.l.b16 %v584
      %v689 = vunpack.c.l.b16 %v585
      %v690 = vunpack.c.l.b16 %v586
      %v691 = vunpack.c.l.b16 %v587
      %v692 = vpack.c.b16 %v661, %v660
      %v693 = vpack.c.b16 %v663, %v662
      %v694 = vpack.c.b16 %v665, %v664
      %v695 = vpack.c.b16 %v667, %v666
      %v696 = vpack.c.b16 %v669, %v668
      %v697 = vpack.c.b16 %v671, %v670
      %v698 = vpack.c.b16 %v673, %v672
      %v699 = vpack.c.b16 %v675, %v674
      %v700 = vpack.c.b16 %v677, %v676
      %v701 = vpack.c.b16 %v679, %v678
      %v702 = vpack.c.b16 %v681, %v680
      %v703 = vpack.c.b16 %v683, %v682
      %v704 = vpack.c.b16 %v685, %v684
      %v705 = vpack.c.b16 %v687, %v686
      %v706 = vpack.c.b16 %v689, %v688
      %v707 = vpack.c.b16 %v691, %v690
      %724 = vmatpush.bf16.msra.mxu0 %v699
      %725 = vmatpush.bf16.msra.mxu0 %v698
      %726 = vmatpush.bf16.msra.mxu0 %v697
      %727 = vmatpush.bf16.msra.mxu0 %v696
      %728 = vmatpush.bf16.msra.mxu0 %v695
      %729 = vmatpush.bf16.msra.mxu0 %v694
      %730 = vmatpush.bf16.msra.mxu0 %v693
      %731 = vmatpush.bf16.msra.mxu0 %v692
      %732 = vmatmul.bf16.gmra.mxu0 %v612
      %v733 = vpop.f32.mrf.mxu0
      %v734 = vadd.f32 0.0, %v733
      %v735 = vpop.f32.mrf.mxu0
      %v736 = vadd.f32 0.0, %v735
      %737 = vmatmul.bf16.gmra.mxu0 %v614
      %v738 = vpop.f32.mrf.mxu0
      %v739 = vadd.f32 0.0, %v738
      %v740 = vpop.f32.mrf.mxu0
      %v741 = vadd.f32 0.0, %v740
      %742 = vmatmul.bf16.gmra.mxu0 %v616
      %v743 = vpop.f32.mrf.mxu0
      %v744 = vadd.f32 0.0, %v743
      %v745 = vpop.f32.mrf.mxu0
      %v746 = vadd.f32 0.0, %v745
      %747 = vmatmul.bf16.gmra.mxu0 %v618
      %v748 = vpop.f32.mrf.mxu0
      %v749 = vadd.f32 0.0, %v748
      %v750 = vpop.f32.mrf.mxu0
      %v751 = vadd.f32 0.0, %v750
      %752 = vdwg.mxu0
      %753 = vmatpush.bf16.msra.mxu0 %v707
      %754 = vmatpush.bf16.msra.mxu0 %v706
      %755 = vmatpush.bf16.msra.mxu0 %v705
      %756 = vmatpush.bf16.msra.mxu0 %v704
      %757 = vmatpush.bf16.msra.mxu0 %v703
      %758 = vmatpush.bf16.msra.mxu0 %v702
      %759 = vmatpush.bf16.msra.mxu0 %v701
      %760 = vmatpush.bf16.msra.mxu0 %v700
      %761 = vmatmul.bf16.gmra.mxu0 %v613
      %v762 = vpop.f32.mrf.mxu0
      %v763 = vadd.f32 %v734, %v762
      %v764 = vpop.f32.mrf.mxu0
      %v765 = vadd.f32 %v736, %v764
      %766 = vmatmul.bf16.gmra.mxu0 %v615
      %v767 = vpop.f32.mrf.mxu0
      %v768 = vadd.f32 %v739, %v767
      %v769 = vpop.f32.mrf.mxu0
      %v770 = vadd.f32 %v741, %v769
      %771 = vmatmul.bf16.gmra.mxu0 %v617
      %v772 = vpop.f32.mrf.mxu0
      %v773 = vadd.f32 %v744, %v772
      %v774 = vpop.f32.mrf.mxu0
      %v775 = vadd.f32 %v746, %v774
      %776 = vmatmul.bf16.gmra.mxu0 %v619
      %v777 = vpop.f32.mrf.mxu0
      %v778 = vadd.f32 %v749, %v777
      %v779 = vpop.f32.mrf.mxu0
      %v780 = vadd.f32 %v751, %v779
      %781 = vdwg.mxu0
      %v782 = vld [vmem:[%s2] sm:$0x1]
      %v783 = vperm.slane %v782, 0
      %v784 = vmul.f32 %v763, %v783
      %v785 = vmul.f32 %v765, %v783
      %v786 = vmul.f32 %v768, %v783
      %v787 = vmul.f32 %v770, %v783
      %v788 = vmul.f32 %v773, %v783
      %v789 = vmul.f32 %v775, %v783
      %v790 = vmul.f32 %v778, %v783
      %v791 = vmul.f32 %v780, %v783
      %v792 = vld [vmem:[%s2 + $0x1] sm:$0x1]
      %v793 = vperm.slane %v792, 0
      %v794 = vadd.f32 %v784, %v793
      %v795 = vadd.f32 %v785, %v793
      %v796 = vadd.f32 %v786, %v793
      %v797 = vadd.f32 %v787, %v793
      %v798 = vadd.f32 %v788, %v793
      %v799 = vadd.f32 %v789, %v793
      %v800 = vadd.f32 %v790, %v793
      %v801 = vadd.f32 %v791, %v793
      %v802 = vmax.f32 %v794, 0.0
      %v803 = vmax.f32 %v795, 0.0
      %v804 = vmax.f32 %v796, 0.0
      %v805 = vmax.f32 %v797, 0.0
      %v806 = vmax.f32 %v798, 0.0
      %v807 = vmax.f32 %v799, 0.0
      %v808 = vmax.f32 %v800, 0.0
      %v809 = vmax.f32 %v801, 0.0
      %vm810 = vcmask 1041408
      %v811 = vsel %vm810, %v802, -inf
      %v812 = vrot.slane %v811, 4
      %v813 = vmax.f32 %v811, %v812
      %v814 = vrot.slane %v813, 2
      %v815 = vmax.f32 %v813, %v814
      %v816 = vrot.slane %v815, 1
      %v817 = vmax.f32 %v815, %v816
      %vm818 = vcmask 1043457
      %v819 = vsel %vm818, %v802, -inf
      %v820 = vrot.slane %v819, 4
      %v821 = vmax.f32 %v819, %v820
      %v822 = vrot.slane %v821, 2
      %v823 = vmax.f32 %v821, %v822
      %v824 = vrot.slane %v823, 1
      %v825 = vmax.f32 %v823, %v824
      %vm826 = vcmask 1045507
      %v827 = vsel %vm826, %v802, -inf
      %v828 = vrot.slane %v827, 4
      %v829 = vmax.f32 %v827, %v828
      %v830 = vrot.slane %v829, 2
      %v831 = vmax.f32 %v829, %v830
      %v832 = vrot.slane %v831, 1
      %v833 = vmax.f32 %v831, %v832
      %vm834 = vcmask 1047557
      %v835 = vsel %vm834, %v802, -inf
      %v836 = vrot.slane %v835, 4
      %v837 = vmax.f32 %v835, %v836
      %v838 = vrot.slane %v837, 2
      %v839 = vmax.f32 %v837, %v838
      %v840 = vrot.slane %v839, 1
      %v841 = vmax.f32 %v839, %v840
      %v842 = vsel %vm810, %v803, -inf
      %v843 = vrot.slane %v842, 4
      %v844 = vmax.f32 %v842, %v843
      %v845 = vrot.slane %v844, 2
      %v846 = vmax.f32 %v844, %v845
      %v847 = vrot.slane %v846, 1
      %v848 = vmax.f32 %v846, %v847
      %v849 = vsel %vm818, %v803, -inf
      %v850 = vrot.slane %v849, 4
      %v851 = vmax.f32 %v849, %v850
      %v852 = vrot.slane %v851, 2
      %v853 = vmax.f32 %v851, %v852
      %v854 = vrot.slane %v853, 1
      %v855 = vmax.f32 %v853, %v854
      %v856 = vsel %vm826, %v803, -inf
      %v857 = vrot.slane %v856, 4
      %v858 = vmax.f32 %v856, %v857
      %v859 = vrot.slane %v858, 2
      %v860 = vmax.f32 %v858, %v859
      %v861 = vrot.slane %v860, 1
      %v862 = vmax.f32 %v860, %v861
      %v863 = vsel %vm834, %v803, -inf
      %v864 = vrot.slane %v863, 4
      %v865 = vmax.f32 %v863, %v864
      %v866 = vrot.slane %v865, 2
      %v867 = vmax.f32 %v865, %v866
      %v868 = vrot.slane %v867, 1
      %v869 = vmax.f32 %v867, %v868
      %v870 = vsel %vm810, %v804, -inf
      %v871 = vrot.slane %v870, 4
      %v872 = vmax.f32 %v870, %v871
      %v873 = vrot.slane %v872, 2
      %v874 = vmax.f32 %v872, %v873
      %v875 = vrot.slane %v874, 1
      %v876 = vmax.f32 %v874, %v875
      %v877 = vsel %vm818, %v804, -inf
      %v878 = vrot.slane %v877, 4
      %v879 = vmax.f32 %v877, %v878
      %v880 = vrot.slane %v879, 2
      %v881 = vmax.f32 %v879, %v880
      %v882 = vrot.slane %v881, 1
      %v883 = vmax.f32 %v881, %v882
      %v884 = vsel %vm826, %v804, -inf
      %v885 = vrot.slane %v884, 4
      %v886 = vmax.f32 %v884, %v885
      %v887 = vrot.slane %v886, 2
      %v888 = vmax.f32 %v886, %v887
      %v889 = vrot.slane %v888, 1
      %v890 = vmax.f32 %v888, %v889
      %v891 = vsel %vm834, %v804, -inf
      %v892 = vrot.slane %v891, 4
      %v893 = vmax.f32 %v891, %v892
      %v894 = vrot.slane %v893, 2
      %v895 = vmax.f32 %v893, %v894
      %v896 = vrot.slane %v895, 1
      %v897 = vmax.f32 %v895, %v896
      %v898 = vsel %vm810, %v805, -inf
      %v899 = vrot.slane %v898, 4
      %v900 = vmax.f32 %v898, %v899
      %v901 = vrot.slane %v900, 2
      %v902 = vmax.f32 %v900, %v901
      %v903 = vrot.slane %v902, 1
      %v904 = vmax.f32 %v902, %v903
      %v905 = vsel %vm818, %v805, -inf
      %v906 = vrot.slane %v905, 4
      %v907 = vmax.f32 %v905, %v906
      %v908 = vrot.slane %v907, 2
      %v909 = vmax.f32 %v907, %v908
      %v910 = vrot.slane %v909, 1
      %v911 = vmax.f32 %v909, %v910
      %v912 = vsel %vm826, %v805, -inf
      %v913 = vrot.slane %v912, 4
      %v914 = vmax.f32 %v912, %v913
      %v915 = vrot.slane %v914, 2
      %v916 = vmax.f32 %v914, %v915
      %v917 = vrot.slane %v916, 1
      %v918 = vmax.f32 %v916, %v917
      %v919 = vsel %vm834, %v805, -inf
      %v920 = vrot.slane %v919, 4
      %v921 = vmax.f32 %v919, %v920
      %v922 = vrot.slane %v921, 2
      %v923 = vmax.f32 %v921, %v922
      %v924 = vrot.slane %v923, 1
      %v925 = vmax.f32 %v923, %v924
      %v926 = vsel %vm810, %v806, -inf
      %v927 = vrot.slane %v926, 4
      %v928 = vmax.f32 %v926, %v927
      %v929 = vrot.slane %v928, 2
      %v930 = vmax.f32 %v928, %v929
      %v931 = vrot.slane %v930, 1
      %v932 = vmax.f32 %v930, %v931
      %v933 = vsel %vm818, %v806, -inf
      %v934 = vrot.slane %v933, 4
      %v935 = vmax.f32 %v933, %v934
      %v936 = vrot.slane %v935, 2
      %v937 = vmax.f32 %v935, %v936
      %v938 = vrot.slane %v937, 1
      %v939 = vmax.f32 %v937, %v938
      %v940 = vsel %vm826, %v806, -inf
      %v941 = vrot.slane %v940, 4
      %v942 = vmax.f32 %v940, %v941
      %v943 = vrot.slane %v942, 2
      %v944 = vmax.f32 %v942, %v943
      %v945 = vrot.slane %v944, 1
      %v946 = vmax.f32 %v944, %v945
      %v947 = vsel %vm834, %v806, -inf
      %v948 = vrot.slane %v947, 4
      %v949 = vmax.f32 %v947, %v948
      %v950 = vrot.slane %v949, 2
      %v951 = vmax.f32 %v949, %v950
      %v952 = vrot.slane %v951, 1
      %v953 = vmax.f32 %v951, %v952
      %v954 = vsel %vm810, %v807, -inf
      %v955 = vrot.slane %v954, 4
      %v956 = vmax.f32 %v954, %v955
      %v957 = vrot.slane %v956, 2
      %v958 = vmax.f32 %v956, %v957
      %v959 = vrot.slane %v958, 1
      %v960 = vmax.f32 %v958, %v959
      %v961 = vsel %vm818, %v807, -inf
      %v962 = vrot.slane %v961, 4
      %v963 = vmax.f32 %v961, %v962
      %v964 = vrot.slane %v963, 2
      %v965 = vmax.f32 %v963, %v964
      %v966 = vrot.slane %v965, 1
      %v967 = vmax.f32 %v965, %v966
      %v968 = vsel %vm826, %v807, -inf
      %v969 = vrot.slane %v968, 4
      %v970 = vmax.f32 %v968, %v969
      %v971 = vrot.slane %v970, 2
      %v972 = vmax.f32 %v970, %v971
      %v973 = vrot.slane %v972, 1
      %v974 = vmax.f32 %v972, %v973
      %v975 = vsel %vm834, %v807, -inf
      %v976 = vrot.slane %v975, 4
      %v977 = vmax.f32 %v975, %v976
      %v978 = vrot.slane %v977, 2
      %v979 = vmax.f32 %v977, %v978
      %v980 = vrot.slane %v979, 1
      %v981 = vmax.f32 %v979, %v980
      %v982 = vsel %vm810, %v808, -inf
      %v983 = vrot.slane %v982, 4
      %v984 = vmax.f32 %v982, %v983
      %v985 = vrot.slane %v984, 2
      %v986 = vmax.f32 %v984, %v985
      %v987 = vrot.slane %v986, 1
      %v988 = vmax.f32 %v986, %v987
      %v989 = vsel %vm818, %v808, -inf
      %v990 = vrot.slane %v989, 4
      %v991 = vmax.f32 %v989, %v990
      %v992 = vrot.slane %v991, 2
      %v993 = vmax.f32 %v991, %v992
      %v994 = vrot.slane %v993, 1
      %v995 = vmax.f32 %v993, %v994
      %v996 = vsel %vm826, %v808, -inf
      %v997 = vrot.slane %v996, 4
      %v998 = vmax.f32 %v996, %v997
      %v999 = vrot.slane %v998, 2
      %v1000 = vmax.f32 %v998, %v999
      %v1001 = vrot.slane %v1000, 1
      %v1002 = vmax.f32 %v1000, %v1001
      %v1003 = vsel %vm834, %v808, -inf
      %v1004 = vrot.slane %v1003, 4
      %v1005 = vmax.f32 %v1003, %v1004
      %v1006 = vrot.slane %v1005, 2
      %v1007 = vmax.f32 %v1005, %v1006
      %v1008 = vrot.slane %v1007, 1
      %v1009 = vmax.f32 %v1007, %v1008
      %v1010 = vsel %vm810, %v809, -inf
      %v1011 = vrot.slane %v1010, 4
      %v1012 = vmax.f32 %v1010, %v1011
      %v1013 = vrot.slane %v1012, 2
      %v1014 = vmax.f32 %v1012, %v1013
      %v1015 = vrot.slane %v1014, 1
      %v1016 = vmax.f32 %v1014, %v1015
      %v1017 = vsel %vm818, %v809, -inf
      %v1018 = vrot.slane %v1017, 4
      %v1019 = vmax.f32 %v1017, %v1018
      %v1020 = vrot.slane %v1019, 2
      %v1021 = vmax.f32 %v1019, %v1020
      %v1022 = vrot.slane %v1021, 1
      %v1023 = vmax.f32 %v1021, %v1022
      %v1024 = vsel %vm826, %v809, -inf
      %v1025 = vrot.slane %v1024, 4
      %v1026 = vmax.f32 %v1024, %v1025
      %v1027 = vrot.slane %v1026, 2
      %v1028 = vmax.f32 %v1026, %v1027
      %v1029 = vrot.slane %v1028, 1
      %v1030 = vmax.f32 %v1028, %v1029
      %v1031 = vsel %vm834, %v809, -inf
      %v1032 = vrot.slane %v1031, 4
      %v1033 = vmax.f32 %v1031, %v1032
      %v1034 = vrot.slane %v1033, 2
      %v1035 = vmax.f32 %v1033, %v1034
      %v1036 = vrot.slane %v1035, 1
      %v1037 = vmax.f32 %v1035, %v1036
      %v1038 = vmax.f32 %v817, %v848
      %v1039 = vmax.f32 %v825, %v855
      %v1040 = vmax.f32 %v833, %v862
      %v1041 = vmax.f32 %v841, %v869
      %v1042 = vmax.f32 %v848, %v876
      %v1043 = vmax.f32 %v1042, %v904
      %v1044 = vmax.f32 %v855, %v883
      %v1045 = vmax.f32 %v1044, %v911
      %v1046 = vmax.f32 %v862, %v890
      %v1047 = vmax.f32 %v1046, %v918
      %v1048 = vmax.f32 %v869, %v897
      %v1049 = vmax.f32 %v1048, %v925
      %v1050 = vmax.f32 %v904, %v932
      %v1051 = vmax.f32 %v1050, %v960
      %v1052 = vmax.f32 %v911, %v939
      %v1053 = vmax.f32 %v1052, %v967
      %v1054 = vmax.f32 %v918, %v946
      %v1055 = vmax.f32 %v1054, %v974
      %v1056 = vmax.f32 %v925, %v953
      %v1057 = vmax.f32 %v1056, %v981
      %v1058 = vmax.f32 %v960, %v988
      %v1059 = vmax.f32 %v1058, %v1016
      %v1060 = vmax.f32 %v967, %v995
      %v1061 = vmax.f32 %v1060, %v1023
      %v1062 = vmax.f32 %v974, %v1002
      %v1063 = vmax.f32 %v1062, %v1030
      %v1064 = vmax.f32 %v981, %v1009
      %v1065 = vmax.f32 %v1064, %v1037
      %v1071 = vrot.slane 0.0, 7
      %v1072 = vrot.slane %v1038, 7
      %v1073 = vrot.slane %v1039, 7
      %v1074 = vrot.slane %v1043, 7
      %v1075 = vrot.slane %v1045, 7
      %v1085 = vrot.slane 0.0, 6
      %v1086 = vrot.slane %v1039, 6
      %v1087 = vrot.slane %v1040, 6
      %v1088 = vrot.slane %v1041, 6
      %v1089 = vrot.slane %v1045, 6
      %v1090 = vrot.slane %v1047, 6
      %v1091 = vrot.slane %v1049, 6
      %v1103 = vrot.slane 0.0, 5
      %v1104 = vrot.slane %v1043, 5
      %v1105 = vrot.slane %v1045, 5
      %v1106 = vrot.slane %v1051, 5
      %v1107 = vrot.slane %v1053, 5
      %v1108 = vrot.slane %v1059, 5
      %v1109 = vrot.slane %v1061, 5
      %v1121 = vrot.slane %v1045, 4
      %v1122 = vrot.slane %v1047, 4
      %v1123 = vrot.slane %v1049, 4
      %v1124 = vrot.slane %v1053, 4
      %v1125 = vrot.slane %v1055, 4
      %v1126 = vrot.slane %v1057, 4
      %v1127 = vrot.slane %v1061, 4
      %v1128 = vrot.slane %v1063, 4
      %v1129 = vrot.slane %v1065, 4
      %vm1139 = vcmask 1040384
      %v1140 = vsel %vm1139, 0.0, %v1071
      %v1141 = vsel %vm1139, 0.0, %v1072
      %v1142 = vsel %vm1139, 0.0, %v1073
      %v1143 = vsel %vm1139, 0.0, %v1074
      %v1144 = vsel %vm1139, 0.0, %v1075
      %v1145 = vsel %vm810, %v1140, %v1085
      %v1146 = vsel %vm810, %v1140, %v1086
      %v1147 = vsel %vm810, %v1141, %v1087
      %v1148 = vsel %vm810, %v1142, %v1088
      %v1149 = vsel %vm810, %v1140, %v1089
      %v1150 = vsel %vm810, %v1143, %v1090
      %v1151 = vsel %vm810, %v1144, %v1091
      %vm1152 = vcmask 1042432
      %v1153 = vsel %vm1152, %v1145, %v1103
      %v1154 = vsel %vm1152, %v1145, %v1104
      %v1155 = vsel %vm1152, %v1145, %v1105
      %v1156 = vsel %vm1152, %v1146, %v1103
      %v1157 = vsel %vm1152, %v1147, %v1106
      %v1158 = vsel %vm1152, %v1148, %v1107
      %v1159 = vsel %vm1152, %v1149, %v1103
      %v1160 = vsel %vm1152, %v1150, %v1108
      %v1161 = vsel %vm1152, %v1151, %v1109
      %vm1162 = vcmask 1043456
      %v1163 = vsel %vm1162, %v1153, %v1121
      %v1164 = vsel %vm1162, %v1154, %v1122
      %v1165 = vsel %vm1162, %v1155, %v1123
      %v1166 = vsel %vm1162, %v1156, %v1124
      %v1167 = vsel %vm1162, %v1157, %v1125
      %v1168 = vsel %vm1162, %v1158, %v1126
      %v1169 = vsel %vm1162, %v1159, %v1127
      %v1170 = vsel %vm1162, %v1160, %v1128
      %v1171 = vsel %vm1162, %v1161, %v1129
      %vm1172 = vcmask 1044480
      %v1173 = vsel %vm1172, %v1163, 0.0
      %v1174 = vsel %vm1172, %v1164, 0.0
      %v1175 = vsel %vm1172, %v1165, 0.0
      %v1176 = vsel %vm1172, %v1166, 0.0
      %v1177 = vsel %vm1172, %v1167, 0.0
      %v1178 = vsel %vm1172, %v1168, 0.0
      %v1179 = vsel %vm1172, %v1169, 0.0
      %v1180 = vsel %vm1172, %v1170, 0.0
      %v1181 = vsel %vm1172, %v1171, 0.0
      %v1182 = vpack.c.bf16 %v1173, %v1173
      %v1183 = vpack.c.bf16 %v1174, %v1174
      %v1184 = vpack.c.bf16 %v1175, %v1175
      %v1185 = vpack.c.bf16 %v1176, %v1176
      %v1186 = vpack.c.bf16 %v1177, %v1177
      %v1187 = vpack.c.bf16 %v1178, %v1178
      %v1188 = vpack.c.bf16 %v1179, %v1179
      %v1189 = vpack.c.bf16 %v1180, %v1180
      %v1190 = vpack.c.bf16 %v1181, %v1181
      %v1191 = vld [vmem:[%s3] sm:$0xf]
      %v1192 = vld [vmem:[%s3 + $0x4] sm:$0xf]
      %v1193 = vld [vmem:[%s3 + $0x8] sm:$0xf]
      %v1194 = vld [vmem:[%s3 + $0xc] sm:$0xf]
      %v1195 = vld [vmem:[%s3 + $0x10] sm:$0xf]
      %v1196 = vld [vmem:[%s3 + $0x14] sm:$0xf]
      %v1197 = vld [vmem:[%s3 + $0x18] sm:$0xf]
      %v1198 = vld [vmem:[%s3 + $0x1c] sm:$0xf]
      %v1199 = vld [vmem:[%s3 + $0x20] sm:$0xf]
      %v1200 = vld [vmem:[%s3 + $0x24] sm:$0xf]
      %v1201 = vld [vmem:[%s3 + $0x28] sm:$0xf]
      %v1202 = vld [vmem:[%s3 + $0x2c] sm:$0xf]
      %v1203 = vld [vmem:[%s3 + $0x30] sm:$0xf]
      %v1204 = vld [vmem:[%s3 + $0x34] sm:$0xf]
      %v1205 = vld [vmem:[%s3 + $0x38] sm:$0xf]
      %v1206 = vld [vmem:[%s3 + $0x3c] sm:$0xf]
      %v1207 = vld [vmem:[%s3 + $0x40] sm:$0xf]
      %v1208 = vld [vmem:[%s3 + $0x44] sm:$0xf]
      %v1209 = vld [vmem:[%s3 + $0x48] sm:$0xf]
      %v1210 = vld [vmem:[%s3 + $0x4c] sm:$0xf]
      %v1211 = vld [vmem:[%s3 + $0x50] sm:$0xf]
      %v1212 = vld [vmem:[%s3 + $0x54] sm:$0xf]
      %v1213 = vld [vmem:[%s3 + $0x58] sm:$0xf]
      %v1214 = vld [vmem:[%s3 + $0x5c] sm:$0xf]
      %v1215 = vld [vmem:[%s3 + $0x60] sm:$0xf]
      %v1216 = vld [vmem:[%s3 + $0x64] sm:$0xf]
      %v1217 = vld [vmem:[%s3 + $0x68] sm:$0xf]
      %v1218 = vld [vmem:[%s3 + $0x6c] sm:$0xf]
      %v1219 = vld [vmem:[%s3 + $0x70] sm:$0xf]
      %v1220 = vld [vmem:[%s3 + $0x74] sm:$0xf]
      %v1221 = vld [vmem:[%s3 + $0x78] sm:$0xf]
      %v1222 = vld [vmem:[%s3 + $0x7c] sm:$0xf]
      %v1223 = vld [vmem:[%s3 + $0x80] sm:$0xf]
      %v1224 = vld [vmem:[%s3 + $0x84] sm:$0xf]
      %v1225 = vld [vmem:[%s3 + $0x88] sm:$0xf]
      %v1226 = vld [vmem:[%s3 + $0x8c] sm:$0xf]
      %v1227 = vld [vmem:[%s3 + $0x90] sm:$0xf]
      %v1228 = vld [vmem:[%s3 + $0x94] sm:$0xf]
      %v1229 = vld [vmem:[%s3 + $0x98] sm:$0xf]
      %v1230 = vld [vmem:[%s3 + $0x9c] sm:$0xf]
      %v1231 = vld [vmem:[%s3 + $0xa0] sm:$0xf]
      %v1232 = vld [vmem:[%s3 + $0xa4] sm:$0xf]
      %v1233 = vld [vmem:[%s3 + $0xa8] sm:$0xf]
      %v1234 = vld [vmem:[%s3 + $0xac] sm:$0xf]
      %v1235 = vld [vmem:[%s3 + $0xb0] sm:$0xf]
      %v1236 = vld [vmem:[%s3 + $0xb4] sm:$0xf]
      %v1237 = vld [vmem:[%s3 + $0xb8] sm:$0xf]
      %v1238 = vld [vmem:[%s3 + $0xbc] sm:$0xf]
      %v1239 = vld [vmem:[%s3 + $0xc0] sm:$0xf]
      %v1240 = vld [vmem:[%s3 + $0xc4] sm:$0xf]
      %v1241 = vld [vmem:[%s3 + $0xc8] sm:$0xf]
      %v1242 = vld [vmem:[%s3 + $0xcc] sm:$0xf]
      %v1243 = vld [vmem:[%s3 + $0xd0] sm:$0xf]
      %v1244 = vld [vmem:[%s3 + $0xd4] sm:$0xf]
      %v1245 = vld [vmem:[%s3 + $0xd8] sm:$0xf]
      %v1246 = vld [vmem:[%s3 + $0xdc] sm:$0xf]
      %v1247 = vld [vmem:[%s3 + $0xe0] sm:$0xf]
      %v1248 = vld [vmem:[%s3 + $0xe4] sm:$0xf]
      %v1249 = vld [vmem:[%s3 + $0xe8] sm:$0xf]
      %v1250 = vld [vmem:[%s3 + $0xec] sm:$0xf]
      %v1251 = vld [vmem:[%s3 + $0xf0] sm:$0xf]
      %v1252 = vld [vmem:[%s3 + $0xf4] sm:$0xf]
      %v1253 = vld [vmem:[%s3 + $0xf8] sm:$0xf]
      %v1254 = vld [vmem:[%s3 + $0xfc] sm:$0xf]
      %v1255 = vld [vmem:[%s3 + $0x100] sm:$0xf]
      %v1256 = vld [vmem:[%s3 + $0x104] sm:$0xf]
      %v1257 = vld [vmem:[%s3 + $0x108] sm:$0xf]
      %v1258 = vld [vmem:[%s3 + $0x10c] sm:$0xf]
      %v1259 = vld [vmem:[%s3 + $0x110] sm:$0xf]
      %v1260 = vld [vmem:[%s3 + $0x114] sm:$0xf]
      %v1261 = vld [vmem:[%s3 + $0x118] sm:$0xf]
      %v1262 = vld [vmem:[%s3 + $0x11c] sm:$0xf]
      %v1263 = vld [vmem:[%s3 + $0x120] sm:$0xf]
      %v1264 = vld [vmem:[%s3 + $0x124] sm:$0xf]
      %v1265 = vld [vmem:[%s3 + $0x128] sm:$0xf]
      %v1266 = vld [vmem:[%s3 + $0x12c] sm:$0xf]
      %v1267 = vld [vmem:[%s3 + $0x130] sm:$0xf]
      %v1268 = vld [vmem:[%s3 + $0x134] sm:$0xf]
      %v1269 = vld [vmem:[%s3 + $0x138] sm:$0xf]
      %v1270 = vld [vmem:[%s3 + $0x13c] sm:$0xf]
      %v1271 = vld [vmem:[%s3 + $0x140] sm:$0xf]
      %v1272 = vld [vmem:[%s3 + $0x144] sm:$0xf]
      %v1273 = vld [vmem:[%s3 + $0x148] sm:$0xf]
      %v1274 = vld [vmem:[%s3 + $0x14c] sm:$0xf]
      %v1275 = vld [vmem:[%s3 + $0x150] sm:$0xf]
      %v1276 = vld [vmem:[%s3 + $0x154] sm:$0xf]
      %v1277 = vld [vmem:[%s3 + $0x158] sm:$0xf]
      %v1278 = vld [vmem:[%s3 + $0x15c] sm:$0xf]
      %v1279 = vld [vmem:[%s3 + $0x160] sm:$0xf]
      %v1280 = vld [vmem:[%s3 + $0x164] sm:$0xf]
      %v1281 = vld [vmem:[%s3 + $0x168] sm:$0xf]
      %v1282 = vld [vmem:[%s3 + $0x16c] sm:$0xf]
      %v1283 = vld [vmem:[%s3 + $0x170] sm:$0xf]
      %v1284 = vld [vmem:[%s3 + $0x174] sm:$0xf]
      %v1285 = vld [vmem:[%s3 + $0x178] sm:$0xf]
      %v1286 = vld [vmem:[%s3 + $0x17c] sm:$0xf]
      %v1287 = vld [vmem:[%s3 + $0x180] sm:$0xf]
      %v1288 = vld [vmem:[%s3 + $0x184] sm:$0xf]
      %v1289 = vld [vmem:[%s3 + $0x188] sm:$0xf]
      %v1290 = vld [vmem:[%s3 + $0x18c] sm:$0xf]
      %v1291 = vld [vmem:[%s3 + $0x190] sm:$0xf]
      %v1292 = vld [vmem:[%s3 + $0x194] sm:$0xf]
      %v1293 = vld [vmem:[%s3 + $0x198] sm:$0xf]
      %v1294 = vld [vmem:[%s3 + $0x19c] sm:$0xf]
      %v1295 = vld [vmem:[%s3 + $0x1a0] sm:$0xf]
      %v1296 = vld [vmem:[%s3 + $0x1a4] sm:$0xf]
      %v1297 = vld [vmem:[%s3 + $0x1a8] sm:$0xf]
      %v1298 = vld [vmem:[%s3 + $0x1ac] sm:$0xf]
      %v1299 = vld [vmem:[%s3 + $0x1b0] sm:$0xf]
      %v1300 = vld [vmem:[%s3 + $0x1b4] sm:$0xf]
      %v1301 = vld [vmem:[%s3 + $0x1b8] sm:$0xf]
      %v1302 = vld [vmem:[%s3 + $0x1bc] sm:$0xf]
      %v1303 = vld [vmem:[%s3 + $0x1c0] sm:$0xf]
      %v1304 = vld [vmem:[%s3 + $0x1c4] sm:$0xf]
      %v1305 = vld [vmem:[%s3 + $0x1c8] sm:$0xf]
      %v1306 = vld [vmem:[%s3 + $0x1cc] sm:$0xf]
      %v1307 = vld [vmem:[%s3 + $0x1d0] sm:$0xf]
      %v1308 = vld [vmem:[%s3 + $0x1d4] sm:$0xf]
      %v1309 = vld [vmem:[%s3 + $0x1d8] sm:$0xf]
      %v1310 = vld [vmem:[%s3 + $0x1dc] sm:$0xf]
      %v1311 = vld [vmem:[%s3 + $0x1e0] sm:$0xf]
      %v1312 = vld [vmem:[%s3 + $0x1e4] sm:$0xf]
      %v1313 = vld [vmem:[%s3 + $0x1e8] sm:$0xf]
      %v1314 = vld [vmem:[%s3 + $0x1ec] sm:$0xf]
      %v1315 = vld [vmem:[%s3 + $0x1f0] sm:$0xf]
      %v1316 = vld [vmem:[%s3 + $0x1f4] sm:$0xf]
      %v1317 = vld [vmem:[%s3 + $0x1f8] sm:$0xf]
      %v1318 = vld [vmem:[%s3 + $0x1fc] sm:$0xf]
      %v1319 = vld [vmem:[%s3 + $0x200] sm:$0xf]
      %v1320 = vld [vmem:[%s3 + $0x204] sm:$0xf]
      %v1321 = vld [vmem:[%s3 + $0x208] sm:$0xf]
      %v1322 = vld [vmem:[%s3 + $0x20c] sm:$0xf]
      %v1323 = vld [vmem:[%s3 + $0x210] sm:$0xf]
      %v1324 = vld [vmem:[%s3 + $0x214] sm:$0xf]
      %v1325 = vld [vmem:[%s3 + $0x218] sm:$0xf]
      %v1326 = vld [vmem:[%s3 + $0x21c] sm:$0xf]
      %v1327 = vld [vmem:[%s3 + $0x220] sm:$0xf]
      %v1328 = vld [vmem:[%s3 + $0x224] sm:$0xf]
      %v1329 = vld [vmem:[%s3 + $0x228] sm:$0xf]
      %v1330 = vld [vmem:[%s3 + $0x22c] sm:$0xf]
      %v1331 = vld [vmem:[%s3 + $0x230] sm:$0xf]
      %v1332 = vld [vmem:[%s3 + $0x234] sm:$0xf]
      %v1333 = vld [vmem:[%s3 + $0x238] sm:$0xf]
      %v1334 = vld [vmem:[%s3 + $0x23c] sm:$0xf]
      %v1479 = vunpack.c.l.b16 %v1191
      %v1480 = vunpack.c.l.b16 %v1192
      %v1481 = vunpack.c.l.b16 %v1193
      %v1482 = vunpack.c.l.b16 %v1194
      %v1483 = vunpack.c.l.b16 %v1195
      %v1484 = vunpack.c.l.b16 %v1196
      %v1485 = vunpack.c.l.b16 %v1197
      %v1486 = vunpack.c.l.b16 %v1198
      %v1487 = vunpack.c.l.b16 %v1199
      %v1488 = vunpack.c.l.b16 %v1200
      %v1489 = vunpack.c.l.b16 %v1201
      %v1490 = vunpack.c.l.b16 %v1202
      %v1491 = vunpack.c.l.b16 %v1203
      %v1492 = vunpack.c.l.b16 %v1204
      %v1493 = vunpack.c.l.b16 %v1205
      %v1494 = vunpack.c.l.b16 %v1206
      %v1495 = vunpack.c.l.b16 %v1207
      %v1496 = vunpack.c.l.b16 %v1208
      %v1497 = vunpack.c.l.b16 %v1209
      %v1498 = vunpack.c.l.b16 %v1210
      %v1499 = vunpack.c.l.b16 %v1211
      %v1500 = vunpack.c.l.b16 %v1212
      %v1501 = vunpack.c.l.b16 %v1213
      %v1502 = vunpack.c.l.b16 %v1214
      %v1503 = vunpack.c.l.b16 %v1215
      %v1504 = vunpack.c.l.b16 %v1216
      %v1505 = vunpack.c.l.b16 %v1217
      %v1506 = vunpack.c.l.b16 %v1218
      %v1507 = vunpack.c.l.b16 %v1219
      %v1508 = vunpack.c.l.b16 %v1220
      %v1509 = vunpack.c.l.b16 %v1221
      %v1510 = vunpack.c.l.b16 %v1222
      %v1511 = vunpack.c.l.b16 %v1223
      %v1512 = vunpack.c.l.b16 %v1224
      %v1513 = vunpack.c.l.b16 %v1225
      %v1514 = vunpack.c.l.b16 %v1226
      %v1515 = vunpack.c.l.b16 %v1227
      %v1516 = vunpack.c.l.b16 %v1228
      %v1517 = vunpack.c.l.b16 %v1229
      %v1518 = vunpack.c.l.b16 %v1230
      %v1519 = vunpack.c.l.b16 %v1231
      %v1520 = vunpack.c.l.b16 %v1232
      %v1521 = vunpack.c.l.b16 %v1233
      %v1522 = vunpack.c.l.b16 %v1234
      %v1523 = vunpack.c.l.b16 %v1235
      %v1524 = vunpack.c.l.b16 %v1236
      %v1525 = vunpack.c.l.b16 %v1237
      %v1526 = vunpack.c.l.b16 %v1238
      %v1527 = vunpack.c.l.b16 %v1239
      %v1528 = vunpack.c.l.b16 %v1240
      %v1529 = vunpack.c.l.b16 %v1241
      %v1530 = vunpack.c.l.b16 %v1242
      %v1531 = vunpack.c.l.b16 %v1243
      %v1532 = vunpack.c.l.b16 %v1244
      %v1533 = vunpack.c.l.b16 %v1245
      %v1534 = vunpack.c.l.b16 %v1246
      %v1535 = vunpack.c.l.b16 %v1247
      %v1536 = vunpack.c.l.b16 %v1248
      %v1537 = vunpack.c.l.b16 %v1249
      %v1538 = vunpack.c.l.b16 %v1250
      %v1539 = vunpack.c.l.b16 %v1251
      %v1540 = vunpack.c.l.b16 %v1252
      %v1541 = vunpack.c.l.b16 %v1253
      %v1542 = vunpack.c.l.b16 %v1254
      %v1543 = vunpack.c.l.b16 %v1255
      %v1544 = vunpack.c.l.b16 %v1256
      %v1545 = vunpack.c.l.b16 %v1257
      %v1546 = vunpack.c.l.b16 %v1258
      %v1547 = vunpack.c.l.b16 %v1259
      %v1548 = vunpack.c.l.b16 %v1260
      %v1549 = vunpack.c.l.b16 %v1261
      %v1550 = vunpack.c.l.b16 %v1262
      %v1551 = vunpack.c.l.b16 %v1263
      %v1552 = vunpack.c.l.b16 %v1264
      %v1553 = vunpack.c.l.b16 %v1265
      %v1554 = vunpack.c.l.b16 %v1266
      %v1555 = vunpack.c.l.b16 %v1267
      %v1556 = vunpack.c.l.b16 %v1268
      %v1557 = vunpack.c.l.b16 %v1269
      %v1558 = vunpack.c.l.b16 %v1270
      %v1559 = vunpack.c.l.b16 %v1271
      %v1560 = vunpack.c.l.b16 %v1272
      %v1561 = vunpack.c.l.b16 %v1273
      %v1562 = vunpack.c.l.b16 %v1274
      %v1563 = vunpack.c.l.b16 %v1275
      %v1564 = vunpack.c.l.b16 %v1276
      %v1565 = vunpack.c.l.b16 %v1277
      %v1566 = vunpack.c.l.b16 %v1278
      %v1567 = vunpack.c.l.b16 %v1279
      %v1568 = vunpack.c.l.b16 %v1280
      %v1569 = vunpack.c.l.b16 %v1281
      %v1570 = vunpack.c.l.b16 %v1282
      %v1571 = vunpack.c.l.b16 %v1283
      %v1572 = vunpack.c.l.b16 %v1284
      %v1573 = vunpack.c.l.b16 %v1285
      %v1574 = vunpack.c.l.b16 %v1286
      %v1575 = vunpack.c.l.b16 %v1287
      %v1576 = vunpack.c.l.b16 %v1288
      %v1577 = vunpack.c.l.b16 %v1289
      %v1578 = vunpack.c.l.b16 %v1290
      %v1579 = vunpack.c.l.b16 %v1291
      %v1580 = vunpack.c.l.b16 %v1292
      %v1581 = vunpack.c.l.b16 %v1293
      %v1582 = vunpack.c.l.b16 %v1294
      %v1583 = vunpack.c.l.b16 %v1295
      %v1584 = vunpack.c.l.b16 %v1296
      %v1585 = vunpack.c.l.b16 %v1297
      %v1586 = vunpack.c.l.b16 %v1298
      %v1587 = vunpack.c.l.b16 %v1299
      %v1588 = vunpack.c.l.b16 %v1300
      %v1589 = vunpack.c.l.b16 %v1301
      %v1590 = vunpack.c.l.b16 %v1302
      %v1591 = vunpack.c.l.b16 %v1303
      %v1592 = vunpack.c.l.b16 %v1304
      %v1593 = vunpack.c.l.b16 %v1305
      %v1594 = vunpack.c.l.b16 %v1306
      %v1595 = vunpack.c.l.b16 %v1307
      %v1596 = vunpack.c.l.b16 %v1308
      %v1597 = vunpack.c.l.b16 %v1309
      %v1598 = vunpack.c.l.b16 %v1310
      %v1599 = vunpack.c.l.b16 %v1311
      %v1600 = vunpack.c.l.b16 %v1312
      %v1601 = vunpack.c.l.b16 %v1313
      %v1602 = vunpack.c.l.b16 %v1314
      %v1603 = vunpack.c.l.b16 %v1315
      %v1604 = vunpack.c.l.b16 %v1316
      %v1605 = vunpack.c.l.b16 %v1317
      %v1606 = vunpack.c.l.b16 %v1318
      %v1607 = vunpack.c.l.b16 %v1319
      %v1608 = vunpack.c.l.b16 %v1320
      %v1609 = vunpack.c.l.b16 %v1321
      %v1610 = vunpack.c.l.b16 %v1322
      %v1611 = vunpack.c.l.b16 %v1323
      %v1612 = vunpack.c.l.b16 %v1324
      %v1613 = vunpack.c.l.b16 %v1325
      %v1614 = vunpack.c.l.b16 %v1326
      %v1615 = vunpack.c.l.b16 %v1327
      %v1616 = vunpack.c.l.b16 %v1328
      %v1617 = vunpack.c.l.b16 %v1329
      %v1618 = vunpack.c.l.b16 %v1330
      %v1619 = vunpack.c.l.b16 %v1331
      %v1620 = vunpack.c.l.b16 %v1332
      %v1621 = vunpack.c.l.b16 %v1333
      %v1622 = vunpack.c.l.b16 %v1334
      %v1623 = vpack.c.b16 %v1480, %v1479
      %v1624 = vpack.c.b16 %v1482, %v1481
      %v1625 = vpack.c.b16 %v1484, %v1483
      %v1626 = vpack.c.b16 %v1486, %v1485
      %v1627 = vpack.c.b16 %v1488, %v1487
      %v1628 = vpack.c.b16 %v1490, %v1489
      %v1629 = vpack.c.b16 %v1492, %v1491
      %v1630 = vpack.c.b16 %v1494, %v1493
      %v1631 = vpack.c.b16 %v1496, %v1495
      %v1632 = vpack.c.b16 %v1498, %v1497
      %v1633 = vpack.c.b16 %v1500, %v1499
      %v1634 = vpack.c.b16 %v1502, %v1501
      %v1635 = vpack.c.b16 %v1504, %v1503
      %v1636 = vpack.c.b16 %v1506, %v1505
      %v1637 = vpack.c.b16 %v1508, %v1507
      %v1638 = vpack.c.b16 %v1510, %v1509
      %v1639 = vpack.c.b16 %v1512, %v1511
      %v1640 = vpack.c.b16 %v1514, %v1513
      %v1641 = vpack.c.b16 %v1516, %v1515
      %v1642 = vpack.c.b16 %v1518, %v1517
      %v1643 = vpack.c.b16 %v1520, %v1519
      %v1644 = vpack.c.b16 %v1522, %v1521
      %v1645 = vpack.c.b16 %v1524, %v1523
      %v1646 = vpack.c.b16 %v1526, %v1525
      %v1647 = vpack.c.b16 %v1528, %v1527
      %v1648 = vpack.c.b16 %v1530, %v1529
      %v1649 = vpack.c.b16 %v1532, %v1531
      %v1650 = vpack.c.b16 %v1534, %v1533
      %v1651 = vpack.c.b16 %v1536, %v1535
      %v1652 = vpack.c.b16 %v1538, %v1537
      %v1653 = vpack.c.b16 %v1540, %v1539
      %v1654 = vpack.c.b16 %v1542, %v1541
      %v1655 = vpack.c.b16 %v1544, %v1543
      %v1656 = vpack.c.b16 %v1546, %v1545
      %v1657 = vpack.c.b16 %v1548, %v1547
      %v1658 = vpack.c.b16 %v1550, %v1549
      %v1659 = vpack.c.b16 %v1552, %v1551
      %v1660 = vpack.c.b16 %v1554, %v1553
      %v1661 = vpack.c.b16 %v1556, %v1555
      %v1662 = vpack.c.b16 %v1558, %v1557
      %v1663 = vpack.c.b16 %v1560, %v1559
      %v1664 = vpack.c.b16 %v1562, %v1561
      %v1665 = vpack.c.b16 %v1564, %v1563
      %v1666 = vpack.c.b16 %v1566, %v1565
      %v1667 = vpack.c.b16 %v1568, %v1567
      %v1668 = vpack.c.b16 %v1570, %v1569
      %v1669 = vpack.c.b16 %v1572, %v1571
      %v1670 = vpack.c.b16 %v1574, %v1573
      %v1671 = vpack.c.b16 %v1576, %v1575
      %v1672 = vpack.c.b16 %v1578, %v1577
      %v1673 = vpack.c.b16 %v1580, %v1579
      %v1674 = vpack.c.b16 %v1582, %v1581
      %v1675 = vpack.c.b16 %v1584, %v1583
      %v1676 = vpack.c.b16 %v1586, %v1585
      %v1677 = vpack.c.b16 %v1588, %v1587
      %v1678 = vpack.c.b16 %v1590, %v1589
      %v1679 = vpack.c.b16 %v1592, %v1591
      %v1680 = vpack.c.b16 %v1594, %v1593
      %v1681 = vpack.c.b16 %v1596, %v1595
      %v1682 = vpack.c.b16 %v1598, %v1597
      %v1683 = vpack.c.b16 %v1600, %v1599
      %v1684 = vpack.c.b16 %v1602, %v1601
      %v1685 = vpack.c.b16 %v1604, %v1603
      %v1686 = vpack.c.b16 %v1606, %v1605
      %v1687 = vpack.c.b16 %v1608, %v1607
      %v1688 = vpack.c.b16 %v1610, %v1609
      %v1689 = vpack.c.b16 %v1612, %v1611
      %v1690 = vpack.c.b16 %v1614, %v1613
      %v1691 = vpack.c.b16 %v1616, %v1615
      %v1692 = vpack.c.b16 %v1618, %v1617
      %v1693 = vpack.c.b16 %v1620, %v1619
      %v1694 = vpack.c.b16 %v1622, %v1621
      %1767 = vmatpush.bf16.msra.mxu0 %v1630
      %1768 = vmatpush.bf16.msra.mxu0 %v1629
      %1769 = vmatpush.bf16.msra.mxu0 %v1628
      %1770 = vmatpush.bf16.msra.mxu0 %v1627
      %1771 = vmatpush.bf16.msra.mxu0 %v1626
      %1772 = vmatpush.bf16.msra.mxu0 %v1625
      %1773 = vmatpush.bf16.msra.mxu0 %v1624
      %1774 = vmatpush.bf16.msra.mxu0 %v1623
      %1775 = vmatmul.bf16.gmra.mxu0 %v1182
      %v1776 = vpop.f32.mrf.mxu0
      %v1777 = vadd.f32 0.0, %v1776
      %v1778 = vpop.f32.mrf.mxu0
      %1779 = vdwg.mxu0
      %1780 = vmatpush.bf16.msra.mxu0 %v1638
      %1781 = vmatpush.bf16.msra.mxu0 %v1637
      %1782 = vmatpush.bf16.msra.mxu0 %v1636
      %1783 = vmatpush.bf16.msra.mxu0 %v1635
      %1784 = vmatpush.bf16.msra.mxu0 %v1634
      %1785 = vmatpush.bf16.msra.mxu0 %v1633
      %1786 = vmatpush.bf16.msra.mxu0 %v1632
      %1787 = vmatpush.bf16.msra.mxu0 %v1631
      %1788 = vmatmul.bf16.gmra.mxu0 %v1183
      %v1789 = vpop.f32.mrf.mxu0
      %v1790 = vadd.f32 %v1777, %v1789
      %v1791 = vpop.f32.mrf.mxu0
      %1792 = vdwg.mxu0
      %1793 = vmatpush.bf16.msra.mxu0 %v1646
      %1794 = vmatpush.bf16.msra.mxu0 %v1645
      %1795 = vmatpush.bf16.msra.mxu0 %v1644
      %1796 = vmatpush.bf16.msra.mxu0 %v1643
      %1797 = vmatpush.bf16.msra.mxu0 %v1642
      %1798 = vmatpush.bf16.msra.mxu0 %v1641
      %1799 = vmatpush.bf16.msra.mxu0 %v1640
      %1800 = vmatpush.bf16.msra.mxu0 %v1639
      %1801 = vmatmul.bf16.gmra.mxu0 %v1184
      %v1802 = vpop.f32.mrf.mxu0
      %v1803 = vadd.f32 %v1790, %v1802
      %v1804 = vpop.f32.mrf.mxu0
      %1805 = vdwg.mxu0
      %1806 = vmatpush.bf16.msra.mxu0 %v1654
      %1807 = vmatpush.bf16.msra.mxu0 %v1653
      %1808 = vmatpush.bf16.msra.mxu0 %v1652
      %1809 = vmatpush.bf16.msra.mxu0 %v1651
      %1810 = vmatpush.bf16.msra.mxu0 %v1650
      %1811 = vmatpush.bf16.msra.mxu0 %v1649
      %1812 = vmatpush.bf16.msra.mxu0 %v1648
      %1813 = vmatpush.bf16.msra.mxu0 %v1647
      %1814 = vmatmul.bf16.gmra.mxu0 %v1185
      %v1815 = vpop.f32.mrf.mxu0
      %v1816 = vadd.f32 %v1803, %v1815
      %v1817 = vpop.f32.mrf.mxu0
      %1818 = vdwg.mxu0
      %1819 = vmatpush.bf16.msra.mxu0 %v1662
      %1820 = vmatpush.bf16.msra.mxu0 %v1661
      %1821 = vmatpush.bf16.msra.mxu0 %v1660
      %1822 = vmatpush.bf16.msra.mxu0 %v1659
      %1823 = vmatpush.bf16.msra.mxu0 %v1658
      %1824 = vmatpush.bf16.msra.mxu0 %v1657
      %1825 = vmatpush.bf16.msra.mxu0 %v1656
      %1826 = vmatpush.bf16.msra.mxu0 %v1655
      %1827 = vmatmul.bf16.gmra.mxu0 %v1186
      %v1828 = vpop.f32.mrf.mxu0
      %v1829 = vadd.f32 %v1816, %v1828
      %v1830 = vpop.f32.mrf.mxu0
      %1831 = vdwg.mxu0
      %1832 = vmatpush.bf16.msra.mxu0 %v1670
      %1833 = vmatpush.bf16.msra.mxu0 %v1669
      %1834 = vmatpush.bf16.msra.mxu0 %v1668
      %1835 = vmatpush.bf16.msra.mxu0 %v1667
      %1836 = vmatpush.bf16.msra.mxu0 %v1666
      %1837 = vmatpush.bf16.msra.mxu0 %v1665
      %1838 = vmatpush.bf16.msra.mxu0 %v1664
      %1839 = vmatpush.bf16.msra.mxu0 %v1663
      %1840 = vmatmul.bf16.gmra.mxu0 %v1187
      %v1841 = vpop.f32.mrf.mxu0
      %v1842 = vadd.f32 %v1829, %v1841
      %v1843 = vpop.f32.mrf.mxu0
      %1844 = vdwg.mxu0
      %1845 = vmatpush.bf16.msra.mxu0 %v1678
      %1846 = vmatpush.bf16.msra.mxu0 %v1677
      %1847 = vmatpush.bf16.msra.mxu0 %v1676
      %1848 = vmatpush.bf16.msra.mxu0 %v1675
      %1849 = vmatpush.bf16.msra.mxu0 %v1674
      %1850 = vmatpush.bf16.msra.mxu0 %v1673
      %1851 = vmatpush.bf16.msra.mxu0 %v1672
      %1852 = vmatpush.bf16.msra.mxu0 %v1671
      %1853 = vmatmul.bf16.gmra.mxu0 %v1188
      %v1854 = vpop.f32.mrf.mxu0
      %v1855 = vadd.f32 %v1842, %v1854
      %v1856 = vpop.f32.mrf.mxu0
      %1857 = vdwg.mxu0
      %1858 = vmatpush.bf16.msra.mxu0 %v1686
      %1859 = vmatpush.bf16.msra.mxu0 %v1685
      %1860 = vmatpush.bf16.msra.mxu0 %v1684
      %1861 = vmatpush.bf16.msra.mxu0 %v1683
      %1862 = vmatpush.bf16.msra.mxu0 %v1682
      %1863 = vmatpush.bf16.msra.mxu0 %v1681
      %1864 = vmatpush.bf16.msra.mxu0 %v1680
      %1865 = vmatpush.bf16.msra.mxu0 %v1679
      %1866 = vmatmul.bf16.gmra.mxu0 %v1189
      %v1867 = vpop.f32.mrf.mxu0
      %v1868 = vadd.f32 %v1855, %v1867
      %v1869 = vpop.f32.mrf.mxu0
      %1870 = vdwg.mxu0
      %1871 = vmatpush.bf16.msra.mxu0 %v1694
      %1872 = vmatpush.bf16.msra.mxu0 %v1693
      %1873 = vmatpush.bf16.msra.mxu0 %v1692
      %1874 = vmatpush.bf16.msra.mxu0 %v1691
      %1875 = vmatpush.bf16.msra.mxu0 %v1690
      %1876 = vmatpush.bf16.msra.mxu0 %v1689
      %1877 = vmatpush.bf16.msra.mxu0 %v1688
      %1878 = vmatpush.bf16.msra.mxu0 %v1687
      %1879 = vmatmul.bf16.gmra.mxu0 %v1190
      %v1880 = vpop.f32.mrf.mxu0
      %v1881 = vadd.f32 %v1868, %v1880
      %v1882 = vpop.f32.mrf.mxu0
      %1883 = vdwg.mxu0
      %v1884 = vld [vmem:[%s4] sm:$0x1]
      %v1885 = vperm.slane %v1884, 0
      %v1886 = vmul.f32 %v1881, %v1885
      %v1887 = vld [vmem:[%s4 + $0x1] sm:$0x1]
      %v1888 = vperm.slane %v1887, 0
      %v1889 = vadd.f32 %v1886, %v1888
      %v1890 = vmax.f32 %v1889, 0.0
      %v1891 = vlaneseq
      %v1892 = vshrl.u32 %v1891, 7
      %vm1893 = vcmp.ge.s32.totalorder %v1892, 1
      %vm1894 = vcmp.lt.s32.totalorder %v1892, 5
      %vm1895 = vmand %vm1893, %vm1894
      %v1896 = vld [vmem:[%s5] sm:$0xff]
      %v1897 = vsel %vm1895, %v1890, 0.0
      %v1898 = vadd.f32 %v1896, %v1897
      %v1899 = vlaneseq
      %v1900 = vand.u32 %v1899, 127
      %vm1901 = vcmp.ge.s32.totalorder %v1900, 5
      %v1902 = vsel %vm1901, -1e+09, 0.0
      %v1903 = vpack.c.bf16 %v1898, %v1898
      %v1904 = vld [vmem:[%s6] sm:$0xff]
      %v1905 = vld [vmem:[%s6 + $0x8] sm:$0xf]
      %v1906 = vld [vmem:[%s6 + $0xc] sm:$0xff]
      %v1907 = vld [vmem:[%s6 + $0x14] sm:$0xf]
      %v1908 = vld [vmem:[%s6 + $0x18] sm:$0xff]
      %v1909 = vld [vmem:[%s6 + $0x20] sm:$0xf]
      %v1910 = vld [vmem:[%s6 + $0x24] sm:$0xff]
      %v1911 = vld [vmem:[%s6 + $0x2c] sm:$0xf]
      %v1912 = vld [vmem:[%s6 + $0x30] sm:$0xff]
      %v1913 = vld [vmem:[%s6 + $0x38] sm:$0xf]
      %v1914 = vld [vmem:[%s6 + $0x3c] sm:$0xff]
      %v1915 = vld [vmem:[%s6 + $0x44] sm:$0xf]
      %v1916 = vld [vmem:[%s6 + $0x48] sm:$0xff]
      %v1917 = vld [vmem:[%s6 + $0x50] sm:$0xf]
      %v1918 = vld [vmem:[%s6 + $0x54] sm:$0xff]
      %v1919 = vld [vmem:[%s6 + $0x5c] sm:$0xf]
      %v1920 = vld [vmem:[%s6 + $0x60] sm:$0xff]
      %v1921 = vld [vmem:[%s6 + $0x68] sm:$0xf]
      %v1922 = vld [vmem:[%s6 + $0x6c] sm:$0xff]
      %v1923 = vld [vmem:[%s6 + $0x74] sm:$0xf]
      %v1924 = vld [vmem:[%s6 + $0x78] sm:$0xff]
      %v1925 = vld [vmem:[%s6 + $0x80] sm:$0xf]
      %v1926 = vld [vmem:[%s6 + $0x84] sm:$0xff]
      %v1927 = vld [vmem:[%s6 + $0x8c] sm:$0xf]
      %v1928 = vld [vmem:[%s6 + $0x90] sm:$0xff]
      %v1929 = vld [vmem:[%s6 + $0x98] sm:$0xf]
      %v1930 = vld [vmem:[%s6 + $0x9c] sm:$0xff]
      %v1931 = vld [vmem:[%s6 + $0xa4] sm:$0xf]
      %v1932 = vld [vmem:[%s6 + $0xa8] sm:$0xff]
      %v1933 = vld [vmem:[%s6 + $0xb0] sm:$0xf]
      %v1934 = vld [vmem:[%s6 + $0xb4] sm:$0xff]
      %v1935 = vld [vmem:[%s6 + $0xbc] sm:$0xf]
      %v1936 = vld [vmem:[%s7] sm:$0x7]
      %v1938 = vperm.slane %v1936, 0
      %v1939 = vperm.slane %v1936, 1
      %v1940 = vperm.slane %v1936, 2
      %v1976 = vunpack.c.l.b16 %v1904
      %v1977 = vunpack.c.h.b16 %v1904
      %v1978 = vunpack.c.l.b16 %v1905
      %v1979 = vunpack.c.l.b16 %v1906
      %v1980 = vunpack.c.h.b16 %v1906
      %v1981 = vunpack.c.l.b16 %v1907
      %v1982 = vunpack.c.l.b16 %v1908
      %v1983 = vunpack.c.h.b16 %v1908
      %v1984 = vunpack.c.l.b16 %v1909
      %v1985 = vunpack.c.l.b16 %v1910
      %v1986 = vunpack.c.h.b16 %v1910
      %v1987 = vunpack.c.l.b16 %v1911
      %v1988 = vunpack.c.l.b16 %v1912
      %v1989 = vunpack.c.h.b16 %v1912
      %v1990 = vunpack.c.l.b16 %v1913
      %v1991 = vunpack.c.l.b16 %v1914
      %v1992 = vunpack.c.h.b16 %v1914
      %v1993 = vunpack.c.l.b16 %v1915
      %v1994 = vunpack.c.l.b16 %v1916
      %v1995 = vunpack.c.h.b16 %v1916
      %v1996 = vunpack.c.l.b16 %v1917
      %v1997 = vunpack.c.l.b16 %v1918
      %v1998 = vunpack.c.h.b16 %v1918
      %v1999 = vunpack.c.l.b16 %v1919
      %v2000 = vunpack.c.l.b16 %v1920
      %v2001 = vunpack.c.h.b16 %v1920
      %v2002 = vunpack.c.l.b16 %v1921
      %v2003 = vunpack.c.l.b16 %v1922
      %v2004 = vunpack.c.h.b16 %v1922
      %v2005 = vunpack.c.l.b16 %v1923
      %v2006 = vunpack.c.l.b16 %v1924
      %v2007 = vunpack.c.h.b16 %v1924
      %v2008 = vunpack.c.l.b16 %v1925
      %v2009 = vunpack.c.l.b16 %v1926
      %v2010 = vunpack.c.h.b16 %v1926
      %v2011 = vunpack.c.l.b16 %v1927
      %v2012 = vunpack.c.l.b16 %v1928
      %v2013 = vunpack.c.h.b16 %v1928
      %v2014 = vunpack.c.l.b16 %v1929
      %v2015 = vunpack.c.l.b16 %v1930
      %v2016 = vunpack.c.h.b16 %v1930
      %v2017 = vunpack.c.l.b16 %v1931
      %v2018 = vunpack.c.l.b16 %v1932
      %v2019 = vunpack.c.h.b16 %v1932
      %v2020 = vunpack.c.l.b16 %v1933
      %v2021 = vunpack.c.l.b16 %v1934
      %v2022 = vunpack.c.h.b16 %v1934
      %v2023 = vunpack.c.l.b16 %v1935
      %v2024 = vpack.c.b16 %v1979, %v1976
      %v2025 = vpack.c.b16 %v1980, %v1977
      %v2026 = vpack.c.b16 %v1981, %v1978
      %v2027 = vpack.c.b16 %v1985, %v1982
      %v2028 = vpack.c.b16 %v1986, %v1983
      %v2029 = vpack.c.b16 %v1987, %v1984
      %v2030 = vpack.c.b16 %v1991, %v1988
      %v2031 = vpack.c.b16 %v1992, %v1989
      %v2032 = vpack.c.b16 %v1993, %v1990
      %v2033 = vpack.c.b16 %v1997, %v1994
      %v2034 = vpack.c.b16 %v1998, %v1995
      %v2035 = vpack.c.b16 %v1999, %v1996
      %v2036 = vpack.c.b16 %v2003, %v2000
      %v2037 = vpack.c.b16 %v2004, %v2001
      %v2038 = vpack.c.b16 %v2005, %v2002
      %v2039 = vpack.c.b16 %v2009, %v2006
      %v2040 = vpack.c.b16 %v2010, %v2007
      %v2041 = vpack.c.b16 %v2011, %v2008
      %v2042 = vpack.c.b16 %v2015, %v2012
      %v2043 = vpack.c.b16 %v2016, %v2013
      %v2044 = vpack.c.b16 %v2017, %v2014
      %v2045 = vpack.c.b16 %v2021, %v2018
      %v2046 = vpack.c.b16 %v2022, %v2019
      %v2047 = vpack.c.b16 %v2023, %v2020
      %2072 = vmatpush.bf16.msra.mxu0 %v2045
      %2073 = vmatpush.bf16.msra.mxu0 %v2042
      %2074 = vmatpush.bf16.msra.mxu0 %v2039
      %2075 = vmatpush.bf16.msra.mxu0 %v2036
      %2076 = vmatpush.bf16.msra.mxu0 %v2033
      %2077 = vmatpush.bf16.msra.mxu0 %v2030
      %2078 = vmatpush.bf16.msra.mxu0 %v2027
      %2079 = vmatpush.bf16.msra.mxu0 %v2024
      %2080 = vmatmul.bf16.gmra.mxu0 %v1903
      %v2081 = vpop.f32.mrf.mxu0
      %v2082 = vadd.f32 %v1938, %v2081
      %v2083 = vpop.f32.mrf.mxu0
      %2084 = vdwg.mxu0
      %2085 = vmatpush.bf16.msra.mxu0 %v2046
      %2086 = vmatpush.bf16.msra.mxu0 %v2043
      %2087 = vmatpush.bf16.msra.mxu0 %v2040
      %2088 = vmatpush.bf16.msra.mxu0 %v2037
      %2089 = vmatpush.bf16.msra.mxu0 %v2034
      %2090 = vmatpush.bf16.msra.mxu0 %v2031
      %2091 = vmatpush.bf16.msra.mxu0 %v2028
      %2092 = vmatpush.bf16.msra.mxu0 %v2025
      %2093 = vmatmul.bf16.gmra.mxu0 %v1903
      %v2094 = vpop.f32.mrf.mxu0
      %v2095 = vadd.f32 %v1939, %v2094
      %v2096 = vpop.f32.mrf.mxu0
      %2097 = vdwg.mxu0
      %2098 = vmatpush.bf16.msra.mxu0 %v2047
      %2099 = vmatpush.bf16.msra.mxu0 %v2044
      %2100 = vmatpush.bf16.msra.mxu0 %v2041
      %2101 = vmatpush.bf16.msra.mxu0 %v2038
      %2102 = vmatpush.bf16.msra.mxu0 %v2035
      %2103 = vmatpush.bf16.msra.mxu0 %v2032
      %2104 = vmatpush.bf16.msra.mxu0 %v2029
      %2105 = vmatpush.bf16.msra.mxu0 %v2026
      %2106 = vmatmul.bf16.gmra.mxu0 %v1903
      %v2107 = vpop.f32.mrf.mxu0
      %v2108 = vadd.f32 %v1940, %v2107
      %v2109 = vpop.f32.mrf.mxu0
      %2110 = vdwg.mxu0
      %2112 = vrot.lane.b32.xlu0 %v2082, 112
      %v2113 = vpop.permute.xlu0 %2112
      %2115 = vrot.lane.b32.xlu0 %v2082, 96
      %v2116 = vpop.permute.xlu0 %2115
      %2118 = vrot.lane.b32.xlu0 %v2082, 80
      %v2119 = vpop.permute.xlu0 %2118
      %2121 = vrot.lane.b32.xlu0 %v2082, 64
      %v2122 = vpop.permute.xlu0 %2121
      %2124 = vrot.lane.b32.xlu0 %v2082, 48
      %v2125 = vpop.permute.xlu0 %2124
      %2127 = vrot.lane.b32.xlu0 %v2082, 32
      %v2128 = vpop.permute.xlu0 %2127
      %2130 = vrot.lane.b32.xlu0 %v2082, 16
      %v2131 = vpop.permute.xlu0 %2130
      %v2133 = vpack.c.bf16 %v2082, %v2082
      %v2134 = vpack.c.bf16 %v2113, %v2113
      %v2135 = vpack.c.bf16 %v2116, %v2116
      %v2136 = vpack.c.bf16 %v2119, %v2119
      %v2137 = vpack.c.bf16 %v2122, %v2122
      %v2138 = vpack.c.bf16 %v2125, %v2125
      %v2139 = vpack.c.bf16 %v2128, %v2128
      %v2140 = vpack.c.bf16 %v2131, %v2131
      %2142 = vrot.lane.b32.xlu0 %v2095, 112
      %v2143 = vpop.permute.xlu0 %2142
      %2145 = vrot.lane.b32.xlu0 %v2095, 96
      %v2146 = vpop.permute.xlu0 %2145
      %2148 = vrot.lane.b32.xlu0 %v2095, 80
      %v2149 = vpop.permute.xlu0 %2148
      %2151 = vrot.lane.b32.xlu0 %v2095, 64
      %v2152 = vpop.permute.xlu0 %2151
      %2154 = vrot.lane.b32.xlu0 %v2095, 48
      %v2155 = vpop.permute.xlu0 %2154
      %2157 = vrot.lane.b32.xlu0 %v2095, 32
      %v2158 = vpop.permute.xlu0 %2157
      %2160 = vrot.lane.b32.xlu0 %v2095, 16
      %v2161 = vpop.permute.xlu0 %2160
      %v2163 = vpack.c.bf16 %v2095, %v2095
      %v2164 = vpack.c.bf16 %v2143, %v2143
      %v2165 = vpack.c.bf16 %v2146, %v2146
      %v2166 = vpack.c.bf16 %v2149, %v2149
      %v2167 = vpack.c.bf16 %v2152, %v2152
      %v2168 = vpack.c.bf16 %v2155, %v2155
      %v2169 = vpack.c.bf16 %v2158, %v2158
      %v2170 = vpack.c.bf16 %v2161, %v2161
      %2172 = vrot.lane.b32.xlu0 %v2108, 112
      %v2173 = vpop.permute.xlu0 %2172
      %2175 = vrot.lane.b32.xlu0 %v2108, 96
      %v2176 = vpop.permute.xlu0 %2175
      %2178 = vrot.lane.b32.xlu0 %v2108, 80
      %v2179 = vpop.permute.xlu0 %2178
      %2181 = vrot.lane.b32.xlu0 %v2108, 64
      %v2182 = vpop.permute.xlu0 %2181
      %2184 = vrot.lane.b32.xlu0 %v2108, 48
      %v2185 = vpop.permute.xlu0 %2184
      %2187 = vrot.lane.b32.xlu0 %v2108, 32
      %v2188 = vpop.permute.xlu0 %2187
      %2190 = vrot.lane.b32.xlu0 %v2108, 16
      %v2191 = vpop.permute.xlu0 %2190
      %v2193 = vpack.c.bf16 %v2108, %v2108
      %v2194 = vpack.c.bf16 %v2173, %v2173
      %v2195 = vpack.c.bf16 %v2176, %v2176
      %v2196 = vpack.c.bf16 %v2179, %v2179
      %v2197 = vpack.c.bf16 %v2182, %v2182
      %v2198 = vpack.c.bf16 %v2185, %v2185
      %v2199 = vpack.c.bf16 %v2188, %v2188
      %v2200 = vpack.c.bf16 %v2191, %v2191
      %vm2201 = vcmask 130048
      %v2203 = vsel %vm2201, %v2133, 0
      %v2206 = vsel %vm2201, %v2163, 0
      %2208 = vmatpush.bf16.xpose.msra.mxu0 0
      %2209 = vmatpush.bf16.xpose.msra.mxu0 0
      %2210 = vmatpush.bf16.xpose.msra.mxu0 0
      %2211 = vmatpush.bf16.xpose.msra.mxu0 0
      %2212 = vmatpush.bf16.xpose.msra.mxu0 0
      %2213 = vmatpush.bf16.xpose.msra.mxu0 0
      %2214 = vmatpush.bf16.xpose.msra.mxu0 0
      %2215 = vmatpush.bf16.xpose.msra.mxu0 %v2206
      %2216 = vmatmul.bf16.gmra.mxu0 %v2203
      %v2217 = vpop.f32.mrf.mxu0
      %v2218 = vadd.f32 %v1902, %v2217
      %v2219 = vpop.f32.mrf.mxu0
      %2220 = vdwg.mxu0
      %v2222 = vsel %vm2201, %v2134, 0
      %v2225 = vsel %vm2201, %v2164, 0
      %2227 = vmatpush.bf16.xpose.msra.mxu0 0
      %2228 = vmatpush.bf16.xpose.msra.mxu0 0
      %2229 = vmatpush.bf16.xpose.msra.mxu0 0
      %2230 = vmatpush.bf16.xpose.msra.mxu0 0
      %2231 = vmatpush.bf16.xpose.msra.mxu0 0
      %2232 = vmatpush.bf16.xpose.msra.mxu0 0
      %2233 = vmatpush.bf16.xpose.msra.mxu0 0
      %2234 = vmatpush.bf16.xpose.msra.mxu0 %v2225
      %2235 = vmatmul.bf16.gmra.mxu0 %v2222
      %v2236 = vpop.f32.mrf.mxu0
      %v2237 = vadd.f32 %v1902, %v2236
      %v2238 = vpop.f32.mrf.mxu0
      %2239 = vdwg.mxu0
      %v2241 = vsel %vm2201, %v2135, 0
      %v2244 = vsel %vm2201, %v2165, 0
      %2246 = vmatpush.bf16.xpose.msra.mxu0 0
      %2247 = vmatpush.bf16.xpose.msra.mxu0 0
      %2248 = vmatpush.bf16.xpose.msra.mxu0 0
      %2249 = vmatpush.bf16.xpose.msra.mxu0 0
      %2250 = vmatpush.bf16.xpose.msra.mxu0 0
      %2251 = vmatpush.bf16.xpose.msra.mxu0 0
      %2252 = vmatpush.bf16.xpose.msra.mxu0 0
      %2253 = vmatpush.bf16.xpose.msra.mxu0 %v2244
      %2254 = vmatmul.bf16.gmra.mxu0 %v2241
      %v2255 = vpop.f32.mrf.mxu0
      %v2256 = vadd.f32 %v1902, %v2255
      %v2257 = vpop.f32.mrf.mxu0
      %2258 = vdwg.mxu0
      %v2260 = vsel %vm2201, %v2136, 0
      %v2263 = vsel %vm2201, %v2166, 0
      %2265 = vmatpush.bf16.xpose.msra.mxu0 0
      %2266 = vmatpush.bf16.xpose.msra.mxu0 0
      %2267 = vmatpush.bf16.xpose.msra.mxu0 0
      %2268 = vmatpush.bf16.xpose.msra.mxu0 0
      %2269 = vmatpush.bf16.xpose.msra.mxu0 0
      %2270 = vmatpush.bf16.xpose.msra.mxu0 0
      %2271 = vmatpush.bf16.xpose.msra.mxu0 0
      %2272 = vmatpush.bf16.xpose.msra.mxu0 %v2263
      %2273 = vmatmul.bf16.gmra.mxu0 %v2260
      %v2274 = vpop.f32.mrf.mxu0
      %v2275 = vadd.f32 %v1902, %v2274
      %v2276 = vpop.f32.mrf.mxu0
      %2277 = vdwg.mxu0
      %v2279 = vsel %vm2201, %v2137, 0
      %v2282 = vsel %vm2201, %v2167, 0
      %2284 = vmatpush.bf16.xpose.msra.mxu0 0
      %2285 = vmatpush.bf16.xpose.msra.mxu0 0
      %2286 = vmatpush.bf16.xpose.msra.mxu0 0
      %2287 = vmatpush.bf16.xpose.msra.mxu0 0
      %2288 = vmatpush.bf16.xpose.msra.mxu0 0
      %2289 = vmatpush.bf16.xpose.msra.mxu0 0
      %2290 = vmatpush.bf16.xpose.msra.mxu0 0
      %2291 = vmatpush.bf16.xpose.msra.mxu0 %v2282
      %2292 = vmatmul.bf16.gmra.mxu0 %v2279
      %v2293 = vpop.f32.mrf.mxu0
      %v2294 = vadd.f32 %v1902, %v2293
      %v2295 = vpop.f32.mrf.mxu0
      %2296 = vdwg.mxu0
      %v2298 = vsel %vm2201, %v2138, 0
      %v2301 = vsel %vm2201, %v2168, 0
      %2303 = vmatpush.bf16.xpose.msra.mxu0 0
      %2304 = vmatpush.bf16.xpose.msra.mxu0 0
      %2305 = vmatpush.bf16.xpose.msra.mxu0 0
      %2306 = vmatpush.bf16.xpose.msra.mxu0 0
      %2307 = vmatpush.bf16.xpose.msra.mxu0 0
      %2308 = vmatpush.bf16.xpose.msra.mxu0 0
      %2309 = vmatpush.bf16.xpose.msra.mxu0 0
      %2310 = vmatpush.bf16.xpose.msra.mxu0 %v2301
      %2311 = vmatmul.bf16.gmra.mxu0 %v2298
      %v2312 = vpop.f32.mrf.mxu0
      %v2313 = vadd.f32 %v1902, %v2312
      %v2314 = vpop.f32.mrf.mxu0
      %2315 = vdwg.mxu0
      %v2317 = vsel %vm2201, %v2139, 0
      %v2320 = vsel %vm2201, %v2169, 0
      %2322 = vmatpush.bf16.xpose.msra.mxu0 0
      %2323 = vmatpush.bf16.xpose.msra.mxu0 0
      %2324 = vmatpush.bf16.xpose.msra.mxu0 0
      %2325 = vmatpush.bf16.xpose.msra.mxu0 0
      %2326 = vmatpush.bf16.xpose.msra.mxu0 0
      %2327 = vmatpush.bf16.xpose.msra.mxu0 0
      %2328 = vmatpush.bf16.xpose.msra.mxu0 0
      %2329 = vmatpush.bf16.xpose.msra.mxu0 %v2320
      %2330 = vmatmul.bf16.gmra.mxu0 %v2317
      %v2331 = vpop.f32.mrf.mxu0
      %v2332 = vadd.f32 %v1902, %v2331
      %v2333 = vpop.f32.mrf.mxu0
      %2334 = vdwg.mxu0
      %v2336 = vsel %vm2201, %v2140, 0
      %v2339 = vsel %vm2201, %v2170, 0
      %2341 = vmatpush.bf16.xpose.msra.mxu0 0
      %2342 = vmatpush.bf16.xpose.msra.mxu0 0
      %2343 = vmatpush.bf16.xpose.msra.mxu0 0
      %2344 = vmatpush.bf16.xpose.msra.mxu0 0
      %2345 = vmatpush.bf16.xpose.msra.mxu0 0
      %2346 = vmatpush.bf16.xpose.msra.mxu0 0
      %2347 = vmatpush.bf16.xpose.msra.mxu0 0
      %2348 = vmatpush.bf16.xpose.msra.mxu0 %v2339
      %2349 = vmatmul.bf16.gmra.mxu0 %v2336
      %v2350 = vpop.f32.mrf.mxu0
      %v2351 = vadd.f32 %v1902, %v2350
      %v2352 = vpop.f32.mrf.mxu0
      %2353 = vdwg.mxu0
      %vm2354 = vcmask 64512
      %v2355 = vsel %vm2354, %v2218, -inf
      %2356 = vmax.xlane.f32.xlu0 %v2355
      %v2357 = vpop.xlane.xlu0 %2356
      %v2358 = vsel %vm2354, %v2237, -inf
      %2359 = vmax.xlane.f32.xlu0 %v2358
      %v2360 = vpop.xlane.xlu0 %2359
      %v2361 = vsel %vm2354, %v2256, -inf
      %2362 = vmax.xlane.f32.xlu0 %v2361
      %v2363 = vpop.xlane.xlu0 %2362
      %v2364 = vsel %vm2354, %v2275, -inf
      %2365 = vmax.xlane.f32.xlu0 %v2364
      %v2366 = vpop.xlane.xlu0 %2365
      %v2367 = vsel %vm2354, %v2294, -inf
      %2368 = vmax.xlane.f32.xlu0 %v2367
      %v2369 = vpop.xlane.xlu0 %2368
      %v2370 = vsel %vm2354, %v2313, -inf
      %2371 = vmax.xlane.f32.xlu0 %v2370
      %v2372 = vpop.xlane.xlu0 %2371
      %v2373 = vsel %vm2354, %v2332, -inf
      %2374 = vmax.xlane.f32.xlu0 %v2373
      %v2375 = vpop.xlane.xlu0 %2374
      %v2376 = vsel %vm2354, %v2351, -inf
      %2377 = vmax.xlane.f32.xlu0 %v2376
      %v2378 = vpop.xlane.xlu0 %2377
      %v2379 = vsub.f32 %v2218, %v2357
      %v2380 = vsub.f32 %v2237, %v2360
      %v2381 = vsub.f32 %v2256, %v2363
      %v2382 = vsub.f32 %v2275, %v2366
      %v2383 = vsub.f32 %v2294, %v2369
      %v2384 = vsub.f32 %v2313, %v2372
      %v2385 = vsub.f32 %v2332, %v2375
      %v2386 = vsub.f32 %v2351, %v2378
      %v2387 = vmul.f32 %v2379, 1.442695
      %v2388 = vpow.pop %v2387
      %v2389 = vmul.f32 %v2380, 1.442695
      %v2390 = vpow.pop %v2389
      %v2391 = vmul.f32 %v2381, 1.442695
      %v2392 = vpow.pop %v2391
      %v2393 = vmul.f32 %v2382, 1.442695
      %v2394 = vpow.pop %v2393
      %v2395 = vmul.f32 %v2383, 1.442695
      %v2396 = vpow.pop %v2395
      %v2397 = vmul.f32 %v2384, 1.442695
      %v2398 = vpow.pop %v2397
      %v2399 = vmul.f32 %v2385, 1.442695
      %v2400 = vpow.pop %v2399
      %v2401 = vmul.f32 %v2386, 1.442695
      %v2402 = vpow.pop %v2401
      %v2403 = vsel %vm2354, %v2388, 0.0
      %2404 = vadd.xlane.f32.xlu0 %v2403
      %v2405 = vpop.xlane.xlu0 %2404
      %v2406 = vsel %vm2354, %v2390, 0.0
      %2407 = vadd.xlane.f32.xlu0 %v2406
      %v2408 = vpop.xlane.xlu0 %2407
      %v2409 = vsel %vm2354, %v2392, 0.0
      %2410 = vadd.xlane.f32.xlu0 %v2409
      %v2411 = vpop.xlane.xlu0 %2410
      %v2412 = vsel %vm2354, %v2394, 0.0
      %2413 = vadd.xlane.f32.xlu0 %v2412
      %v2414 = vpop.xlane.xlu0 %2413
      %v2415 = vsel %vm2354, %v2396, 0.0
      %2416 = vadd.xlane.f32.xlu0 %v2415
      %v2417 = vpop.xlane.xlu0 %2416
      %v2418 = vsel %vm2354, %v2398, 0.0
      %2419 = vadd.xlane.f32.xlu0 %v2418
      %v2420 = vpop.xlane.xlu0 %2419
      %v2421 = vsel %vm2354, %v2400, 0.0
      %2422 = vadd.xlane.f32.xlu0 %v2421
      %v2423 = vpop.xlane.xlu0 %2422
      %v2424 = vsel %vm2354, %v2402, 0.0
      %2425 = vadd.xlane.f32.xlu0 %v2424
      %v2426 = vpop.xlane.xlu0 %2425
      %v2427 = vrcp.pop %v2405
      %v2428 = vrcp.pop %v2408
      %v2429 = vrcp.pop %v2411
      %v2430 = vrcp.pop %v2414
      %v2431 = vrcp.pop %v2417
      %v2432 = vrcp.pop %v2420
      %v2433 = vrcp.pop %v2423
      %v2434 = vrcp.pop %v2426
      %v2435 = vmul.f32 %v2388, %v2427
      %v2436 = vmul.f32 %v2390, %v2428
      %v2437 = vmul.f32 %v2392, %v2429
      %v2438 = vmul.f32 %v2394, %v2430
      %v2439 = vmul.f32 %v2396, %v2431
      %v2440 = vmul.f32 %v2398, %v2432
      %v2441 = vmul.f32 %v2400, %v2433
      %v2442 = vmul.f32 %v2402, %v2434
      %v2443 = vpack.c.bf16 %v2435, %v2435
      %v2444 = vpack.c.bf16 %v2436, %v2436
      %v2445 = vpack.c.bf16 %v2437, %v2437
      %v2446 = vpack.c.bf16 %v2438, %v2438
      %v2447 = vpack.c.bf16 %v2439, %v2439
      %v2448 = vpack.c.bf16 %v2440, %v2440
      %v2449 = vpack.c.bf16 %v2441, %v2441
      %v2450 = vpack.c.bf16 %v2442, %v2442
      %v2452 = vsel %vm2354, %v2443, 0
      %v2455 = vsel %vm1162, %v2193, 0
      %2457 = vmatpush.bf16.msra.mxu0 0
      %2458 = vmatpush.bf16.msra.mxu0 0
      %2459 = vmatpush.bf16.msra.mxu0 0
      %2460 = vmatpush.bf16.msra.mxu0 0
      %2461 = vmatpush.bf16.msra.mxu0 0
      %2462 = vmatpush.bf16.msra.mxu0 0
      %2463 = vmatpush.bf16.msra.mxu0 0
      %2464 = vmatpush.bf16.msra.mxu0 %v2455
      %2465 = vmatmul.bf16.gmra.mxu0 %v2452
      %v2466 = vpop.f32.mrf.mxu0
      %v2467 = vadd.f32 0.0, %v2466
      %v2468 = vpop.f32.mrf.mxu0
      %2469 = vdwg.mxu0
      %v2471 = vsel %vm2354, %v2444, 0
      %v2474 = vsel %vm1162, %v2194, 0
      %2476 = vmatpush.bf16.msra.mxu0 0
      %2477 = vmatpush.bf16.msra.mxu0 0
      %2478 = vmatpush.bf16.msra.mxu0 0
      %2479 = vmatpush.bf16.msra.mxu0 0
      %2480 = vmatpush.bf16.msra.mxu0 0
      %2481 = vmatpush.bf16.msra.mxu0 0
      %2482 = vmatpush.bf16.msra.mxu0 0
      %2483 = vmatpush.bf16.msra.mxu0 %v2474
      %2484 = vmatmul.bf16.gmra.mxu0 %v2471
      %v2485 = vpop.f32.mrf.mxu0
      %v2486 = vadd.f32 0.0, %v2485
      %v2487 = vpop.f32.mrf.mxu0
      %2488 = vdwg.mxu0
      %v2490 = vsel %vm2354, %v2445, 0
      %v2493 = vsel %vm1162, %v2195, 0
      %2495 = vmatpush.bf16.msra.mxu0 0
      %2496 = vmatpush.bf16.msra.mxu0 0
      %2497 = vmatpush.bf16.msra.mxu0 0
      %2498 = vmatpush.bf16.msra.mxu0 0
      %2499 = vmatpush.bf16.msra.mxu0 0
      %2500 = vmatpush.bf16.msra.mxu0 0
      %2501 = vmatpush.bf16.msra.mxu0 0
      %2502 = vmatpush.bf16.msra.mxu0 %v2493
      %2503 = vmatmul.bf16.gmra.mxu0 %v2490
      %v2504 = vpop.f32.mrf.mxu0
      %v2505 = vadd.f32 0.0, %v2504
      %v2506 = vpop.f32.mrf.mxu0
      %2507 = vdwg.mxu0
      %v2509 = vsel %vm2354, %v2446, 0
      %v2512 = vsel %vm1162, %v2196, 0
      %2514 = vmatpush.bf16.msra.mxu0 0
      %2515 = vmatpush.bf16.msra.mxu0 0
      %2516 = vmatpush.bf16.msra.mxu0 0
      %2517 = vmatpush.bf16.msra.mxu0 0
      %2518 = vmatpush.bf16.msra.mxu0 0
      %2519 = vmatpush.bf16.msra.mxu0 0
      %2520 = vmatpush.bf16.msra.mxu0 0
      %2521 = vmatpush.bf16.msra.mxu0 %v2512
      %2522 = vmatmul.bf16.gmra.mxu0 %v2509
      %v2523 = vpop.f32.mrf.mxu0
      %v2524 = vadd.f32 0.0, %v2523
      %v2525 = vpop.f32.mrf.mxu0
      %2526 = vdwg.mxu0
      %v2528 = vsel %vm2354, %v2447, 0
      %v2531 = vsel %vm1162, %v2197, 0
      %2533 = vmatpush.bf16.msra.mxu0 0
      %2534 = vmatpush.bf16.msra.mxu0 0
      %2535 = vmatpush.bf16.msra.mxu0 0
      %2536 = vmatpush.bf16.msra.mxu0 0
      %2537 = vmatpush.bf16.msra.mxu0 0
      %2538 = vmatpush.bf16.msra.mxu0 0
      %2539 = vmatpush.bf16.msra.mxu0 0
      %2540 = vmatpush.bf16.msra.mxu0 %v2531
      %2541 = vmatmul.bf16.gmra.mxu0 %v2528
      %v2542 = vpop.f32.mrf.mxu0
      %v2543 = vadd.f32 0.0, %v2542
      %v2544 = vpop.f32.mrf.mxu0
      %2545 = vdwg.mxu0
      %v2547 = vsel %vm2354, %v2448, 0
      %v2550 = vsel %vm1162, %v2198, 0
      %2552 = vmatpush.bf16.msra.mxu0 0
      %2553 = vmatpush.bf16.msra.mxu0 0
      %2554 = vmatpush.bf16.msra.mxu0 0
      %2555 = vmatpush.bf16.msra.mxu0 0
      %2556 = vmatpush.bf16.msra.mxu0 0
      %2557 = vmatpush.bf16.msra.mxu0 0
      %2558 = vmatpush.bf16.msra.mxu0 0
      %2559 = vmatpush.bf16.msra.mxu0 %v2550
      %2560 = vmatmul.bf16.gmra.mxu0 %v2547
      %v2561 = vpop.f32.mrf.mxu0
      %v2562 = vadd.f32 0.0, %v2561
      %v2563 = vpop.f32.mrf.mxu0
      %2564 = vdwg.mxu0
      %v2566 = vsel %vm2354, %v2449, 0
      %v2569 = vsel %vm1162, %v2199, 0
      %2571 = vmatpush.bf16.msra.mxu0 0
      %2572 = vmatpush.bf16.msra.mxu0 0
      %2573 = vmatpush.bf16.msra.mxu0 0
      %2574 = vmatpush.bf16.msra.mxu0 0
      %2575 = vmatpush.bf16.msra.mxu0 0
      %2576 = vmatpush.bf16.msra.mxu0 0
      %2577 = vmatpush.bf16.msra.mxu0 0
      %2578 = vmatpush.bf16.msra.mxu0 %v2569
      %2579 = vmatmul.bf16.gmra.mxu0 %v2566
      %v2580 = vpop.f32.mrf.mxu0
      %v2581 = vadd.f32 0.0, %v2580
      %v2582 = vpop.f32.mrf.mxu0
      %2583 = vdwg.mxu0
      %v2585 = vsel %vm2354, %v2450, 0
      %v2588 = vsel %vm1162, %v2200, 0
      %2590 = vmatpush.bf16.msra.mxu0 0
      %2591 = vmatpush.bf16.msra.mxu0 0
      %2592 = vmatpush.bf16.msra.mxu0 0
      %2593 = vmatpush.bf16.msra.mxu0 0
      %2594 = vmatpush.bf16.msra.mxu0 0
      %2595 = vmatpush.bf16.msra.mxu0 0
      %2596 = vmatpush.bf16.msra.mxu0 0
      %2597 = vmatpush.bf16.msra.mxu0 %v2588
      %2598 = vmatmul.bf16.gmra.mxu0 %v2585
      %v2599 = vpop.f32.mrf.mxu0
      %v2600 = vadd.f32 0.0, %v2599
      %v2601 = vpop.f32.mrf.mxu0
      %2602 = vdwg.mxu0
      %2604 = vrot.lane.b32.xlu0 %v2486, 16
      %v2605 = vpop.permute.xlu0 %2604
      %2608 = vrot.lane.b32.xlu0 %v2505, 32
      %v2609 = vpop.permute.xlu0 %2608
      %2612 = vrot.lane.b32.xlu0 %v2524, 48
      %v2613 = vpop.permute.xlu0 %2612
      %2616 = vrot.lane.b32.xlu0 %v2543, 64
      %v2617 = vpop.permute.xlu0 %2616
      %2620 = vrot.lane.b32.xlu0 %v2562, 80
      %v2621 = vpop.permute.xlu0 %2620
      %2624 = vrot.lane.b32.xlu0 %v2581, 96
      %v2625 = vpop.permute.xlu0 %2624
      %2628 = vrot.lane.b32.xlu0 %v2600, 112
      %v2629 = vpop.permute.xlu0 %2628
      %v2631 = vsel %vm2201, %v2467, %v2605
      %vm2632 = vcmask 261120
      %v2633 = vsel %vm2632, %v2631, %v2609
      %vm2634 = vcmask 392192
      %v2635 = vsel %vm2634, %v2633, %v2613
      %vm2636 = vcmask 523264
      %v2637 = vsel %vm2636, %v2635, %v2617
      %vm2638 = vcmask 654336
      %v2639 = vsel %vm2638, %v2637, %v2621
      %vm2640 = vcmask 785408
      %v2641 = vsel %vm2640, %v2639, %v2625
      %vm2642 = vcmask 916480
      %v2643 = vsel %vm2642, %v2641, %v2629
      %v2644 = vpack.c.bf16 %v2643, %v2643
      %v2645 = vld [vmem:[%s8] sm:$0xf]
      %v2646 = vld [vmem:[%s8 + $0x4] sm:$0xf]
      %v2647 = vld [vmem:[%s8 + $0x8] sm:$0xf]
      %v2648 = vld [vmem:[%s8 + $0xc] sm:$0xf]
      %v2649 = vld [vmem:[%s8 + $0x10] sm:$0xf]
      %v2650 = vld [vmem:[%s8 + $0x14] sm:$0xf]
      %v2651 = vld [vmem:[%s8 + $0x18] sm:$0xf]
      %v2652 = vld [vmem:[%s8 + $0x1c] sm:$0xf]
      %v2653 = vld [vmem:[%s8 + $0x20] sm:$0xf]
      %v2654 = vld [vmem:[%s8 + $0x24] sm:$0xf]
      %v2655 = vld [vmem:[%s8 + $0x28] sm:$0xf]
      %v2656 = vld [vmem:[%s8 + $0x2c] sm:$0xf]
      %v2657 = vld [vmem:[%s8 + $0x30] sm:$0xf]
      %v2658 = vld [vmem:[%s8 + $0x34] sm:$0xf]
      %v2659 = vld [vmem:[%s8 + $0x38] sm:$0xf]
      %v2660 = vld [vmem:[%s8 + $0x3c] sm:$0xf]
      %v2661 = vld [vmem:[%s9] sm:$0x1]
      %v2663 = vperm.slane %v2661, 0
      %v2681 = vunpack.c.l.b16 %v2645
      %v2682 = vunpack.c.l.b16 %v2646
      %v2683 = vunpack.c.l.b16 %v2647
      %v2684 = vunpack.c.l.b16 %v2648
      %v2685 = vunpack.c.l.b16 %v2649
      %v2686 = vunpack.c.l.b16 %v2650
      %v2687 = vunpack.c.l.b16 %v2651
      %v2688 = vunpack.c.l.b16 %v2652
      %v2689 = vunpack.c.l.b16 %v2653
      %v2690 = vunpack.c.l.b16 %v2654
      %v2691 = vunpack.c.l.b16 %v2655
      %v2692 = vunpack.c.l.b16 %v2656
      %v2693 = vunpack.c.l.b16 %v2657
      %v2694 = vunpack.c.l.b16 %v2658
      %v2695 = vunpack.c.l.b16 %v2659
      %v2696 = vunpack.c.l.b16 %v2660
      %v2697 = vpack.c.b16 %v2682, %v2681
      %v2698 = vpack.c.b16 %v2684, %v2683
      %v2699 = vpack.c.b16 %v2686, %v2685
      %v2700 = vpack.c.b16 %v2688, %v2687
      %v2701 = vpack.c.b16 %v2690, %v2689
      %v2702 = vpack.c.b16 %v2692, %v2691
      %v2703 = vpack.c.b16 %v2694, %v2693
      %v2704 = vpack.c.b16 %v2696, %v2695
      %2713 = vmatpush.bf16.msra.mxu0 %v2704
      %2714 = vmatpush.bf16.msra.mxu0 %v2703
      %2715 = vmatpush.bf16.msra.mxu0 %v2702
      %2716 = vmatpush.bf16.msra.mxu0 %v2701
      %2717 = vmatpush.bf16.msra.mxu0 %v2700
      %2718 = vmatpush.bf16.msra.mxu0 %v2699
      %2719 = vmatpush.bf16.msra.mxu0 %v2698
      %2720 = vmatpush.bf16.msra.mxu0 %v2697
      %2721 = vmatmul.bf16.gmra.mxu0 %v2644
      %v2722 = vpop.f32.mrf.mxu0
      %v2723 = vadd.f32 %v2663, %v2722
      %v2724 = vpop.f32.mrf.mxu0
      %2725 = vdwg.mxu0
      %v2726 = vadd.f32 %v1898, %v2723
      %v2727 = vld [vmem:[%s14] sm:$0x1]
      %v2728 = vld [vmem:[%s14 + $0x1] sm:$0x1]
      %2729 = vadd.xlane.f32.xlu0 %v2726
      %v2730 = vpop.xlane.xlu0 %2729
      %v2731 = vrcp.pop 128.0
      %v2732 = vmul.f32 128.0, %v2731
      %v2733 = vsub.f32 1.0, %v2732
      %v2734 = vmul.f32 %v2731, %v2733
      %v2735 = vadd.f32 %v2731, %v2734
      %vm2736 = vweird.f32 %v2731
      %v2737 = vsel %vm2736, %v2731, %v2735
      %v2738 = vmul.f32 %v2730, %v2737
      %v2739 = vsub.f32 %v2726, %v2738
      %v2740 = vmul.f32 %v2739, %v2739
      %2741 = vadd.xlane.f32.xlu0 %v2740
      %v2742 = vpop.xlane.xlu0 %2741
      %v2743 = vmul.f32 %v2742, %v2737
      %v2744 = vadd.f32 %v2743, 1e-05
      %v2745 = vrsqrt.pop %v2744
      %v2746 = vmul.f32 %v2745, %v2744
      %v2747 = vmul.f32 %v2746, %v2745
      %v2748 = vmul.f32 0.5, %v2747
      %v2749 = vsub.f32 1.5, %v2748
      %v2750 = vmul.f32 %v2745, %v2749
      %vm2751 = vweird.f32 %v2744
      %vm2752 = vweird.f32 %v2745
      %vm2753 = vmor %vm2751, %vm2752
      %v2754 = vsel %vm2753, %v2745, %v2750
      %v2755 = vmul.f32 %v2739, %v2754
      %v2756 = vperm.slane %v2727, 0
      %v2757 = vmul.f32 %v2755, %v2756
      %v2758 = vperm.slane %v2728, 0
      %v2759 = vadd.f32 %v2757, %v2758
      %v2760 = vpack.c.bf16 %v2759, %v2759
      %v2761 = vld [vmem:[%s10] sm:$0xff]
      %v2762 = vld [vmem:[%s10 + $0x8] sm:$0xff]
      %v2763 = vld [vmem:[%s10 + $0x10] sm:$0xff]
      %v2764 = vld [vmem:[%s10 + $0x18] sm:$0xff]
      %v2765 = vld [vmem:[%s10 + $0x20] sm:$0xff]
      %v2766 = vld [vmem:[%s10 + $0x28] sm:$0xff]
      %v2767 = vld [vmem:[%s10 + $0x30] sm:$0xff]
      %v2768 = vld [vmem:[%s10 + $0x38] sm:$0xff]
      %v2769 = vld [vmem:[%s10 + $0x40] sm:$0xff]
      %v2770 = vld [vmem:[%s10 + $0x48] sm:$0xff]
      %v2771 = vld [vmem:[%s10 + $0x50] sm:$0xff]
      %v2772 = vld [vmem:[%s10 + $0x58] sm:$0xff]
      %v2773 = vld [vmem:[%s10 + $0x60] sm:$0xff]
      %v2774 = vld [vmem:[%s10 + $0x68] sm:$0xff]
      %v2775 = vld [vmem:[%s10 + $0x70] sm:$0xff]
      %v2776 = vld [vmem:[%s10 + $0x78] sm:$0xff]
      %v2777 = vld [vmem:[%s10 + $0x80] sm:$0xff]
      %v2778 = vld [vmem:[%s10 + $0x88] sm:$0xff]
      %v2779 = vld [vmem:[%s10 + $0x90] sm:$0xff]
      %v2780 = vld [vmem:[%s10 + $0x98] sm:$0xff]
      %v2781 = vld [vmem:[%s10 + $0xa0] sm:$0xff]
      %v2782 = vld [vmem:[%s10 + $0xa8] sm:$0xff]
      %v2783 = vld [vmem:[%s10 + $0xb0] sm:$0xff]
      %v2784 = vld [vmem:[%s10 + $0xb8] sm:$0xff]
      %v2785 = vld [vmem:[%s10 + $0xc0] sm:$0xff]
      %v2786 = vld [vmem:[%s10 + $0xc8] sm:$0xff]
      %v2787 = vld [vmem:[%s10 + $0xd0] sm:$0xff]
      %v2788 = vld [vmem:[%s10 + $0xd8] sm:$0xff]
      %v2789 = vld [vmem:[%s10 + $0xe0] sm:$0xff]
      %v2790 = vld [vmem:[%s10 + $0xe8] sm:$0xff]
      %v2791 = vld [vmem:[%s10 + $0xf0] sm:$0xff]
      %v2792 = vld [vmem:[%s10 + $0xf8] sm:$0xff]
      %v2793 = vld [vmem:[%s11] sm:$0xf]
      %v2795 = vperm.slane %v2793, 0
      %v2796 = vperm.slane %v2793, 1
      %v2797 = vperm.slane %v2793, 2
      %v2798 = vperm.slane %v2793, 3
      %v2835 = vunpack.c.l.b16 %v2761
      %v2836 = vunpack.c.h.b16 %v2761
      %v2837 = vunpack.c.l.b16 %v2762
      %v2838 = vunpack.c.h.b16 %v2762
      %v2839 = vunpack.c.l.b16 %v2763
      %v2840 = vunpack.c.h.b16 %v2763
      %v2841 = vunpack.c.l.b16 %v2764
      %v2842 = vunpack.c.h.b16 %v2764
      %v2843 = vunpack.c.l.b16 %v2765
      %v2844 = vunpack.c.h.b16 %v2765
      %v2845 = vunpack.c.l.b16 %v2766
      %v2846 = vunpack.c.h.b16 %v2766
      %v2847 = vunpack.c.l.b16 %v2767
      %v2848 = vunpack.c.h.b16 %v2767
      %v2849 = vunpack.c.l.b16 %v2768
      %v2850 = vunpack.c.h.b16 %v2768
      %v2851 = vunpack.c.l.b16 %v2769
      %v2852 = vunpack.c.h.b16 %v2769
      %v2853 = vunpack.c.l.b16 %v2770
      %v2854 = vunpack.c.h.b16 %v2770
      %v2855 = vunpack.c.l.b16 %v2771
      %v2856 = vunpack.c.h.b16 %v2771
      %v2857 = vunpack.c.l.b16 %v2772
      %v2858 = vunpack.c.h.b16 %v2772
      %v2859 = vunpack.c.l.b16 %v2773
      %v2860 = vunpack.c.h.b16 %v2773
      %v2861 = vunpack.c.l.b16 %v2774
      %v2862 = vunpack.c.h.b16 %v2774
      %v2863 = vunpack.c.l.b16 %v2775
      %v2864 = vunpack.c.h.b16 %v2775
      %v2865 = vunpack.c.l.b16 %v2776
      %v2866 = vunpack.c.h.b16 %v2776
      %v2867 = vunpack.c.l.b16 %v2777
      %v2868 = vunpack.c.h.b16 %v2777
      %v2869 = vunpack.c.l.b16 %v2778
      %v2870 = vunpack.c.h.b16 %v2778
      %v2871 = vunpack.c.l.b16 %v2779
      %v2872 = vunpack.c.h.b16 %v2779
      %v2873 = vunpack.c.l.b16 %v2780
      %v2874 = vunpack.c.h.b16 %v2780
      %v2875 = vunpack.c.l.b16 %v2781
      %v2876 = vunpack.c.h.b16 %v2781
      %v2877 = vunpack.c.l.b16 %v2782
      %v2878 = vunpack.c.h.b16 %v2782
      %v2879 = vunpack.c.l.b16 %v2783
      %v2880 = vunpack.c.h.b16 %v2783
      %v2881 = vunpack.c.l.b16 %v2784
      %v2882 = vunpack.c.h.b16 %v2784
      %v2883 = vunpack.c.l.b16 %v2785
      %v2884 = vunpack.c.h.b16 %v2785
      %v2885 = vunpack.c.l.b16 %v2786
      %v2886 = vunpack.c.h.b16 %v2786
      %v2887 = vunpack.c.l.b16 %v2787
      %v2888 = vunpack.c.h.b16 %v2787
      %v2889 = vunpack.c.l.b16 %v2788
      %v2890 = vunpack.c.h.b16 %v2788
      %v2891 = vunpack.c.l.b16 %v2789
      %v2892 = vunpack.c.h.b16 %v2789
      %v2893 = vunpack.c.l.b16 %v2790
      %v2894 = vunpack.c.h.b16 %v2790
      %v2895 = vunpack.c.l.b16 %v2791
      %v2896 = vunpack.c.h.b16 %v2791
      %v2897 = vunpack.c.l.b16 %v2792
      %v2898 = vunpack.c.h.b16 %v2792
      %v2899 = vpack.c.b16 %v2839, %v2835
      %v2900 = vpack.c.b16 %v2840, %v2836
      %v2901 = vpack.c.b16 %v2841, %v2837
      %v2902 = vpack.c.b16 %v2842, %v2838
      %v2903 = vpack.c.b16 %v2847, %v2843
      %v2904 = vpack.c.b16 %v2848, %v2844
      %v2905 = vpack.c.b16 %v2849, %v2845
      %v2906 = vpack.c.b16 %v2850, %v2846
      %v2907 = vpack.c.b16 %v2855, %v2851
      %v2908 = vpack.c.b16 %v2856, %v2852
      %v2909 = vpack.c.b16 %v2857, %v2853
      %v2910 = vpack.c.b16 %v2858, %v2854
      %v2911 = vpack.c.b16 %v2863, %v2859
      %v2912 = vpack.c.b16 %v2864, %v2860
      %v2913 = vpack.c.b16 %v2865, %v2861
      %v2914 = vpack.c.b16 %v2866, %v2862
      %v2915 = vpack.c.b16 %v2871, %v2867
      %v2916 = vpack.c.b16 %v2872, %v2868
      %v2917 = vpack.c.b16 %v2873, %v2869
      %v2918 = vpack.c.b16 %v2874, %v2870
      %v2919 = vpack.c.b16 %v2879, %v2875
      %v2920 = vpack.c.b16 %v2880, %v2876
      %v2921 = vpack.c.b16 %v2881, %v2877
      %v2922 = vpack.c.b16 %v2882, %v2878
      %v2923 = vpack.c.b16 %v2887, %v2883
      %v2924 = vpack.c.b16 %v2888, %v2884
      %v2925 = vpack.c.b16 %v2889, %v2885
      %v2926 = vpack.c.b16 %v2890, %v2886
      %v2927 = vpack.c.b16 %v2895, %v2891
      %v2928 = vpack.c.b16 %v2896, %v2892
      %v2929 = vpack.c.b16 %v2897, %v2893
      %v2930 = vpack.c.b16 %v2898, %v2894
      %2963 = vmatpush.bf16.msra.mxu0 %v2927
      %2964 = vmatpush.bf16.msra.mxu0 %v2923
      %2965 = vmatpush.bf16.msra.mxu0 %v2919
      %2966 = vmatpush.bf16.msra.mxu0 %v2915
      %2967 = vmatpush.bf16.msra.mxu0 %v2911
      %2968 = vmatpush.bf16.msra.mxu0 %v2907
      %2969 = vmatpush.bf16.msra.mxu0 %v2903
      %2970 = vmatpush.bf16.msra.mxu0 %v2899
      %2971 = vmatmul.bf16.gmra.mxu0 %v2760
      %v2972 = vpop.f32.mrf.mxu0
      %v2973 = vadd.f32 %v2795, %v2972
      %v2974 = vpop.f32.mrf.mxu0
      %2975 = vdwg.mxu0
      %2976 = vmatpush.bf16.msra.mxu0 %v2928
      %2977 = vmatpush.bf16.msra.mxu0 %v2924
      %2978 = vmatpush.bf16.msra.mxu0 %v2920
      %2979 = vmatpush.bf16.msra.mxu0 %v2916
      %2980 = vmatpush.bf16.msra.mxu0 %v2912
      %2981 = vmatpush.bf16.msra.mxu0 %v2908
      %2982 = vmatpush.bf16.msra.mxu0 %v2904
      %2983 = vmatpush.bf16.msra.mxu0 %v2900
      %2984 = vmatmul.bf16.gmra.mxu0 %v2760
      %v2985 = vpop.f32.mrf.mxu0
      %v2986 = vadd.f32 %v2796, %v2985
      %v2987 = vpop.f32.mrf.mxu0
      %2988 = vdwg.mxu0
      %2989 = vmatpush.bf16.msra.mxu0 %v2929
      %2990 = vmatpush.bf16.msra.mxu0 %v2925
      %2991 = vmatpush.bf16.msra.mxu0 %v2921
      %2992 = vmatpush.bf16.msra.mxu0 %v2917
      %2993 = vmatpush.bf16.msra.mxu0 %v2913
      %2994 = vmatpush.bf16.msra.mxu0 %v2909
      %2995 = vmatpush.bf16.msra.mxu0 %v2905
      %2996 = vmatpush.bf16.msra.mxu0 %v2901
      %2997 = vmatmul.bf16.gmra.mxu0 %v2760
      %v2998 = vpop.f32.mrf.mxu0
      %v2999 = vadd.f32 %v2797, %v2998
      %v3000 = vpop.f32.mrf.mxu0
      %3001 = vdwg.mxu0
      %3002 = vmatpush.bf16.msra.mxu0 %v2930
      %3003 = vmatpush.bf16.msra.mxu0 %v2926
      %3004 = vmatpush.bf16.msra.mxu0 %v2922
      %3005 = vmatpush.bf16.msra.mxu0 %v2918
      %3006 = vmatpush.bf16.msra.mxu0 %v2914
      %3007 = vmatpush.bf16.msra.mxu0 %v2910
      %3008 = vmatpush.bf16.msra.mxu0 %v2906
      %3009 = vmatpush.bf16.msra.mxu0 %v2902
      %3010 = vmatmul.bf16.gmra.mxu0 %v2760
      %v3011 = vpop.f32.mrf.mxu0
      %v3012 = vadd.f32 %v2798, %v3011
      %v3013 = vpop.f32.mrf.mxu0
      %3014 = vdwg.mxu0
      %v3015 = vmax.f32 %v2973, 0.0
      %v3016 = vmax.f32 %v2986, 0.0
      %v3017 = vmax.f32 %v2999, 0.0
      %v3018 = vmax.f32 %v3012, 0.0
      %v3019 = vpack.c.bf16 %v3015, %v3015
      %v3020 = vpack.c.bf16 %v3016, %v3016
      %v3021 = vpack.c.bf16 %v3017, %v3017
      %v3022 = vpack.c.bf16 %v3018, %v3018
      %v3023 = vld [vmem:[%s12] sm:$0xf]
      %v3024 = vld [vmem:[%s12 + $0x4] sm:$0xf]
      %v3025 = vld [vmem:[%s12 + $0x8] sm:$0xf]
      %v3026 = vld [vmem:[%s12 + $0xc] sm:$0xf]
      %v3027 = vld [vmem:[%s12 + $0x10] sm:$0xf]
      %v3028 = vld [vmem:[%s12 + $0x14] sm:$0xf]
      %v3029 = vld [vmem:[%s12 + $0x18] sm:$0xf]
      %v3030 = vld [vmem:[%s12 + $0x1c] sm:$0xf]
      %v3031 = vld [vmem:[%s12 + $0x20] sm:$0xf]
      %v3032 = vld [vmem:[%s12 + $0x24] sm:$0xf]
      %v3033 = vld [vmem:[%s12 + $0x28] sm:$0xf]
      %v3034 = vld [vmem:[%s12 + $0x2c] sm:$0xf]
      %v3035 = vld [vmem:[%s12 + $0x30] sm:$0xf]
      %v3036 = vld [vmem:[%s12 + $0x34] sm:$0xf]
      %v3037 = vld [vmem:[%s12 + $0x38] sm:$0xf]
      %v3038 = vld [vmem:[%s12 + $0x3c] sm:$0xf]
      %v3039 = vld [vmem:[%s12 + $0x40] sm:$0xf]
      %v3040 = vld [vmem:[%s12 + $0x44] sm:$0xf]
      %v3041 = vld [vmem:[%s12 + $0x48] sm:$0xf]
      %v3042 = vld [vmem:[%s12 + $0x4c] sm:$0xf]
      %v3043 = vld [vmem:[%s12 + $0x50] sm:$0xf]
      %v3044 = vld [vmem:[%s12 + $0x54] sm:$0xf]
      %v3045 = vld [vmem:[%s12 + $0x58] sm:$0xf]
      %v3046 = vld [vmem:[%s12 + $0x5c] sm:$0xf]
      %v3047 = vld [vmem:[%s12 + $0x60] sm:$0xf]
      %v3048 = vld [vmem:[%s12 + $0x64] sm:$0xf]
      %v3049 = vld [vmem:[%s12 + $0x68] sm:$0xf]
      %v3050 = vld [vmem:[%s12 + $0x6c] sm:$0xf]
      %v3051 = vld [vmem:[%s12 + $0x70] sm:$0xf]
      %v3052 = vld [vmem:[%s12 + $0x74] sm:$0xf]
      %v3053 = vld [vmem:[%s12 + $0x78] sm:$0xf]
      %v3054 = vld [vmem:[%s12 + $0x7c] sm:$0xf]
      %v3055 = vld [vmem:[%s12 + $0x80] sm:$0xf]
      %v3056 = vld [vmem:[%s12 + $0x84] sm:$0xf]
      %v3057 = vld [vmem:[%s12 + $0x88] sm:$0xf]
      %v3058 = vld [vmem:[%s12 + $0x8c] sm:$0xf]
      %v3059 = vld [vmem:[%s12 + $0x90] sm:$0xf]
      %v3060 = vld [vmem:[%s12 + $0x94] sm:$0xf]
      %v3061 = vld [vmem:[%s12 + $0x98] sm:$0xf]
      %v3062 = vld [vmem:[%s12 + $0x9c] sm:$0xf]
      %v3063 = vld [vmem:[%s12 + $0xa0] sm:$0xf]
      %v3064 = vld [vmem:[%s12 + $0xa4] sm:$0xf]
      %v3065 = vld [vmem:[%s12 + $0xa8] sm:$0xf]
      %v3066 = vld [vmem:[%s12 + $0xac] sm:$0xf]
      %v3067 = vld [vmem:[%s12 + $0xb0] sm:$0xf]
      %v3068 = vld [vmem:[%s12 + $0xb4] sm:$0xf]
      %v3069 = vld [vmem:[%s12 + $0xb8] sm:$0xf]
      %v3070 = vld [vmem:[%s12 + $0xbc] sm:$0xf]
      %v3071 = vld [vmem:[%s12 + $0xc0] sm:$0xf]
      %v3072 = vld [vmem:[%s12 + $0xc4] sm:$0xf]
      %v3073 = vld [vmem:[%s12 + $0xc8] sm:$0xf]
      %v3074 = vld [vmem:[%s12 + $0xcc] sm:$0xf]
      %v3075 = vld [vmem:[%s12 + $0xd0] sm:$0xf]
      %v3076 = vld [vmem:[%s12 + $0xd4] sm:$0xf]
      %v3077 = vld [vmem:[%s12 + $0xd8] sm:$0xf]
      %v3078 = vld [vmem:[%s12 + $0xdc] sm:$0xf]
      %v3079 = vld [vmem:[%s12 + $0xe0] sm:$0xf]
      %v3080 = vld [vmem:[%s12 + $0xe4] sm:$0xf]
      %v3081 = vld [vmem:[%s12 + $0xe8] sm:$0xf]
      %v3082 = vld [vmem:[%s12 + $0xec] sm:$0xf]
      %v3083 = vld [vmem:[%s12 + $0xf0] sm:$0xf]
      %v3084 = vld [vmem:[%s12 + $0xf4] sm:$0xf]
      %v3085 = vld [vmem:[%s12 + $0xf8] sm:$0xf]
      %v3086 = vld [vmem:[%s12 + $0xfc] sm:$0xf]
      %v3087 = vld [vmem:[%s13] sm:$0x1]
      %v3089 = vperm.slane %v3087, 0
      %v3155 = vunpack.c.l.b16 %v3023
      %v3156 = vunpack.c.l.b16 %v3024
      %v3157 = vunpack.c.l.b16 %v3025
      %v3158 = vunpack.c.l.b16 %v3026
      %v3159 = vunpack.c.l.b16 %v3027
      %v3160 = vunpack.c.l.b16 %v3028
      %v3161 = vunpack.c.l.b16 %v3029
      %v3162 = vunpack.c.l.b16 %v3030
      %v3163 = vunpack.c.l.b16 %v3031
      %v3164 = vunpack.c.l.b16 %v3032
      %v3165 = vunpack.c.l.b16 %v3033
      %v3166 = vunpack.c.l.b16 %v3034
      %v3167 = vunpack.c.l.b16 %v3035
      %v3168 = vunpack.c.l.b16 %v3036
      %v3169 = vunpack.c.l.b16 %v3037
      %v3170 = vunpack.c.l.b16 %v3038
      %v3171 = vunpack.c.l.b16 %v3039
      %v3172 = vunpack.c.l.b16 %v3040
      %v3173 = vunpack.c.l.b16 %v3041
      %v3174 = vunpack.c.l.b16 %v3042
      %v3175 = vunpack.c.l.b16 %v3043
      %v3176 = vunpack.c.l.b16 %v3044
      %v3177 = vunpack.c.l.b16 %v3045
      %v3178 = vunpack.c.l.b16 %v3046
      %v3179 = vunpack.c.l.b16 %v3047
      %v3180 = vunpack.c.l.b16 %v3048
      %v3181 = vunpack.c.l.b16 %v3049
      %v3182 = vunpack.c.l.b16 %v3050
      %v3183 = vunpack.c.l.b16 %v3051
      %v3184 = vunpack.c.l.b16 %v3052
      %v3185 = vunpack.c.l.b16 %v3053
      %v3186 = vunpack.c.l.b16 %v3054
      %v3187 = vunpack.c.l.b16 %v3055
      %v3188 = vunpack.c.l.b16 %v3056
      %v3189 = vunpack.c.l.b16 %v3057
      %v3190 = vunpack.c.l.b16 %v3058
      %v3191 = vunpack.c.l.b16 %v3059
      %v3192 = vunpack.c.l.b16 %v3060
      %v3193 = vunpack.c.l.b16 %v3061
      %v3194 = vunpack.c.l.b16 %v3062
      %v3195 = vunpack.c.l.b16 %v3063
      %v3196 = vunpack.c.l.b16 %v3064
      %v3197 = vunpack.c.l.b16 %v3065
      %v3198 = vunpack.c.l.b16 %v3066
      %v3199 = vunpack.c.l.b16 %v3067
      %v3200 = vunpack.c.l.b16 %v3068
      %v3201 = vunpack.c.l.b16 %v3069
      %v3202 = vunpack.c.l.b16 %v3070
      %v3203 = vunpack.c.l.b16 %v3071
      %v3204 = vunpack.c.l.b16 %v3072
      %v3205 = vunpack.c.l.b16 %v3073
      %v3206 = vunpack.c.l.b16 %v3074
      %v3207 = vunpack.c.l.b16 %v3075
      %v3208 = vunpack.c.l.b16 %v3076
      %v3209 = vunpack.c.l.b16 %v3077
      %v3210 = vunpack.c.l.b16 %v3078
      %v3211 = vunpack.c.l.b16 %v3079
      %v3212 = vunpack.c.l.b16 %v3080
      %v3213 = vunpack.c.l.b16 %v3081
      %v3214 = vunpack.c.l.b16 %v3082
      %v3215 = vunpack.c.l.b16 %v3083
      %v3216 = vunpack.c.l.b16 %v3084
      %v3217 = vunpack.c.l.b16 %v3085
      %v3218 = vunpack.c.l.b16 %v3086
      %v3219 = vpack.c.b16 %v3156, %v3155
      %v3220 = vpack.c.b16 %v3158, %v3157
      %v3221 = vpack.c.b16 %v3160, %v3159
      %v3222 = vpack.c.b16 %v3162, %v3161
      %v3223 = vpack.c.b16 %v3164, %v3163
      %v3224 = vpack.c.b16 %v3166, %v3165
      %v3225 = vpack.c.b16 %v3168, %v3167
      %v3226 = vpack.c.b16 %v3170, %v3169
      %v3227 = vpack.c.b16 %v3172, %v3171
      %v3228 = vpack.c.b16 %v3174, %v3173
      %v3229 = vpack.c.b16 %v3176, %v3175
      %v3230 = vpack.c.b16 %v3178, %v3177
      %v3231 = vpack.c.b16 %v3180, %v3179
      %v3232 = vpack.c.b16 %v3182, %v3181
      %v3233 = vpack.c.b16 %v3184, %v3183
      %v3234 = vpack.c.b16 %v3186, %v3185
      %v3235 = vpack.c.b16 %v3188, %v3187
      %v3236 = vpack.c.b16 %v3190, %v3189
      %v3237 = vpack.c.b16 %v3192, %v3191
      %v3238 = vpack.c.b16 %v3194, %v3193
      %v3239 = vpack.c.b16 %v3196, %v3195
      %v3240 = vpack.c.b16 %v3198, %v3197
      %v3241 = vpack.c.b16 %v3200, %v3199
      %v3242 = vpack.c.b16 %v3202, %v3201
      %v3243 = vpack.c.b16 %v3204, %v3203
      %v3244 = vpack.c.b16 %v3206, %v3205
      %v3245 = vpack.c.b16 %v3208, %v3207
      %v3246 = vpack.c.b16 %v3210, %v3209
      %v3247 = vpack.c.b16 %v3212, %v3211
      %v3248 = vpack.c.b16 %v3214, %v3213
      %v3249 = vpack.c.b16 %v3216, %v3215
      %v3250 = vpack.c.b16 %v3218, %v3217
      %3283 = vmatpush.bf16.msra.mxu0 %v3226
      %3284 = vmatpush.bf16.msra.mxu0 %v3225
      %3285 = vmatpush.bf16.msra.mxu0 %v3224
      %3286 = vmatpush.bf16.msra.mxu0 %v3223
      %3287 = vmatpush.bf16.msra.mxu0 %v3222
      %3288 = vmatpush.bf16.msra.mxu0 %v3221
      %3289 = vmatpush.bf16.msra.mxu0 %v3220
      %3290 = vmatpush.bf16.msra.mxu0 %v3219
      %3291 = vmatmul.bf16.gmra.mxu0 %v3019
      %v3292 = vpop.f32.mrf.mxu0
      %v3293 = vadd.f32 %v3089, %v3292
      %v3294 = vpop.f32.mrf.mxu0
      %3295 = vdwg.mxu0
      %3296 = vmatpush.bf16.msra.mxu0 %v3234
      %3297 = vmatpush.bf16.msra.mxu0 %v3233
      %3298 = vmatpush.bf16.msra.mxu0 %v3232
      %3299 = vmatpush.bf16.msra.mxu0 %v3231
      %3300 = vmatpush.bf16.msra.mxu0 %v3230
      %3301 = vmatpush.bf16.msra.mxu0 %v3229
      %3302 = vmatpush.bf16.msra.mxu0 %v3228
      %3303 = vmatpush.bf16.msra.mxu0 %v3227
      %3304 = vmatmul.bf16.gmra.mxu0 %v3020
      %v3305 = vpop.f32.mrf.mxu0
      %v3306 = vadd.f32 %v3293, %v3305
      %v3307 = vpop.f32.mrf.mxu0
      %3308 = vdwg.mxu0
      %3309 = vmatpush.bf16.msra.mxu0 %v3242
      %3310 = vmatpush.bf16.msra.mxu0 %v3241
      %3311 = vmatpush.bf16.msra.mxu0 %v3240
      %3312 = vmatpush.bf16.msra.mxu0 %v3239
      %3313 = vmatpush.bf16.msra.mxu0 %v3238
      %3314 = vmatpush.bf16.msra.mxu0 %v3237
      %3315 = vmatpush.bf16.msra.mxu0 %v3236
      %3316 = vmatpush.bf16.msra.mxu0 %v3235
      %3317 = vmatmul.bf16.gmra.mxu0 %v3021
      %v3318 = vpop.f32.mrf.mxu0
      %v3319 = vadd.f32 %v3306, %v3318
      %v3320 = vpop.f32.mrf.mxu0
      %3321 = vdwg.mxu0
      %3322 = vmatpush.bf16.msra.mxu0 %v3250
      %3323 = vmatpush.bf16.msra.mxu0 %v3249
      %3324 = vmatpush.bf16.msra.mxu0 %v3248
      %3325 = vmatpush.bf16.msra.mxu0 %v3247
      %3326 = vmatpush.bf16.msra.mxu0 %v3246
      %3327 = vmatpush.bf16.msra.mxu0 %v3245
      %3328 = vmatpush.bf16.msra.mxu0 %v3244
      %3329 = vmatpush.bf16.msra.mxu0 %v3243
      %3330 = vmatmul.bf16.gmra.mxu0 %v3022
      %v3331 = vpop.f32.mrf.mxu0
      %v3332 = vadd.f32 %v3319, %v3331
      %v3333 = vpop.f32.mrf.mxu0
      %3334 = vdwg.mxu0
      %v3335 = vadd.f32 %v2759, %v3332
      %v3336 = vld [vmem:[%s14 + $0x2] sm:$0x1]
      %v3337 = vld [vmem:[%s14 + $0x3] sm:$0x1]
      %3338 = vadd.xlane.f32.xlu0 %v3335
      %v3339 = vpop.xlane.xlu0 %3338
      %v3340 = vmul.f32 %v3339, %v2737
      %v3341 = vsub.f32 %v3335, %v3340
      %v3342 = vmul.f32 %v3341, %v3341
      %3343 = vadd.xlane.f32.xlu0 %v3342
      %v3344 = vpop.xlane.xlu0 %3343
      %v3345 = vmul.f32 %v3344, %v2737
      %v3346 = vadd.f32 %v3345, 1e-05
      %v3347 = vrsqrt.pop %v3346
      %v3348 = vmul.f32 %v3347, %v3346
      %v3349 = vmul.f32 %v3348, %v3347
      %v3350 = vmul.f32 0.5, %v3349
      %v3351 = vsub.f32 1.5, %v3350
      %v3352 = vmul.f32 %v3347, %v3351
      %vm3353 = vweird.f32 %v3346
      %vm3354 = vweird.f32 %v3347
      %vm3355 = vmor %vm3353, %vm3354
      %v3356 = vsel %vm3355, %v3347, %v3352
      %v3357 = vmul.f32 %v3341, %v3356
      %v3358 = vperm.slane %v3336, 0
      %v3359 = vmul.f32 %v3357, %v3358
      %v3360 = vperm.slane %v3337, 0
      %v3361 = vadd.f32 %v3359, %v3360
      %v3362 = vpack.c.bf16 %v3361, %v3361
      %s3363 = scalar_lea.vmem %s6, 192
      %v3364 = vld [vmem:[%s3363] sm:$0xff]
      %v3365 = vld [vmem:[%s3363 + $0x8] sm:$0xf]
      %v3366 = vld [vmem:[%s3363 + $0xc] sm:$0xff]
      %v3367 = vld [vmem:[%s3363 + $0x14] sm:$0xf]
      %v3368 = vld [vmem:[%s3363 + $0x18] sm:$0xff]
      %v3369 = vld [vmem:[%s3363 + $0x20] sm:$0xf]
      %v3370 = vld [vmem:[%s3363 + $0x24] sm:$0xff]
      %v3371 = vld [vmem:[%s3363 + $0x2c] sm:$0xf]
      %v3372 = vld [vmem:[%s3363 + $0x30] sm:$0xff]
      %v3373 = vld [vmem:[%s3363 + $0x38] sm:$0xf]
      %v3374 = vld [vmem:[%s3363 + $0x3c] sm:$0xff]
      %v3375 = vld [vmem:[%s3363 + $0x44] sm:$0xf]
      %v3376 = vld [vmem:[%s3363 + $0x48] sm:$0xff]
      %v3377 = vld [vmem:[%s3363 + $0x50] sm:$0xf]
      %v3378 = vld [vmem:[%s3363 + $0x54] sm:$0xff]
      %v3379 = vld [vmem:[%s3363 + $0x5c] sm:$0xf]
      %v3380 = vld [vmem:[%s3363 + $0x60] sm:$0xff]
      %v3381 = vld [vmem:[%s3363 + $0x68] sm:$0xf]
      %v3382 = vld [vmem:[%s3363 + $0x6c] sm:$0xff]
      %v3383 = vld [vmem:[%s3363 + $0x74] sm:$0xf]
      %v3384 = vld [vmem:[%s3363 + $0x78] sm:$0xff]
      %v3385 = vld [vmem:[%s3363 + $0x80] sm:$0xf]
      %v3386 = vld [vmem:[%s3363 + $0x84] sm:$0xff]
      %v3387 = vld [vmem:[%s3363 + $0x8c] sm:$0xf]
      %v3388 = vld [vmem:[%s3363 + $0x90] sm:$0xff]
      %v3389 = vld [vmem:[%s3363 + $0x98] sm:$0xf]
      %v3390 = vld [vmem:[%s3363 + $0x9c] sm:$0xff]
      %v3391 = vld [vmem:[%s3363 + $0xa4] sm:$0xf]
      %v3392 = vld [vmem:[%s3363 + $0xa8] sm:$0xff]
      %v3393 = vld [vmem:[%s3363 + $0xb0] sm:$0xf]
      %v3394 = vld [vmem:[%s3363 + $0xb4] sm:$0xff]
      %v3395 = vld [vmem:[%s3363 + $0xbc] sm:$0xf]
      %s3396 = scalar_lea.vmem %s7, 3
      %v3397 = vld [vmem:[%s3396] sm:$0x7]
      %v3399 = vperm.slane %v3397, 0
      %v3400 = vperm.slane %v3397, 1
      %v3401 = vperm.slane %v3397, 2
      %v3437 = vunpack.c.l.b16 %v3364
      %v3438 = vunpack.c.h.b16 %v3364
      %v3439 = vunpack.c.l.b16 %v3365
      %v3440 = vunpack.c.l.b16 %v3366
      %v3441 = vunpack.c.h.b16 %v3366
      %v3442 = vunpack.c.l.b16 %v3367
      %v3443 = vunpack.c.l.b16 %v3368
      %v3444 = vunpack.c.h.b16 %v3368
      %v3445 = vunpack.c.l.b16 %v3369
      %v3446 = vunpack.c.l.b16 %v3370
      %v3447 = vunpack.c.h.b16 %v3370
      %v3448 = vunpack.c.l.b16 %v3371
      %v3449 = vunpack.c.l.b16 %v3372
      %v3450 = vunpack.c.h.b16 %v3372
      %v3451 = vunpack.c.l.b16 %v3373
      %v3452 = vunpack.c.l.b16 %v3374
      %v3453 = vunpack.c.h.b16 %v3374
      %v3454 = vunpack.c.l.b16 %v3375
      %v3455 = vunpack.c.l.b16 %v3376
      %v3456 = vunpack.c.h.b16 %v3376
      %v3457 = vunpack.c.l.b16 %v3377
      %v3458 = vunpack.c.l.b16 %v3378
      %v3459 = vunpack.c.h.b16 %v3378
      %v3460 = vunpack.c.l.b16 %v3379
      %v3461 = vunpack.c.l.b16 %v3380
      %v3462 = vunpack.c.h.b16 %v3380
      %v3463 = vunpack.c.l.b16 %v3381
      %v3464 = vunpack.c.l.b16 %v3382
      %v3465 = vunpack.c.h.b16 %v3382
      %v3466 = vunpack.c.l.b16 %v3383
      %v3467 = vunpack.c.l.b16 %v3384
      %v3468 = vunpack.c.h.b16 %v3384
      %v3469 = vunpack.c.l.b16 %v3385
      %v3470 = vunpack.c.l.b16 %v3386
      %v3471 = vunpack.c.h.b16 %v3386
      %v3472 = vunpack.c.l.b16 %v3387
      %v3473 = vunpack.c.l.b16 %v3388
      %v3474 = vunpack.c.h.b16 %v3388
      %v3475 = vunpack.c.l.b16 %v3389
      %v3476 = vunpack.c.l.b16 %v3390
      %v3477 = vunpack.c.h.b16 %v3390
      %v3478 = vunpack.c.l.b16 %v3391
      %v3479 = vunpack.c.l.b16 %v3392
      %v3480 = vunpack.c.h.b16 %v3392
      %v3481 = vunpack.c.l.b16 %v3393
      %v3482 = vunpack.c.l.b16 %v3394
      %v3483 = vunpack.c.h.b16 %v3394
      %v3484 = vunpack.c.l.b16 %v3395
      %v3485 = vpack.c.b16 %v3440, %v3437
      %v3486 = vpack.c.b16 %v3441, %v3438
      %v3487 = vpack.c.b16 %v3442, %v3439
      %v3488 = vpack.c.b16 %v3446, %v3443
      %v3489 = vpack.c.b16 %v3447, %v3444
      %v3490 = vpack.c.b16 %v3448, %v3445
      %v3491 = vpack.c.b16 %v3452, %v3449
      %v3492 = vpack.c.b16 %v3453, %v3450
      %v3493 = vpack.c.b16 %v3454, %v3451
      %v3494 = vpack.c.b16 %v3458, %v3455
      %v3495 = vpack.c.b16 %v3459, %v3456
      %v3496 = vpack.c.b16 %v3460, %v3457
      %v3497 = vpack.c.b16 %v3464, %v3461
      %v3498 = vpack.c.b16 %v3465, %v3462
      %v3499 = vpack.c.b16 %v3466, %v3463
      %v3500 = vpack.c.b16 %v3470, %v3467
      %v3501 = vpack.c.b16 %v3471, %v3468
      %v3502 = vpack.c.b16 %v3472, %v3469
      %v3503 = vpack.c.b16 %v3476, %v3473
      %v3504 = vpack.c.b16 %v3477, %v3474
      %v3505 = vpack.c.b16 %v3478, %v3475
      %v3506 = vpack.c.b16 %v3482, %v3479
      %v3507 = vpack.c.b16 %v3483, %v3480
      %v3508 = vpack.c.b16 %v3484, %v3481
      %3533 = vmatpush.bf16.msra.mxu0 %v3506
      %3534 = vmatpush.bf16.msra.mxu0 %v3503
      %3535 = vmatpush.bf16.msra.mxu0 %v3500
      %3536 = vmatpush.bf16.msra.mxu0 %v3497
      %3537 = vmatpush.bf16.msra.mxu0 %v3494
      %3538 = vmatpush.bf16.msra.mxu0 %v3491
      %3539 = vmatpush.bf16.msra.mxu0 %v3488
      %3540 = vmatpush.bf16.msra.mxu0 %v3485
      %3541 = vmatmul.bf16.gmra.mxu0 %v3362
      %v3542 = vpop.f32.mrf.mxu0
      %v3543 = vadd.f32 %v3399, %v3542
      %v3544 = vpop.f32.mrf.mxu0
      %3545 = vdwg.mxu0
      %3546 = vmatpush.bf16.msra.mxu0 %v3507
      %3547 = vmatpush.bf16.msra.mxu0 %v3504
      %3548 = vmatpush.bf16.msra.mxu0 %v3501
      %3549 = vmatpush.bf16.msra.mxu0 %v3498
      %3550 = vmatpush.bf16.msra.mxu0 %v3495
      %3551 = vmatpush.bf16.msra.mxu0 %v3492
      %3552 = vmatpush.bf16.msra.mxu0 %v3489
      %3553 = vmatpush.bf16.msra.mxu0 %v3486
      %3554 = vmatmul.bf16.gmra.mxu0 %v3362
      %v3555 = vpop.f32.mrf.mxu0
      %v3556 = vadd.f32 %v3400, %v3555
      %v3557 = vpop.f32.mrf.mxu0
      %3558 = vdwg.mxu0
      %3559 = vmatpush.bf16.msra.mxu0 %v3508
      %3560 = vmatpush.bf16.msra.mxu0 %v3505
      %3561 = vmatpush.bf16.msra.mxu0 %v3502
      %3562 = vmatpush.bf16.msra.mxu0 %v3499
      %3563 = vmatpush.bf16.msra.mxu0 %v3496
      %3564 = vmatpush.bf16.msra.mxu0 %v3493
      %3565 = vmatpush.bf16.msra.mxu0 %v3490
      %3566 = vmatpush.bf16.msra.mxu0 %v3487
      %3567 = vmatmul.bf16.gmra.mxu0 %v3362
      %v3568 = vpop.f32.mrf.mxu0
      %v3569 = vadd.f32 %v3401, %v3568
      %v3570 = vpop.f32.mrf.mxu0
      %3571 = vdwg.mxu0
      %3573 = vrot.lane.b32.xlu0 %v3543, 112
      %v3574 = vpop.permute.xlu0 %3573
      %3576 = vrot.lane.b32.xlu0 %v3543, 96
      %v3577 = vpop.permute.xlu0 %3576
      %3579 = vrot.lane.b32.xlu0 %v3543, 80
      %v3580 = vpop.permute.xlu0 %3579
      %3582 = vrot.lane.b32.xlu0 %v3543, 64
      %v3583 = vpop.permute.xlu0 %3582
      %3585 = vrot.lane.b32.xlu0 %v3543, 48
      %v3586 = vpop.permute.xlu0 %3585
      %3588 = vrot.lane.b32.xlu0 %v3543, 32
      %v3589 = vpop.permute.xlu0 %3588
      %3591 = vrot.lane.b32.xlu0 %v3543, 16
      %v3592 = vpop.permute.xlu0 %3591
      %v3594 = vpack.c.bf16 %v3543, %v3543
      %v3595 = vpack.c.bf16 %v3574, %v3574
      %v3596 = vpack.c.bf16 %v3577, %v3577
      %v3597 = vpack.c.bf16 %v3580, %v3580
      %v3598 = vpack.c.bf16 %v3583, %v3583
      %v3599 = vpack.c.bf16 %v3586, %v3586
      %v3600 = vpack.c.bf16 %v3589, %v3589
      %v3601 = vpack.c.bf16 %v3592, %v3592
      %3603 = vrot.lane.b32.xlu0 %v3556, 112
      %v3604 = vpop.permute.xlu0 %3603
      %3606 = vrot.lane.b32.xlu0 %v3556, 96
      %v3607 = vpop.permute.xlu0 %3606
      %3609 = vrot.lane.b32.xlu0 %v3556, 80
      %v3610 = vpop.permute.xlu0 %3609
      %3612 = vrot.lane.b32.xlu0 %v3556, 64
      %v3613 = vpop.permute.xlu0 %3612
      %3615 = vrot.lane.b32.xlu0 %v3556, 48
      %v3616 = vpop.permute.xlu0 %3615
      %3618 = vrot.lane.b32.xlu0 %v3556, 32
      %v3619 = vpop.permute.xlu0 %3618
      %3621 = vrot.lane.b32.xlu0 %v3556, 16
      %v3622 = vpop.permute.xlu0 %3621
      %v3624 = vpack.c.bf16 %v3556, %v3556
      %v3625 = vpack.c.bf16 %v3604, %v3604
      %v3626 = vpack.c.bf16 %v3607, %v3607
      %v3627 = vpack.c.bf16 %v3610, %v3610
      %v3628 = vpack.c.bf16 %v3613, %v3613
      %v3629 = vpack.c.bf16 %v3616, %v3616
      %v3630 = vpack.c.bf16 %v3619, %v3619
      %v3631 = vpack.c.bf16 %v3622, %v3622
      %3633 = vrot.lane.b32.xlu0 %v3569, 112
      %v3634 = vpop.permute.xlu0 %3633
      %3636 = vrot.lane.b32.xlu0 %v3569, 96
      %v3637 = vpop.permute.xlu0 %3636
      %3639 = vrot.lane.b32.xlu0 %v3569, 80
      %v3640 = vpop.permute.xlu0 %3639
      %3642 = vrot.lane.b32.xlu0 %v3569, 64
      %v3643 = vpop.permute.xlu0 %3642
      %3645 = vrot.lane.b32.xlu0 %v3569, 48
      %v3646 = vpop.permute.xlu0 %3645
      %3648 = vrot.lane.b32.xlu0 %v3569, 32
      %v3649 = vpop.permute.xlu0 %3648
      %3651 = vrot.lane.b32.xlu0 %v3569, 16
      %v3652 = vpop.permute.xlu0 %3651
      %v3654 = vpack.c.bf16 %v3569, %v3569
      %v3655 = vpack.c.bf16 %v3634, %v3634
      %v3656 = vpack.c.bf16 %v3637, %v3637
      %v3657 = vpack.c.bf16 %v3640, %v3640
      %v3658 = vpack.c.bf16 %v3643, %v3643
      %v3659 = vpack.c.bf16 %v3646, %v3646
      %v3660 = vpack.c.bf16 %v3649, %v3649
      %v3661 = vpack.c.bf16 %v3652, %v3652
      %v3663 = vsel %vm2201, %v3594, 0
      %v3666 = vsel %vm2201, %v3624, 0
      %3668 = vmatpush.bf16.xpose.msra.mxu0 0
      %3669 = vmatpush.bf16.xpose.msra.mxu0 0
      %3670 = vmatpush.bf16.xpose.msra.mxu0 0
      %3671 = vmatpush.bf16.xpose.msra.mxu0 0
      %3672 = vmatpush.bf16.xpose.msra.mxu0 0
      %3673 = vmatpush.bf16.xpose.msra.mxu0 0
      %3674 = vmatpush.bf16.xpose.msra.mxu0 0
      %3675 = vmatpush.bf16.xpose.msra.mxu0 %v3666
      %3676 = vmatmul.bf16.gmra.mxu0 %v3663
      %v3677 = vpop.f32.mrf.mxu0
      %v3678 = vadd.f32 %v1902, %v3677
      %v3679 = vpop.f32.mrf.mxu0
      %3680 = vdwg.mxu0
      %v3682 = vsel %vm2201, %v3595, 0
      %v3685 = vsel %vm2201, %v3625, 0
      %3687 = vmatpush.bf16.xpose.msra.mxu0 0
      %3688 = vmatpush.bf16.xpose.msra.mxu0 0
      %3689 = vmatpush.bf16.xpose.msra.mxu0 0
      %3690 = vmatpush.bf16.xpose.msra.mxu0 0
      %3691 = vmatpush.bf16.xpose.msra.mxu0 0
      %3692 = vmatpush.bf16.xpose.msra.mxu0 0
      %3693 = vmatpush.bf16.xpose.msra.mxu0 0
      %3694 = vmatpush.bf16.xpose.msra.mxu0 %v3685
      %3695 = vmatmul.bf16.gmra.mxu0 %v3682
      %v3696 = vpop.f32.mrf.mxu0
      %v3697 = vadd.f32 %v1902, %v3696
      %v3698 = vpop.f32.mrf.mxu0
      %3699 = vdwg.mxu0
      %v3701 = vsel %vm2201, %v3596, 0
      %v3704 = vsel %vm2201, %v3626, 0
      %3706 = vmatpush.bf16.xpose.msra.mxu0 0
      %3707 = vmatpush.bf16.xpose.msra.mxu0 0
      %3708 = vmatpush.bf16.xpose.msra.mxu0 0
      %3709 = vmatpush.bf16.xpose.msra.mxu0 0
      %3710 = vmatpush.bf16.xpose.msra.mxu0 0
      %3711 = vmatpush.bf16.xpose.msra.mxu0 0
      %3712 = vmatpush.bf16.xpose.msra.mxu0 0
      %3713 = vmatpush.bf16.xpose.msra.mxu0 %v3704
      %3714 = vmatmul.bf16.gmra.mxu0 %v3701
      %v3715 = vpop.f32.mrf.mxu0
      %v3716 = vadd.f32 %v1902, %v3715
      %v3717 = vpop.f32.mrf.mxu0
      %3718 = vdwg.mxu0
      %v3720 = vsel %vm2201, %v3597, 0
      %v3723 = vsel %vm2201, %v3627, 0
      %3725 = vmatpush.bf16.xpose.msra.mxu0 0
      %3726 = vmatpush.bf16.xpose.msra.mxu0 0
      %3727 = vmatpush.bf16.xpose.msra.mxu0 0
      %3728 = vmatpush.bf16.xpose.msra.mxu0 0
      %3729 = vmatpush.bf16.xpose.msra.mxu0 0
      %3730 = vmatpush.bf16.xpose.msra.mxu0 0
      %3731 = vmatpush.bf16.xpose.msra.mxu0 0
      %3732 = vmatpush.bf16.xpose.msra.mxu0 %v3723
      %3733 = vmatmul.bf16.gmra.mxu0 %v3720
      %v3734 = vpop.f32.mrf.mxu0
      %v3735 = vadd.f32 %v1902, %v3734
      %v3736 = vpop.f32.mrf.mxu0
      %3737 = vdwg.mxu0
      %v3739 = vsel %vm2201, %v3598, 0
      %v3742 = vsel %vm2201, %v3628, 0
      %3744 = vmatpush.bf16.xpose.msra.mxu0 0
      %3745 = vmatpush.bf16.xpose.msra.mxu0 0
      %3746 = vmatpush.bf16.xpose.msra.mxu0 0
      %3747 = vmatpush.bf16.xpose.msra.mxu0 0
      %3748 = vmatpush.bf16.xpose.msra.mxu0 0
      %3749 = vmatpush.bf16.xpose.msra.mxu0 0
      %3750 = vmatpush.bf16.xpose.msra.mxu0 0
      %3751 = vmatpush.bf16.xpose.msra.mxu0 %v3742
      %3752 = vmatmul.bf16.gmra.mxu0 %v3739
      %v3753 = vpop.f32.mrf.mxu0
      %v3754 = vadd.f32 %v1902, %v3753
      %v3755 = vpop.f32.mrf.mxu0
      %3756 = vdwg.mxu0
      %v3758 = vsel %vm2201, %v3599, 0
      %v3761 = vsel %vm2201, %v3629, 0
      %3763 = vmatpush.bf16.xpose.msra.mxu0 0
      %3764 = vmatpush.bf16.xpose.msra.mxu0 0
      %3765 = vmatpush.bf16.xpose.msra.mxu0 0
      %3766 = vmatpush.bf16.xpose.msra.mxu0 0
      %3767 = vmatpush.bf16.xpose.msra.mxu0 0
      %3768 = vmatpush.bf16.xpose.msra.mxu0 0
      %3769 = vmatpush.bf16.xpose.msra.mxu0 0
      %3770 = vmatpush.bf16.xpose.msra.mxu0 %v3761
      %3771 = vmatmul.bf16.gmra.mxu0 %v3758
      %v3772 = vpop.f32.mrf.mxu0
      %v3773 = vadd.f32 %v1902, %v3772
      %v3774 = vpop.f32.mrf.mxu0
      %3775 = vdwg.mxu0
      %v3777 = vsel %vm2201, %v3600, 0
      %v3780 = vsel %vm2201, %v3630, 0
      %3782 = vmatpush.bf16.xpose.msra.mxu0 0
      %3783 = vmatpush.bf16.xpose.msra.mxu0 0
      %3784 = vmatpush.bf16.xpose.msra.mxu0 0
      %3785 = vmatpush.bf16.xpose.msra.mxu0 0
      %3786 = vmatpush.bf16.xpose.msra.mxu0 0
      %3787 = vmatpush.bf16.xpose.msra.mxu0 0
      %3788 = vmatpush.bf16.xpose.msra.mxu0 0
      %3789 = vmatpush.bf16.xpose.msra.mxu0 %v3780
      %3790 = vmatmul.bf16.gmra.mxu0 %v3777
      %v3791 = vpop.f32.mrf.mxu0
      %v3792 = vadd.f32 %v1902, %v3791
      %v3793 = vpop.f32.mrf.mxu0
      %3794 = vdwg.mxu0
      %v3796 = vsel %vm2201, %v3601, 0
      %v3799 = vsel %vm2201, %v3631, 0
      %3801 = vmatpush.bf16.xpose.msra.mxu0 0
      %3802 = vmatpush.bf16.xpose.msra.mxu0 0
      %3803 = vmatpush.bf16.xpose.msra.mxu0 0
      %3804 = vmatpush.bf16.xpose.msra.mxu0 0
      %3805 = vmatpush.bf16.xpose.msra.mxu0 0
      %3806 = vmatpush.bf16.xpose.msra.mxu0 0
      %3807 = vmatpush.bf16.xpose.msra.mxu0 0
      %3808 = vmatpush.bf16.xpose.msra.mxu0 %v3799
      %3809 = vmatmul.bf16.gmra.mxu0 %v3796
      %v3810 = vpop.f32.mrf.mxu0
      %v3811 = vadd.f32 %v1902, %v3810
      %v3812 = vpop.f32.mrf.mxu0
      %3813 = vdwg.mxu0
      %v3814 = vsel %vm2354, %v3678, -inf
      %3815 = vmax.xlane.f32.xlu0 %v3814
      %v3816 = vpop.xlane.xlu0 %3815
      %v3817 = vsel %vm2354, %v3697, -inf
      %3818 = vmax.xlane.f32.xlu0 %v3817
      %v3819 = vpop.xlane.xlu0 %3818
      %v3820 = vsel %vm2354, %v3716, -inf
      %3821 = vmax.xlane.f32.xlu0 %v3820
      %v3822 = vpop.xlane.xlu0 %3821
      %v3823 = vsel %vm2354, %v3735, -inf
      %3824 = vmax.xlane.f32.xlu0 %v3823
      %v3825 = vpop.xlane.xlu0 %3824
      %v3826 = vsel %vm2354, %v3754, -inf
      %3827 = vmax.xlane.f32.xlu0 %v3826
      %v3828 = vpop.xlane.xlu0 %3827
      %v3829 = vsel %vm2354, %v3773, -inf
      %3830 = vmax.xlane.f32.xlu0 %v3829
      %v3831 = vpop.xlane.xlu0 %3830
      %v3832 = vsel %vm2354, %v3792, -inf
      %3833 = vmax.xlane.f32.xlu0 %v3832
      %v3834 = vpop.xlane.xlu0 %3833
      %v3835 = vsel %vm2354, %v3811, -inf
      %3836 = vmax.xlane.f32.xlu0 %v3835
      %v3837 = vpop.xlane.xlu0 %3836
      %v3838 = vsub.f32 %v3678, %v3816
      %v3839 = vsub.f32 %v3697, %v3819
      %v3840 = vsub.f32 %v3716, %v3822
      %v3841 = vsub.f32 %v3735, %v3825
      %v3842 = vsub.f32 %v3754, %v3828
      %v3843 = vsub.f32 %v3773, %v3831
      %v3844 = vsub.f32 %v3792, %v3834
      %v3845 = vsub.f32 %v3811, %v3837
      %v3846 = vmul.f32 %v3838, 1.442695
      %v3847 = vpow.pop %v3846
      %v3848 = vmul.f32 %v3839, 1.442695
      %v3849 = vpow.pop %v3848
      %v3850 = vmul.f32 %v3840, 1.442695
      %v3851 = vpow.pop %v3850
      %v3852 = vmul.f32 %v3841, 1.442695
      %v3853 = vpow.pop %v3852
      %v3854 = vmul.f32 %v3842, 1.442695
      %v3855 = vpow.pop %v3854
      %v3856 = vmul.f32 %v3843, 1.442695
      %v3857 = vpow.pop %v3856
      %v3858 = vmul.f32 %v3844, 1.442695
      %v3859 = vpow.pop %v3858
      %v3860 = vmul.f32 %v3845, 1.442695
      %v3861 = vpow.pop %v3860
      %v3862 = vsel %vm2354, %v3847, 0.0
      %3863 = vadd.xlane.f32.xlu0 %v3862
      %v3864 = vpop.xlane.xlu0 %3863
      %v3865 = vsel %vm2354, %v3849, 0.0
      %3866 = vadd.xlane.f32.xlu0 %v3865
      %v3867 = vpop.xlane.xlu0 %3866
      %v3868 = vsel %vm2354, %v3851, 0.0
      %3869 = vadd.xlane.f32.xlu0 %v3868
      %v3870 = vpop.xlane.xlu0 %3869
      %v3871 = vsel %vm2354, %v3853, 0.0
      %3872 = vadd.xlane.f32.xlu0 %v3871
      %v3873 = vpop.xlane.xlu0 %3872
      %v3874 = vsel %vm2354, %v3855, 0.0
      %3875 = vadd.xlane.f32.xlu0 %v3874
      %v3876 = vpop.xlane.xlu0 %3875
      %v3877 = vsel %vm2354, %v3857, 0.0
      %3878 = vadd.xlane.f32.xlu0 %v3877
      %v3879 = vpop.xlane.xlu0 %3878
      %v3880 = vsel %vm2354, %v3859, 0.0
      %3881 = vadd.xlane.f32.xlu0 %v3880
      %v3882 = vpop.xlane.xlu0 %3881
      %v3883 = vsel %vm2354, %v3861, 0.0
      %3884 = vadd.xlane.f32.xlu0 %v3883
      %v3885 = vpop.xlane.xlu0 %3884
      %v3886 = vrcp.pop %v3864
      %v3887 = vrcp.pop %v3867
      %v3888 = vrcp.pop %v3870
      %v3889 = vrcp.pop %v3873
      %v3890 = vrcp.pop %v3876
      %v3891 = vrcp.pop %v3879
      %v3892 = vrcp.pop %v3882
      %v3893 = vrcp.pop %v3885
      %v3894 = vmul.f32 %v3847, %v3886
      %v3895 = vmul.f32 %v3849, %v3887
      %v3896 = vmul.f32 %v3851, %v3888
      %v3897 = vmul.f32 %v3853, %v3889
      %v3898 = vmul.f32 %v3855, %v3890
      %v3899 = vmul.f32 %v3857, %v3891
      %v3900 = vmul.f32 %v3859, %v3892
      %v3901 = vmul.f32 %v3861, %v3893
      %v3902 = vpack.c.bf16 %v3894, %v3894
      %v3903 = vpack.c.bf16 %v3895, %v3895
      %v3904 = vpack.c.bf16 %v3896, %v3896
      %v3905 = vpack.c.bf16 %v3897, %v3897
      %v3906 = vpack.c.bf16 %v3898, %v3898
      %v3907 = vpack.c.bf16 %v3899, %v3899
      %v3908 = vpack.c.bf16 %v3900, %v3900
      %v3909 = vpack.c.bf16 %v3901, %v3901
      %v3911 = vsel %vm2354, %v3902, 0
      %v3914 = vsel %vm1162, %v3654, 0
      %3916 = vmatpush.bf16.msra.mxu0 0
      %3917 = vmatpush.bf16.msra.mxu0 0
      %3918 = vmatpush.bf16.msra.mxu0 0
      %3919 = vmatpush.bf16.msra.mxu0 0
      %3920 = vmatpush.bf16.msra.mxu0 0
      %3921 = vmatpush.bf16.msra.mxu0 0
      %3922 = vmatpush.bf16.msra.mxu0 0
      %3923 = vmatpush.bf16.msra.mxu0 %v3914
      %3924 = vmatmul.bf16.gmra.mxu0 %v3911
      %v3925 = vpop.f32.mrf.mxu0
      %v3926 = vadd.f32 0.0, %v3925
      %v3927 = vpop.f32.mrf.mxu0
      %3928 = vdwg.mxu0
      %v3930 = vsel %vm2354, %v3903, 0
      %v3933 = vsel %vm1162, %v3655, 0
      %3935 = vmatpush.bf16.msra.mxu0 0
      %3936 = vmatpush.bf16.msra.mxu0 0
      %3937 = vmatpush.bf16.msra.mxu0 0
      %3938 = vmatpush.bf16.msra.mxu0 0
      %3939 = vmatpush.bf16.msra.mxu0 0
      %3940 = vmatpush.bf16.msra.mxu0 0
      %3941 = vmatpush.bf16.msra.mxu0 0
      %3942 = vmatpush.bf16.msra.mxu0 %v3933
      %3943 = vmatmul.bf16.gmra.mxu0 %v3930
      %v3944 = vpop.f32.mrf.mxu0
      %v3945 = vadd.f32 0.0, %v3944
      %v3946 = vpop.f32.mrf.mxu0
      %3947 = vdwg.mxu0
      %v3949 = vsel %vm2354, %v3904, 0
      %v3952 = vsel %vm1162, %v3656, 0
      %3954 = vmatpush.bf16.msra.mxu0 0
      %3955 = vmatpush.bf16.msra.mxu0 0
      %3956 = vmatpush.bf16.msra.mxu0 0
      %3957 = vmatpush.bf16.msra.mxu0 0
      %3958 = vmatpush.bf16.msra.mxu0 0
      %3959 = vmatpush.bf16.msra.mxu0 0
      %3960 = vmatpush.bf16.msra.mxu0 0
      %3961 = vmatpush.bf16.msra.mxu0 %v3952
      %3962 = vmatmul.bf16.gmra.mxu0 %v3949
      %v3963 = vpop.f32.mrf.mxu0
      %v3964 = vadd.f32 0.0, %v3963
      %v3965 = vpop.f32.mrf.mxu0
      %3966 = vdwg.mxu0
      %v3968 = vsel %vm2354, %v3905, 0
      %v3971 = vsel %vm1162, %v3657, 0
      %3973 = vmatpush.bf16.msra.mxu0 0
      %3974 = vmatpush.bf16.msra.mxu0 0
      %3975 = vmatpush.bf16.msra.mxu0 0
      %3976 = vmatpush.bf16.msra.mxu0 0
      %3977 = vmatpush.bf16.msra.mxu0 0
      %3978 = vmatpush.bf16.msra.mxu0 0
      %3979 = vmatpush.bf16.msra.mxu0 0
      %3980 = vmatpush.bf16.msra.mxu0 %v3971
      %3981 = vmatmul.bf16.gmra.mxu0 %v3968
      %v3982 = vpop.f32.mrf.mxu0
      %v3983 = vadd.f32 0.0, %v3982
      %v3984 = vpop.f32.mrf.mxu0
      %3985 = vdwg.mxu0
      %v3987 = vsel %vm2354, %v3906, 0
      %v3990 = vsel %vm1162, %v3658, 0
      %3992 = vmatpush.bf16.msra.mxu0 0
      %3993 = vmatpush.bf16.msra.mxu0 0
      %3994 = vmatpush.bf16.msra.mxu0 0
      %3995 = vmatpush.bf16.msra.mxu0 0
      %3996 = vmatpush.bf16.msra.mxu0 0
      %3997 = vmatpush.bf16.msra.mxu0 0
      %3998 = vmatpush.bf16.msra.mxu0 0
      %3999 = vmatpush.bf16.msra.mxu0 %v3990
      %4000 = vmatmul.bf16.gmra.mxu0 %v3987
      %v4001 = vpop.f32.mrf.mxu0
      %v4002 = vadd.f32 0.0, %v4001
      %v4003 = vpop.f32.mrf.mxu0
      %4004 = vdwg.mxu0
      %v4006 = vsel %vm2354, %v3907, 0
      %v4009 = vsel %vm1162, %v3659, 0
      %4011 = vmatpush.bf16.msra.mxu0 0
      %4012 = vmatpush.bf16.msra.mxu0 0
      %4013 = vmatpush.bf16.msra.mxu0 0
      %4014 = vmatpush.bf16.msra.mxu0 0
      %4015 = vmatpush.bf16.msra.mxu0 0
      %4016 = vmatpush.bf16.msra.mxu0 0
      %4017 = vmatpush.bf16.msra.mxu0 0
      %4018 = vmatpush.bf16.msra.mxu0 %v4009
      %4019 = vmatmul.bf16.gmra.mxu0 %v4006
      %v4020 = vpop.f32.mrf.mxu0
      %v4021 = vadd.f32 0.0, %v4020
      %v4022 = vpop.f32.mrf.mxu0
      %4023 = vdwg.mxu0
      %v4025 = vsel %vm2354, %v3908, 0
      %v4028 = vsel %vm1162, %v3660, 0
      %4030 = vmatpush.bf16.msra.mxu0 0
      %4031 = vmatpush.bf16.msra.mxu0 0
      %4032 = vmatpush.bf16.msra.mxu0 0
      %4033 = vmatpush.bf16.msra.mxu0 0
      %4034 = vmatpush.bf16.msra.mxu0 0
      %4035 = vmatpush.bf16.msra.mxu0 0
      %4036 = vmatpush.bf16.msra.mxu0 0
      %4037 = vmatpush.bf16.msra.mxu0 %v4028
      %4038 = vmatmul.bf16.gmra.mxu0 %v4025
      %v4039 = vpop.f32.mrf.mxu0
      %v4040 = vadd.f32 0.0, %v4039
      %v4041 = vpop.f32.mrf.mxu0
      %4042 = vdwg.mxu0
      %v4044 = vsel %vm2354, %v3909, 0
      %v4047 = vsel %vm1162, %v3661, 0
      %4049 = vmatpush.bf16.msra.mxu0 0
      %4050 = vmatpush.bf16.msra.mxu0 0
      %4051 = vmatpush.bf16.msra.mxu0 0
      %4052 = vmatpush.bf16.msra.mxu0 0
      %4053 = vmatpush.bf16.msra.mxu0 0
      %4054 = vmatpush.bf16.msra.mxu0 0
      %4055 = vmatpush.bf16.msra.mxu0 0
      %4056 = vmatpush.bf16.msra.mxu0 %v4047
      %4057 = vmatmul.bf16.gmra.mxu0 %v4044
      %v4058 = vpop.f32.mrf.mxu0
      %v4059 = vadd.f32 0.0, %v4058
      %v4060 = vpop.f32.mrf.mxu0
      %4061 = vdwg.mxu0
      %4063 = vrot.lane.b32.xlu0 %v3945, 16
      %v4064 = vpop.permute.xlu0 %4063
      %4067 = vrot.lane.b32.xlu0 %v3964, 32
      %v4068 = vpop.permute.xlu0 %4067
      %4071 = vrot.lane.b32.xlu0 %v3983, 48
      %v4072 = vpop.permute.xlu0 %4071
      %4075 = vrot.lane.b32.xlu0 %v4002, 64
      %v4076 = vpop.permute.xlu0 %4075
      %4079 = vrot.lane.b32.xlu0 %v4021, 80
      %v4080 = vpop.permute.xlu0 %4079
      %4083 = vrot.lane.b32.xlu0 %v4040, 96
      %v4084 = vpop.permute.xlu0 %4083
      %4087 = vrot.lane.b32.xlu0 %v4059, 112
      %v4088 = vpop.permute.xlu0 %4087
      %v4090 = vsel %vm2201, %v3926, %v4064
      %v4091 = vsel %vm2632, %v4090, %v4068
      %v4092 = vsel %vm2634, %v4091, %v4072
      %v4093 = vsel %vm2636, %v4092, %v4076
      %v4094 = vsel %vm2638, %v4093, %v4080
      %v4095 = vsel %vm2640, %v4094, %v4084
      %v4096 = vsel %vm2642, %v4095, %v4088
      %v4097 = vpack.c.bf16 %v4096, %v4096
      %s4098 = scalar_lea.vmem %s8, 64
      %v4099 = vld [vmem:[%s4098] sm:$0xf]
      %v4100 = vld [vmem:[%s4098 + $0x4] sm:$0xf]
      %v4101 = vld [vmem:[%s4098 + $0x8] sm:$0xf]
      %v4102 = vld [vmem:[%s4098 + $0xc] sm:$0xf]
      %v4103 = vld [vmem:[%s4098 + $0x10] sm:$0xf]
      %v4104 = vld [vmem:[%s4098 + $0x14] sm:$0xf]
      %v4105 = vld [vmem:[%s4098 + $0x18] sm:$0xf]
      %v4106 = vld [vmem:[%s4098 + $0x1c] sm:$0xf]
      %v4107 = vld [vmem:[%s4098 + $0x20] sm:$0xf]
      %v4108 = vld [vmem:[%s4098 + $0x24] sm:$0xf]
      %v4109 = vld [vmem:[%s4098 + $0x28] sm:$0xf]
      %v4110 = vld [vmem:[%s4098 + $0x2c] sm:$0xf]
      %v4111 = vld [vmem:[%s4098 + $0x30] sm:$0xf]
      %v4112 = vld [vmem:[%s4098 + $0x34] sm:$0xf]
      %v4113 = vld [vmem:[%s4098 + $0x38] sm:$0xf]
      %v4114 = vld [vmem:[%s4098 + $0x3c] sm:$0xf]
      %s4115 = scalar_lea.vmem %s9, 1
      %v4116 = vld [vmem:[%s4115] sm:$0x1]
      %v4118 = vperm.slane %v4116, 0
      %v4136 = vunpack.c.l.b16 %v4099
      %v4137 = vunpack.c.l.b16 %v4100
      %v4138 = vunpack.c.l.b16 %v4101
      %v4139 = vunpack.c.l.b16 %v4102
      %v4140 = vunpack.c.l.b16 %v4103
      %v4141 = vunpack.c.l.b16 %v4104
      %v4142 = vunpack.c.l.b16 %v4105
      %v4143 = vunpack.c.l.b16 %v4106
      %v4144 = vunpack.c.l.b16 %v4107
      %v4145 = vunpack.c.l.b16 %v4108
      %v4146 = vunpack.c.l.b16 %v4109
      %v4147 = vunpack.c.l.b16 %v4110
      %v4148 = vunpack.c.l.b16 %v4111
      %v4149 = vunpack.c.l.b16 %v4112
      %v4150 = vunpack.c.l.b16 %v4113
      %v4151 = vunpack.c.l.b16 %v4114
      %v4152 = vpack.c.b16 %v4137, %v4136
      %v4153 = vpack.c.b16 %v4139, %v4138
      %v4154 = vpack.c.b16 %v4141, %v4140
      %v4155 = vpack.c.b16 %v4143, %v4142
      %v4156 = vpack.c.b16 %v4145, %v4144
      %v4157 = vpack.c.b16 %v4147, %v4146
      %v4158 = vpack.c.b16 %v4149, %v4148
      %v4159 = vpack.c.b16 %v4151, %v4150
      %4168 = vmatpush.bf16.msra.mxu0 %v4159
      %4169 = vmatpush.bf16.msra.mxu0 %v4158
      %4170 = vmatpush.bf16.msra.mxu0 %v4157
      %4171 = vmatpush.bf16.msra.mxu0 %v4156
      %4172 = vmatpush.bf16.msra.mxu0 %v4155
      %4173 = vmatpush.bf16.msra.mxu0 %v4154
      %4174 = vmatpush.bf16.msra.mxu0 %v4153
      %4175 = vmatpush.bf16.msra.mxu0 %v4152
      %4176 = vmatmul.bf16.gmra.mxu0 %v4097
      %v4177 = vpop.f32.mrf.mxu0
      %v4178 = vadd.f32 %v4118, %v4177
      %v4179 = vpop.f32.mrf.mxu0
      %4180 = vdwg.mxu0
      %v4181 = vadd.f32 %v3361, %v4178
      %s4182 = scalar_lea.vmem %s14, 4
      %v4183 = vld [vmem:[%s4182] sm:$0x1]
      %v4184 = vld [vmem:[%s4182 + $0x1] sm:$0x1]
      %4185 = vadd.xlane.f32.xlu0 %v4181
      %v4186 = vpop.xlane.xlu0 %4185
      %v4187 = vmul.f32 %v4186, %v2737
      %v4188 = vsub.f32 %v4181, %v4187
      %v4189 = vmul.f32 %v4188, %v4188
      %4190 = vadd.xlane.f32.xlu0 %v4189
      %v4191 = vpop.xlane.xlu0 %4190
      %v4192 = vmul.f32 %v4191, %v2737
      %v4193 = vadd.f32 %v4192, 1e-05
      %v4194 = vrsqrt.pop %v4193
      %v4195 = vmul.f32 %v4194, %v4193
      %v4196 = vmul.f32 %v4195, %v4194
      %v4197 = vmul.f32 0.5, %v4196
      %v4198 = vsub.f32 1.5, %v4197
      %v4199 = vmul.f32 %v4194, %v4198
      %vm4200 = vweird.f32 %v4193
      %vm4201 = vweird.f32 %v4194
      %vm4202 = vmor %vm4200, %vm4201
      %v4203 = vsel %vm4202, %v4194, %v4199
      %v4204 = vmul.f32 %v4188, %v4203
      %v4205 = vperm.slane %v4183, 0
      %v4206 = vmul.f32 %v4204, %v4205
      %v4207 = vperm.slane %v4184, 0
      %v4208 = vadd.f32 %v4206, %v4207
      %v4209 = vpack.c.bf16 %v4208, %v4208
      %s4210 = scalar_lea.vmem %s10, 256
      %v4211 = vld [vmem:[%s4210] sm:$0xff]
      %v4212 = vld [vmem:[%s4210 + $0x8] sm:$0xff]
      %v4213 = vld [vmem:[%s4210 + $0x10] sm:$0xff]
      %v4214 = vld [vmem:[%s4210 + $0x18] sm:$0xff]
      %v4215 = vld [vmem:[%s4210 + $0x20] sm:$0xff]
      %v4216 = vld [vmem:[%s4210 + $0x28] sm:$0xff]
      %v4217 = vld [vmem:[%s4210 + $0x30] sm:$0xff]
      %v4218 = vld [vmem:[%s4210 + $0x38] sm:$0xff]
      %v4219 = vld [vmem:[%s4210 + $0x40] sm:$0xff]
      %v4220 = vld [vmem:[%s4210 + $0x48] sm:$0xff]
      %v4221 = vld [vmem:[%s4210 + $0x50] sm:$0xff]
      %v4222 = vld [vmem:[%s4210 + $0x58] sm:$0xff]
      %v4223 = vld [vmem:[%s4210 + $0x60] sm:$0xff]
      %v4224 = vld [vmem:[%s4210 + $0x68] sm:$0xff]
      %v4225 = vld [vmem:[%s4210 + $0x70] sm:$0xff]
      %v4226 = vld [vmem:[%s4210 + $0x78] sm:$0xff]
      %v4227 = vld [vmem:[%s4210 + $0x80] sm:$0xff]
      %v4228 = vld [vmem:[%s4210 + $0x88] sm:$0xff]
      %v4229 = vld [vmem:[%s4210 + $0x90] sm:$0xff]
      %v4230 = vld [vmem:[%s4210 + $0x98] sm:$0xff]
      %v4231 = vld [vmem:[%s4210 + $0xa0] sm:$0xff]
      %v4232 = vld [vmem:[%s4210 + $0xa8] sm:$0xff]
      %v4233 = vld [vmem:[%s4210 + $0xb0] sm:$0xff]
      %v4234 = vld [vmem:[%s4210 + $0xb8] sm:$0xff]
      %v4235 = vld [vmem:[%s4210 + $0xc0] sm:$0xff]
      %v4236 = vld [vmem:[%s4210 + $0xc8] sm:$0xff]
      %v4237 = vld [vmem:[%s4210 + $0xd0] sm:$0xff]
      %v4238 = vld [vmem:[%s4210 + $0xd8] sm:$0xff]
      %v4239 = vld [vmem:[%s4210 + $0xe0] sm:$0xff]
      %v4240 = vld [vmem:[%s4210 + $0xe8] sm:$0xff]
      %v4241 = vld [vmem:[%s4210 + $0xf0] sm:$0xff]
      %v4242 = vld [vmem:[%s4210 + $0xf8] sm:$0xff]
      %s4243 = scalar_lea.vmem %s11, 4
      %v4244 = vld [vmem:[%s4243] sm:$0xf]
      %v4246 = vperm.slane %v4244, 0
      %v4247 = vperm.slane %v4244, 1
      %v4248 = vperm.slane %v4244, 2
      %v4249 = vperm.slane %v4244, 3
      %v4286 = vunpack.c.l.b16 %v4211
      %v4287 = vunpack.c.h.b16 %v4211
      %v4288 = vunpack.c.l.b16 %v4212
      %v4289 = vunpack.c.h.b16 %v4212
      %v4290 = vunpack.c.l.b16 %v4213
      %v4291 = vunpack.c.h.b16 %v4213
      %v4292 = vunpack.c.l.b16 %v4214
      %v4293 = vunpack.c.h.b16 %v4214
      %v4294 = vunpack.c.l.b16 %v4215
      %v4295 = vunpack.c.h.b16 %v4215
      %v4296 = vunpack.c.l.b16 %v4216
      %v4297 = vunpack.c.h.b16 %v4216
      %v4298 = vunpack.c.l.b16 %v4217
      %v4299 = vunpack.c.h.b16 %v4217
      %v4300 = vunpack.c.l.b16 %v4218
      %v4301 = vunpack.c.h.b16 %v4218
      %v4302 = vunpack.c.l.b16 %v4219
      %v4303 = vunpack.c.h.b16 %v4219
      %v4304 = vunpack.c.l.b16 %v4220
      %v4305 = vunpack.c.h.b16 %v4220
      %v4306 = vunpack.c.l.b16 %v4221
      %v4307 = vunpack.c.h.b16 %v4221
      %v4308 = vunpack.c.l.b16 %v4222
      %v4309 = vunpack.c.h.b16 %v4222
      %v4310 = vunpack.c.l.b16 %v4223
      %v4311 = vunpack.c.h.b16 %v4223
      %v4312 = vunpack.c.l.b16 %v4224
      %v4313 = vunpack.c.h.b16 %v4224
      %v4314 = vunpack.c.l.b16 %v4225
      %v4315 = vunpack.c.h.b16 %v4225
      %v4316 = vunpack.c.l.b16 %v4226
      %v4317 = vunpack.c.h.b16 %v4226
      %v4318 = vunpack.c.l.b16 %v4227
      %v4319 = vunpack.c.h.b16 %v4227
      %v4320 = vunpack.c.l.b16 %v4228
      %v4321 = vunpack.c.h.b16 %v4228
      %v4322 = vunpack.c.l.b16 %v4229
      %v4323 = vunpack.c.h.b16 %v4229
      %v4324 = vunpack.c.l.b16 %v4230
      %v4325 = vunpack.c.h.b16 %v4230
      %v4326 = vunpack.c.l.b16 %v4231
      %v4327 = vunpack.c.h.b16 %v4231
      %v4328 = vunpack.c.l.b16 %v4232
      %v4329 = vunpack.c.h.b16 %v4232
      %v4330 = vunpack.c.l.b16 %v4233
      %v4331 = vunpack.c.h.b16 %v4233
      %v4332 = vunpack.c.l.b16 %v4234
      %v4333 = vunpack.c.h.b16 %v4234
      %v4334 = vunpack.c.l.b16 %v4235
      %v4335 = vunpack.c.h.b16 %v4235
      %v4336 = vunpack.c.l.b16 %v4236
      %v4337 = vunpack.c.h.b16 %v4236
      %v4338 = vunpack.c.l.b16 %v4237
      %v4339 = vunpack.c.h.b16 %v4237
      %v4340 = vunpack.c.l.b16 %v4238
      %v4341 = vunpack.c.h.b16 %v4238
      %v4342 = vunpack.c.l.b16 %v4239
      %v4343 = vunpack.c.h.b16 %v4239
      %v4344 = vunpack.c.l.b16 %v4240
      %v4345 = vunpack.c.h.b16 %v4240
      %v4346 = vunpack.c.l.b16 %v4241
      %v4347 = vunpack.c.h.b16 %v4241
      %v4348 = vunpack.c.l.b16 %v4242
      %v4349 = vunpack.c.h.b16 %v4242
      %v4350 = vpack.c.b16 %v4290, %v4286
      %v4351 = vpack.c.b16 %v4291, %v4287
      %v4352 = vpack.c.b16 %v4292, %v4288
      %v4353 = vpack.c.b16 %v4293, %v4289
      %v4354 = vpack.c.b16 %v4298, %v4294
      %v4355 = vpack.c.b16 %v4299, %v4295
      %v4356 = vpack.c.b16 %v4300, %v4296
      %v4357 = vpack.c.b16 %v4301, %v4297
      %v4358 = vpack.c.b16 %v4306, %v4302
      %v4359 = vpack.c.b16 %v4307, %v4303
      %v4360 = vpack.c.b16 %v4308, %v4304
      %v4361 = vpack.c.b16 %v4309, %v4305
      %v4362 = vpack.c.b16 %v4314, %v4310
      %v4363 = vpack.c.b16 %v4315, %v4311
      %v4364 = vpack.c.b16 %v4316, %v4312
      %v4365 = vpack.c.b16 %v4317, %v4313
      %v4366 = vpack.c.b16 %v4322, %v4318
      %v4367 = vpack.c.b16 %v4323, %v4319
      %v4368 = vpack.c.b16 %v4324, %v4320
      %v4369 = vpack.c.b16 %v4325, %v4321
      %v4370 = vpack.c.b16 %v4330, %v4326
      %v4371 = vpack.c.b16 %v4331, %v4327
      %v4372 = vpack.c.b16 %v4332, %v4328
      %v4373 = vpack.c.b16 %v4333, %v4329
      %v4374 = vpack.c.b16 %v4338, %v4334
      %v4375 = vpack.c.b16 %v4339, %v4335
      %v4376 = vpack.c.b16 %v4340, %v4336
      %v4377 = vpack.c.b16 %v4341, %v4337
      %v4378 = vpack.c.b16 %v4346, %v4342
      %v4379 = vpack.c.b16 %v4347, %v4343
      %v4380 = vpack.c.b16 %v4348, %v4344
      %v4381 = vpack.c.b16 %v4349, %v4345
      %4414 = vmatpush.bf16.msra.mxu0 %v4378
      %4415 = vmatpush.bf16.msra.mxu0 %v4374
      %4416 = vmatpush.bf16.msra.mxu0 %v4370
      %4417 = vmatpush.bf16.msra.mxu0 %v4366
      %4418 = vmatpush.bf16.msra.mxu0 %v4362
      %4419 = vmatpush.bf16.msra.mxu0 %v4358
      %4420 = vmatpush.bf16.msra.mxu0 %v4354
      %4421 = vmatpush.bf16.msra.mxu0 %v4350
      %4422 = vmatmul.bf16.gmra.mxu0 %v4209
      %v4423 = vpop.f32.mrf.mxu0
      %v4424 = vadd.f32 %v4246, %v4423
      %v4425 = vpop.f32.mrf.mxu0
      %4426 = vdwg.mxu0
      %4427 = vmatpush.bf16.msra.mxu0 %v4379
      %4428 = vmatpush.bf16.msra.mxu0 %v4375
      %4429 = vmatpush.bf16.msra.mxu0 %v4371
      %4430 = vmatpush.bf16.msra.mxu0 %v4367
      %4431 = vmatpush.bf16.msra.mxu0 %v4363
      %4432 = vmatpush.bf16.msra.mxu0 %v4359
      %4433 = vmatpush.bf16.msra.mxu0 %v4355
      %4434 = vmatpush.bf16.msra.mxu0 %v4351
      %4435 = vmatmul.bf16.gmra.mxu0 %v4209
      %v4436 = vpop.f32.mrf.mxu0
      %v4437 = vadd.f32 %v4247, %v4436
      %v4438 = vpop.f32.mrf.mxu0
      %4439 = vdwg.mxu0
      %4440 = vmatpush.bf16.msra.mxu0 %v4380
      %4441 = vmatpush.bf16.msra.mxu0 %v4376
      %4442 = vmatpush.bf16.msra.mxu0 %v4372
      %4443 = vmatpush.bf16.msra.mxu0 %v4368
      %4444 = vmatpush.bf16.msra.mxu0 %v4364
      %4445 = vmatpush.bf16.msra.mxu0 %v4360
      %4446 = vmatpush.bf16.msra.mxu0 %v4356
      %4447 = vmatpush.bf16.msra.mxu0 %v4352
      %4448 = vmatmul.bf16.gmra.mxu0 %v4209
      %v4449 = vpop.f32.mrf.mxu0
      %v4450 = vadd.f32 %v4248, %v4449
      %v4451 = vpop.f32.mrf.mxu0
      %4452 = vdwg.mxu0
      %4453 = vmatpush.bf16.msra.mxu0 %v4381
      %4454 = vmatpush.bf16.msra.mxu0 %v4377
      %4455 = vmatpush.bf16.msra.mxu0 %v4373
      %4456 = vmatpush.bf16.msra.mxu0 %v4369
      %4457 = vmatpush.bf16.msra.mxu0 %v4365
      %4458 = vmatpush.bf16.msra.mxu0 %v4361
      %4459 = vmatpush.bf16.msra.mxu0 %v4357
      %4460 = vmatpush.bf16.msra.mxu0 %v4353
      %4461 = vmatmul.bf16.gmra.mxu0 %v4209
      %v4462 = vpop.f32.mrf.mxu0
      %v4463 = vadd.f32 %v4249, %v4462
      %v4464 = vpop.f32.mrf.mxu0
      %4465 = vdwg.mxu0
      %v4466 = vmax.f32 %v4424, 0.0
      %v4467 = vmax.f32 %v4437, 0.0
      %v4468 = vmax.f32 %v4450, 0.0
      %v4469 = vmax.f32 %v4463, 0.0
      %v4470 = vpack.c.bf16 %v4466, %v4466
      %v4471 = vpack.c.bf16 %v4467, %v4467
      %v4472 = vpack.c.bf16 %v4468, %v4468
      %v4473 = vpack.c.bf16 %v4469, %v4469
      %s4474 = scalar_lea.vmem %s12, 256
      %v4475 = vld [vmem:[%s4474] sm:$0xf]
      %v4476 = vld [vmem:[%s4474 + $0x4] sm:$0xf]
      %v4477 = vld [vmem:[%s4474 + $0x8] sm:$0xf]
      %v4478 = vld [vmem:[%s4474 + $0xc] sm:$0xf]
      %v4479 = vld [vmem:[%s4474 + $0x10] sm:$0xf]
      %v4480 = vld [vmem:[%s4474 + $0x14] sm:$0xf]
      %v4481 = vld [vmem:[%s4474 + $0x18] sm:$0xf]
      %v4482 = vld [vmem:[%s4474 + $0x1c] sm:$0xf]
      %v4483 = vld [vmem:[%s4474 + $0x20] sm:$0xf]
      %v4484 = vld [vmem:[%s4474 + $0x24] sm:$0xf]
      %v4485 = vld [vmem:[%s4474 + $0x28] sm:$0xf]
      %v4486 = vld [vmem:[%s4474 + $0x2c] sm:$0xf]
      %v4487 = vld [vmem:[%s4474 + $0x30] sm:$0xf]
      %v4488 = vld [vmem:[%s4474 + $0x34] sm:$0xf]
      %v4489 = vld [vmem:[%s4474 + $0x38] sm:$0xf]
      %v4490 = vld [vmem:[%s4474 + $0x3c] sm:$0xf]
      %v4491 = vld [vmem:[%s4474 + $0x40] sm:$0xf]
      %v4492 = vld [vmem:[%s4474 + $0x44] sm:$0xf]
      %v4493 = vld [vmem:[%s4474 + $0x48] sm:$0xf]
      %v4494 = vld [vmem:[%s4474 + $0x4c] sm:$0xf]
      %v4495 = vld [vmem:[%s4474 + $0x50] sm:$0xf]
      %v4496 = vld [vmem:[%s4474 + $0x54] sm:$0xf]
      %v4497 = vld [vmem:[%s4474 + $0x58] sm:$0xf]
      %v4498 = vld [vmem:[%s4474 + $0x5c] sm:$0xf]
      %v4499 = vld [vmem:[%s4474 + $0x60] sm:$0xf]
      %v4500 = vld [vmem:[%s4474 + $0x64] sm:$0xf]
      %v4501 = vld [vmem:[%s4474 + $0x68] sm:$0xf]
      %v4502 = vld [vmem:[%s4474 + $0x6c] sm:$0xf]
      %v4503 = vld [vmem:[%s4474 + $0x70] sm:$0xf]
      %v4504 = vld [vmem:[%s4474 + $0x74] sm:$0xf]
      %v4505 = vld [vmem:[%s4474 + $0x78] sm:$0xf]
      %v4506 = vld [vmem:[%s4474 + $0x7c] sm:$0xf]
      %v4507 = vld [vmem:[%s4474 + $0x80] sm:$0xf]
      %v4508 = vld [vmem:[%s4474 + $0x84] sm:$0xf]
      %v4509 = vld [vmem:[%s4474 + $0x88] sm:$0xf]
      %v4510 = vld [vmem:[%s4474 + $0x8c] sm:$0xf]
      %v4511 = vld [vmem:[%s4474 + $0x90] sm:$0xf]
      %v4512 = vld [vmem:[%s4474 + $0x94] sm:$0xf]
      %v4513 = vld [vmem:[%s4474 + $0x98] sm:$0xf]
      %v4514 = vld [vmem:[%s4474 + $0x9c] sm:$0xf]
      %v4515 = vld [vmem:[%s4474 + $0xa0] sm:$0xf]
      %v4516 = vld [vmem:[%s4474 + $0xa4] sm:$0xf]
      %v4517 = vld [vmem:[%s4474 + $0xa8] sm:$0xf]
      %v4518 = vld [vmem:[%s4474 + $0xac] sm:$0xf]
      %v4519 = vld [vmem:[%s4474 + $0xb0] sm:$0xf]
      %v4520 = vld [vmem:[%s4474 + $0xb4] sm:$0xf]
      %v4521 = vld [vmem:[%s4474 + $0xb8] sm:$0xf]
      %v4522 = vld [vmem:[%s4474 + $0xbc] sm:$0xf]
      %v4523 = vld [vmem:[%s4474 + $0xc0] sm:$0xf]
      %v4524 = vld [vmem:[%s4474 + $0xc4] sm:$0xf]
      %v4525 = vld [vmem:[%s4474 + $0xc8] sm:$0xf]
      %v4526 = vld [vmem:[%s4474 + $0xcc] sm:$0xf]
      %v4527 = vld [vmem:[%s4474 + $0xd0] sm:$0xf]
      %v4528 = vld [vmem:[%s4474 + $0xd4] sm:$0xf]
      %v4529 = vld [vmem:[%s4474 + $0xd8] sm:$0xf]
      %v4530 = vld [vmem:[%s4474 + $0xdc] sm:$0xf]
      %v4531 = vld [vmem:[%s4474 + $0xe0] sm:$0xf]
      %v4532 = vld [vmem:[%s4474 + $0xe4] sm:$0xf]
      %v4533 = vld [vmem:[%s4474 + $0xe8] sm:$0xf]
      %v4534 = vld [vmem:[%s4474 + $0xec] sm:$0xf]
      %v4535 = vld [vmem:[%s4474 + $0xf0] sm:$0xf]
      %v4536 = vld [vmem:[%s4474 + $0xf4] sm:$0xf]
      %v4537 = vld [vmem:[%s4474 + $0xf8] sm:$0xf]
      %v4538 = vld [vmem:[%s4474 + $0xfc] sm:$0xf]
      %s4539 = scalar_lea.vmem %s13, 1
      %v4540 = vld [vmem:[%s4539] sm:$0x1]
      %v4542 = vperm.slane %v4540, 0
      %v4608 = vunpack.c.l.b16 %v4475
      %v4609 = vunpack.c.l.b16 %v4476
      %v4610 = vunpack.c.l.b16 %v4477
      %v4611 = vunpack.c.l.b16 %v4478
      %v4612 = vunpack.c.l.b16 %v4479
      %v4613 = vunpack.c.l.b16 %v4480
      %v4614 = vunpack.c.l.b16 %v4481
      %v4615 = vunpack.c.l.b16 %v4482
      %v4616 = vunpack.c.l.b16 %v4483
      %v4617 = vunpack.c.l.b16 %v4484
      %v4618 = vunpack.c.l.b16 %v4485
      %v4619 = vunpack.c.l.b16 %v4486
      %v4620 = vunpack.c.l.b16 %v4487
      %v4621 = vunpack.c.l.b16 %v4488
      %v4622 = vunpack.c.l.b16 %v4489
      %v4623 = vunpack.c.l.b16 %v4490
      %v4624 = vunpack.c.l.b16 %v4491
      %v4625 = vunpack.c.l.b16 %v4492
      %v4626 = vunpack.c.l.b16 %v4493
      %v4627 = vunpack.c.l.b16 %v4494
      %v4628 = vunpack.c.l.b16 %v4495
      %v4629 = vunpack.c.l.b16 %v4496
      %v4630 = vunpack.c.l.b16 %v4497
      %v4631 = vunpack.c.l.b16 %v4498
      %v4632 = vunpack.c.l.b16 %v4499
      %v4633 = vunpack.c.l.b16 %v4500
      %v4634 = vunpack.c.l.b16 %v4501
      %v4635 = vunpack.c.l.b16 %v4502
      %v4636 = vunpack.c.l.b16 %v4503
      %v4637 = vunpack.c.l.b16 %v4504
      %v4638 = vunpack.c.l.b16 %v4505
      %v4639 = vunpack.c.l.b16 %v4506
      %v4640 = vunpack.c.l.b16 %v4507
      %v4641 = vunpack.c.l.b16 %v4508
      %v4642 = vunpack.c.l.b16 %v4509
      %v4643 = vunpack.c.l.b16 %v4510
      %v4644 = vunpack.c.l.b16 %v4511
      %v4645 = vunpack.c.l.b16 %v4512
      %v4646 = vunpack.c.l.b16 %v4513
      %v4647 = vunpack.c.l.b16 %v4514
      %v4648 = vunpack.c.l.b16 %v4515
      %v4649 = vunpack.c.l.b16 %v4516
      %v4650 = vunpack.c.l.b16 %v4517
      %v4651 = vunpack.c.l.b16 %v4518
      %v4652 = vunpack.c.l.b16 %v4519
      %v4653 = vunpack.c.l.b16 %v4520
      %v4654 = vunpack.c.l.b16 %v4521
      %v4655 = vunpack.c.l.b16 %v4522
      %v4656 = vunpack.c.l.b16 %v4523
      %v4657 = vunpack.c.l.b16 %v4524
      %v4658 = vunpack.c.l.b16 %v4525
      %v4659 = vunpack.c.l.b16 %v4526
      %v4660 = vunpack.c.l.b16 %v4527
      %v4661 = vunpack.c.l.b16 %v4528
      %v4662 = vunpack.c.l.b16 %v4529
      %v4663 = vunpack.c.l.b16 %v4530
      %v4664 = vunpack.c.l.b16 %v4531
      %v4665 = vunpack.c.l.b16 %v4532
      %v4666 = vunpack.c.l.b16 %v4533
      %v4667 = vunpack.c.l.b16 %v4534
      %v4668 = vunpack.c.l.b16 %v4535
      %v4669 = vunpack.c.l.b16 %v4536
      %v4670 = vunpack.c.l.b16 %v4537
      %v4671 = vunpack.c.l.b16 %v4538
      %v4672 = vpack.c.b16 %v4609, %v4608
      %v4673 = vpack.c.b16 %v4611, %v4610
      %v4674 = vpack.c.b16 %v4613, %v4612
      %v4675 = vpack.c.b16 %v4615, %v4614
      %v4676 = vpack.c.b16 %v4617, %v4616
      %v4677 = vpack.c.b16 %v4619, %v4618
      %v4678 = vpack.c.b16 %v4621, %v4620
      %v4679 = vpack.c.b16 %v4623, %v4622
      %v4680 = vpack.c.b16 %v4625, %v4624
      %v4681 = vpack.c.b16 %v4627, %v4626
      %v4682 = vpack.c.b16 %v4629, %v4628
      %v4683 = vpack.c.b16 %v4631, %v4630
      %v4684 = vpack.c.b16 %v4633, %v4632
      %v4685 = vpack.c.b16 %v4635, %v4634
      %v4686 = vpack.c.b16 %v4637, %v4636
      %v4687 = vpack.c.b16 %v4639, %v4638
      %v4688 = vpack.c.b16 %v4641, %v4640
      %v4689 = vpack.c.b16 %v4643, %v4642
      %v4690 = vpack.c.b16 %v4645, %v4644
      %v4691 = vpack.c.b16 %v4647, %v4646
      %v4692 = vpack.c.b16 %v4649, %v4648
      %v4693 = vpack.c.b16 %v4651, %v4650
      %v4694 = vpack.c.b16 %v4653, %v4652
      %v4695 = vpack.c.b16 %v4655, %v4654
      %v4696 = vpack.c.b16 %v4657, %v4656
      %v4697 = vpack.c.b16 %v4659, %v4658
      %v4698 = vpack.c.b16 %v4661, %v4660
      %v4699 = vpack.c.b16 %v4663, %v4662
      %v4700 = vpack.c.b16 %v4665, %v4664
      %v4701 = vpack.c.b16 %v4667, %v4666
      %v4702 = vpack.c.b16 %v4669, %v4668
      %v4703 = vpack.c.b16 %v4671, %v4670
      %4736 = vmatpush.bf16.msra.mxu0 %v4679
      %4737 = vmatpush.bf16.msra.mxu0 %v4678
      %4738 = vmatpush.bf16.msra.mxu0 %v4677
      %4739 = vmatpush.bf16.msra.mxu0 %v4676
      %4740 = vmatpush.bf16.msra.mxu0 %v4675
      %4741 = vmatpush.bf16.msra.mxu0 %v4674
      %4742 = vmatpush.bf16.msra.mxu0 %v4673
      %4743 = vmatpush.bf16.msra.mxu0 %v4672
      %4744 = vmatmul.bf16.gmra.mxu0 %v4470
      %v4745 = vpop.f32.mrf.mxu0
      %v4746 = vadd.f32 %v4542, %v4745
      %v4747 = vpop.f32.mrf.mxu0
      %4748 = vdwg.mxu0
      %4749 = vmatpush.bf16.msra.mxu0 %v4687
      %4750 = vmatpush.bf16.msra.mxu0 %v4686
      %4751 = vmatpush.bf16.msra.mxu0 %v4685
      %4752 = vmatpush.bf16.msra.mxu0 %v4684
      %4753 = vmatpush.bf16.msra.mxu0 %v4683
      %4754 = vmatpush.bf16.msra.mxu0 %v4682
      %4755 = vmatpush.bf16.msra.mxu0 %v4681
      %4756 = vmatpush.bf16.msra.mxu0 %v4680
      %4757 = vmatmul.bf16.gmra.mxu0 %v4471
      %v4758 = vpop.f32.mrf.mxu0
      %v4759 = vadd.f32 %v4746, %v4758
      %v4760 = vpop.f32.mrf.mxu0
      %4761 = vdwg.mxu0
      %4762 = vmatpush.bf16.msra.mxu0 %v4695
      %4763 = vmatpush.bf16.msra.mxu0 %v4694
      %4764 = vmatpush.bf16.msra.mxu0 %v4693
      %4765 = vmatpush.bf16.msra.mxu0 %v4692
      %4766 = vmatpush.bf16.msra.mxu0 %v4691
      %4767 = vmatpush.bf16.msra.mxu0 %v4690
      %4768 = vmatpush.bf16.msra.mxu0 %v4689
      %4769 = vmatpush.bf16.msra.mxu0 %v4688
      %4770 = vmatmul.bf16.gmra.mxu0 %v4472
      %v4771 = vpop.f32.mrf.mxu0
      %v4772 = vadd.f32 %v4759, %v4771
      %v4773 = vpop.f32.mrf.mxu0
      %4774 = vdwg.mxu0
      %4775 = vmatpush.bf16.msra.mxu0 %v4703
      %4776 = vmatpush.bf16.msra.mxu0 %v4702
      %4777 = vmatpush.bf16.msra.mxu0 %v4701
      %4778 = vmatpush.bf16.msra.mxu0 %v4700
      %4779 = vmatpush.bf16.msra.mxu0 %v4699
      %4780 = vmatpush.bf16.msra.mxu0 %v4698
      %4781 = vmatpush.bf16.msra.mxu0 %v4697
      %4782 = vmatpush.bf16.msra.mxu0 %v4696
      %4783 = vmatmul.bf16.gmra.mxu0 %v4473
      %v4784 = vpop.f32.mrf.mxu0
      %v4785 = vadd.f32 %v4772, %v4784
      %v4786 = vpop.f32.mrf.mxu0
      %4787 = vdwg.mxu0
      %v4788 = vadd.f32 %v4208, %v4785
      %v4789 = vld [vmem:[%s4182 + $0x2] sm:$0x1]
      %v4790 = vld [vmem:[%s4182 + $0x3] sm:$0x1]
      %4791 = vadd.xlane.f32.xlu0 %v4788
      %v4792 = vpop.xlane.xlu0 %4791
      %v4793 = vmul.f32 %v4792, %v2737
      %v4794 = vsub.f32 %v4788, %v4793
      %v4795 = vmul.f32 %v4794, %v4794
      %4796 = vadd.xlane.f32.xlu0 %v4795
      %v4797 = vpop.xlane.xlu0 %4796
      %v4798 = vmul.f32 %v4797, %v2737
      %v4799 = vadd.f32 %v4798, 1e-05
      %v4800 = vrsqrt.pop %v4799
      %v4801 = vmul.f32 %v4800, %v4799
      %v4802 = vmul.f32 %v4801, %v4800
      %v4803 = vmul.f32 0.5, %v4802
      %v4804 = vsub.f32 1.5, %v4803
      %v4805 = vmul.f32 %v4800, %v4804
      %vm4806 = vweird.f32 %v4799
      %vm4807 = vweird.f32 %v4800
      %vm4808 = vmor %vm4806, %vm4807
      %v4809 = vsel %vm4808, %v4800, %v4805
      %v4810 = vmul.f32 %v4794, %v4809
      %v4811 = vperm.slane %v4789, 0
      %v4812 = vmul.f32 %v4810, %v4811
      %v4813 = vperm.slane %v4790, 0
      %v4814 = vadd.f32 %v4812, %v4813
      %v4815 = vpack.c.bf16 %v4814, %v4814
      %v4816 = vld [vmem:[%s15] sm:$0xf]
      %v4817 = vld [vmem:[%s15 + $0x4] sm:$0xf]
      %v4818 = vld [vmem:[%s15 + $0x8] sm:$0xf]
      %v4819 = vld [vmem:[%s15 + $0xc] sm:$0xf]
      %v4820 = vld [vmem:[%s15 + $0x10] sm:$0xf]
      %v4821 = vld [vmem:[%s15 + $0x14] sm:$0xf]
      %v4822 = vld [vmem:[%s15 + $0x18] sm:$0xf]
      %v4823 = vld [vmem:[%s15 + $0x1c] sm:$0xf]
      %v4824 = vld [vmem:[%s15 + $0x20] sm:$0xf]
      %v4825 = vld [vmem:[%s15 + $0x24] sm:$0xf]
      %v4826 = vld [vmem:[%s15 + $0x28] sm:$0xf]
      %v4827 = vld [vmem:[%s15 + $0x2c] sm:$0xf]
      %v4828 = vld [vmem:[%s15 + $0x30] sm:$0xf]
      %v4829 = vld [vmem:[%s15 + $0x34] sm:$0xf]
      %v4830 = vld [vmem:[%s15 + $0x38] sm:$0xf]
      %v4831 = vld [vmem:[%s15 + $0x3c] sm:$0xf]
      %v4832 = vld [vmem:[%s16] sm:$0x1]
      %v4834 = vperm.slane %v4832, 0
      %v4852 = vunpack.c.l.b16 %v4816
      %v4853 = vunpack.c.l.b16 %v4817
      %v4854 = vunpack.c.l.b16 %v4818
      %v4855 = vunpack.c.l.b16 %v4819
      %v4856 = vunpack.c.l.b16 %v4820
      %v4857 = vunpack.c.l.b16 %v4821
      %v4858 = vunpack.c.l.b16 %v4822
      %v4859 = vunpack.c.l.b16 %v4823
      %v4860 = vunpack.c.l.b16 %v4824
      %v4861 = vunpack.c.l.b16 %v4825
      %v4862 = vunpack.c.l.b16 %v4826
      %v4863 = vunpack.c.l.b16 %v4827
      %v4864 = vunpack.c.l.b16 %v4828
      %v4865 = vunpack.c.l.b16 %v4829
      %v4866 = vunpack.c.l.b16 %v4830
      %v4867 = vunpack.c.l.b16 %v4831
      %v4868 = vpack.c.b16 %v4853, %v4852
      %v4869 = vpack.c.b16 %v4855, %v4854
      %v4870 = vpack.c.b16 %v4857, %v4856
      %v4871 = vpack.c.b16 %v4859, %v4858
      %v4872 = vpack.c.b16 %v4861, %v4860
      %v4873 = vpack.c.b16 %v4863, %v4862
      %v4874 = vpack.c.b16 %v4865, %v4864
      %v4875 = vpack.c.b16 %v4867, %v4866
      %4884 = vmatpush.bf16.msra.mxu0 %v4875
      %4885 = vmatpush.bf16.msra.mxu0 %v4874
      %4886 = vmatpush.bf16.msra.mxu0 %v4873
      %4887 = vmatpush.bf16.msra.mxu0 %v4872
      %4888 = vmatpush.bf16.msra.mxu0 %v4871
      %4889 = vmatpush.bf16.msra.mxu0 %v4870
      %4890 = vmatpush.bf16.msra.mxu0 %v4869
      %4891 = vmatpush.bf16.msra.mxu0 %v4868
      %4892 = vmatmul.bf16.gmra.mxu0 %v4815
      %v4893 = vpop.f32.mrf.mxu0
      %v4894 = vadd.f32 %v4834, %v4893
      %v4895 = vpop.f32.mrf.mxu0
      %4896 = vdwg.mxu0
      %4897 = vst [vmem:[%s546] sm:$0xff] %v4894
      %p4898 = scmp.lt.s32.totalorder %s28, 1
      %s4899 = scalar_select %p4898, %s28, 1
      %s4900 = smul.addr %s4899, 8
      %s4901 = scalar_lea.vmem %s17, %s4900
      // Predicated region
      $region89: #{forward.1} parent=87 // pred_check
        %p4902 = pneg %p408
      $region90: #{forward.1} parent=87 // pred_check_branch
        %4904 = sbr.rel (%p4902) target = $region92
      $region91: #{forward.1} parent=87 // pred_region
        _
      $region92: #{forward.1} parent=87 // pred_fallthru
        _
    $region88: #{forward.1} parent=5 // pred_fallthru
      _
    %p4905 = scmp.le.s32.totalorder 2, %s23
    // Predicated region
    $region93: #{forward.1} parent=5 // pred_check
      %p4906 = pneg %p4905
    $region94: #{forward.1} parent=5 // pred_check_branch
      %4908 = sbr.rel (%p4906) target = $region96
    $region95: #{forward.1} parent=5 // pred_region
      %s4909 = ssub.s32 %s23, 2
      // Predicated region
      $region97: #{forward.1} parent=95 // pred_check
        %p4910 = pneg %p414
      $region98: #{forward.1} parent=95 // pred_check_branch
        %4912 = sbr.rel (%p4910) target = $region100
      $region99: #{forward.1} parent=95 // pred_region
        %p4913 = scmp.lt.s32.totalorder %s29, 1
        %s4914 = scalar_select %p4913, %s29, 1
        %s4915 = smul.addr %s4914, 8
        %s4916 = scalar_lea.vmem %s17, %s4915
      $region100: #{forward.1} parent=95 // pred_fallthru
        _
    $region96: #{forward.1} parent=5 // pred_fallthru
      _
  $region6: #{forward.1} parent=0 // loop_footer
    %s27 = sadd.s32 1, %s23
  $region7: #{forward.1} parent=0 // loop_footer_branch
    %22 = sbr.rel target = $region3
  $region8: #{forward.1} parent=0 // loop_exit
    _

</llo_original>
